<compile_context>
chip_gen: v7x
topology: tpu7x:2x2x1
jax: 0.10.0
libtpu: 0.0.40
codegen_flags: <defaults>
</compile_context>

<pallas_src>
import functools

import numpy as np

import jax
import jax.numpy as jnp
from jax.experimental import pallas as pl


_K = 5  # all three convs are 5x5, stride 1, valid padding


# ---------------------------------------------------------------------------
# Host-side parameter preparation (runs once, OUTSIDE jit)
# ---------------------------------------------------------------------------
def _row_toeplitz(w_oihw, w_in, pad_rows_to=None):
    """(OC, IC, 5, 5) conv weight -> 5 banded matrices, one per kernel row kh.

    mats[kh] maps a flattened input image row (index w*IC + c, length W_in*IC)
    to its contribution to a flattened conv-output row (index ow*OC + oc):
        out_row(oh) = sum_kh  in_row(oh + kh) @ mats[kh]     (+ bias)
    """
    w = np.asarray(w_oihw, np.float32)
    oc, ic, k, _ = w.shape
    ow_n = w_in - k + 1
    n_rows = w_in * ic if pad_rows_to is None else pad_rows_to
    mats = np.zeros((k, n_rows, ow_n * oc), np.float32)
    for kh in range(k):
        for ow in range(ow_n):
            for kw in range(k):
                r0, c0 = (ow + kw) * ic, ow * oc
                mats[kh, r0:r0 + ic, c0:c0 + oc] = w[:, :, kh, kw].T
    return mats


def _pool_row_select(batch, rows_per_img, pooled_rows):
    """One-hot matrix: picks row b*rows_per_img + 2*ph of the vertically
    pair-maxed conv output for every pooled row (b, ph).  It also drops the
    junk rows produced where the batch-stacked conv straddles two images."""
    n_in = batch * rows_per_img - _K
    s = np.zeros((batch * pooled_rows, n_in), np.float32)
    for b in range(batch):
        for p in range(pooled_rows):
            s[b * pooled_rows + p, b * rows_per_img + 2 * p] = 1.0
    return s


def _pool_col_select(out_w, oc, pooled_w, pad_cols_to=None):
    """One-hot matrix: picks column 2*pw*oc + c of the horizontally pair-maxed
    conv output for every pooled column (pw, c).  Optional zero-column padding
    so the next conv's contraction dim is sublane(8)-aligned."""
    n_in = (out_w - 1) * oc
    n_out = pooled_w * oc if pad_cols_to is None else pad_cols_to
    r = np.zeros((n_in, n_out), np.float32)
    for p in range(pooled_w):
        for c in range(oc):
            r[2 * p * oc + c, p * oc + c] = 1.0
    return r


def prepare_params(params, batch):
    """Pre-transform PyTorch-layout weights into the MXU-friendly operands the
    fused kernel consumes (review: hoist every reshape/transpose/pad/tile out
    of the jitted forward)."""
    p = {k: np.asarray(v, np.float32) for k, v in params.items()}
    prep = {
        # conv1: 32x32x1 -> 28x28x6 (contraction dim 32, already 8-aligned)
        "a1": _row_toeplitz(p["conv1_w"], w_in=32),                  # (5, 32, 168)
        "b1": np.tile(p["conv1_b"], 28)[None, :],                    # (1, 168)
        "s1": _pool_row_select(batch, 32, 14),                       # (B*14, B*32-5)
        "r1": _pool_col_select(28, 6, 14, pad_cols_to=88),           # (162, 88)
        # conv2: 14x14x6 -> 10x10x16 (contraction dim zero-padded 84 -> 88)
        "a2": _row_toeplitz(p["conv2_w"], w_in=14, pad_rows_to=88),  # (5, 88, 160)
        "b2": np.tile(p["conv2_b"], 10)[None, :],                    # (1, 160)
        "s2": _pool_row_select(batch, 14, 5),                        # (B*5, B*14-5)
        "r2": _pool_col_select(10, 16, 5),                           # (144, 80)
        # conv3: 5x5x16 -> 1x1x120 (contraction dim 80, 8-aligned)
        "a3": _row_toeplitz(p["conv3_w"], w_in=5),                   # (5, 80, 120)
        "b3": p["conv3_b"][None, :],                                 # (1, 120)
        # fc layers, pre-transposed so the kernel does plain x @ W
        "fc1_w_t": p["fc1_w"].T,                                     # (120, 84)
        "fc1_b": p["fc1_b"][None, :],                                # (1, 84)
        "fc2_w_t": p["fc2_w"].T,                                     # (84, 10)
        "fc2_b": p["fc2_b"][None, :],                                # (1, 10)
    }
    # conv3 row selector: each image contributes exactly one valid conv3 row.
    s3 = np.zeros((batch, batch * 5 - (_K - 1)), np.float32)
    for b in range(batch):
        s3[b, b * 5] = 1.0
    prep["s3"] = s3
    return {k: jnp.asarray(v) for k, v in prep.items()}


# ---------------------------------------------------------------------------
# The fused kernel: the whole LeNet5 forward in one pallas_call invocation.
# Every operand is a full-array VMEM block (default BlockSpec, no grid): the
# total working set is ~1 MB, far below VMEM on v5e/v6e/v7x, and at batch=2 a
# grid would only add per-step overhead (per review).
# ---------------------------------------------------------------------------
def _lenet5_kernel(x_ref, a1_ref, b1_ref, s1_ref, r1_ref,
                   a2_ref, b2_ref, s2_ref, r2_ref,
                   a3_ref, b3_ref, s3_ref,
                   fc1w_ref, fc1b_ref, fc2w_ref, fc2b_ref,
                   out_ref):
    dot = functools.partial(jnp.dot, preferred_element_type=jnp.float32)

    def conv_rows(x, a_ref, b_ref):
        # 5x5 'valid' conv on the batch-stacked row layout (B*H, W*C_in):
        # five row-shifted GEMMs against the precomputed Toeplitz matrices.
        # Rows that straddle two images are junk and dropped by the selectors.
        n = x.shape[0] - (_K - 1)
        acc = dot(x[0:n, :], a_ref[0])
        for kh in range(1, _K):
            acc = acc + dot(x[kh:kh + n, :], a_ref[kh])
        return acc + b_ref[...]

    def pool2x2(y, s_ref, r_ref, oc):
        # Fused 2x2/stride-2 max pool: elementwise max of shifted views (VPU)
        # + exact one-hot selection GEMMs (MXU) picking rows 2*ph / cols 2*pw.
        mv = jnp.maximum(y[:-1, :], y[1:, :])
        mh = jnp.maximum(mv[:, :-oc], mv[:, oc:])
        return dot(dot(s_ref[...], mh), r_ref[...])

    x = x_ref[...]                                            # (B*32, 32)
    y1 = jnp.maximum(conv_rows(x, a1_ref, b1_ref), 0.0)       # (B*32-4, 168)
    p1 = pool2x2(y1, s1_ref, r1_ref, oc=6)                    # (B*14, 88)
    y2 = jnp.maximum(conv_rows(p1, a2_ref, b2_ref), 0.0)      # (B*14-4, 160)
    p2 = pool2x2(y2, s2_ref, r2_ref, oc=16)                   # (B*5, 80)
    y3 = conv_rows(p2, a3_ref, b3_ref)                        # (B*5-4, 120), no ReLU
    feats = dot(s3_ref[...], y3)                              # (B, 120)
    h = jnp.maximum(dot(feats, fc1w_ref[...]) + fc1b_ref[...], 0.0)   # fc1+ReLU
    logits = dot(h, fc2w_ref[...]) + fc2b_ref[...]                    # fc2
    out_ref[...] = logits.astype(out_ref.dtype)


def lenet5_forward(x_nchw, prep):
    """LeNet5 forward. x_nchw: (B, 1, 32, 32) f32 (PyTorch layout) -> (B, 10)."""
    batch, _, h, w = x_nchw.shape
    # C=1: the row-major NCHW buffer already *is* the batch-stacked (B*32, 32)
    # row layout the kernel wants -- a free reshape, no transpose.
    x_rows = x_nchw.reshape(batch * h, w).astype(jnp.float32)
    return pl.pallas_call(
        _lenet5_kernel,
        out_shape=jax.ShapeDtypeStruct((batch, 10), jnp.float32),
    )(x_rows,
      prep["a1"], prep["b1"], prep["s1"], prep["r1"],
      prep["a2"], prep["b2"], prep["s2"], prep["r2"],
      prep["a3"], prep["b3"], prep["s3"],
      prep["fc1_w_t"], prep["fc1_b"], prep["fc2_w_t"], prep["fc2_b"])


# ---------------------------------------------------------------------------
# Pure-JAX/XLA reference (mirrors the PyTorch module), for verification only.
# ---------------------------------------------------------------------------
def _reference_forward(x, params):
    conv = functools.partial(
        jax.lax.conv_general_dilated,
        window_strides=(1, 1), padding="VALID",
        dimension_numbers=("NCHW", "OIHW", "NCHW"),
        precision=jax.lax.Precision.HIGHEST)
    pool = lambda t: jax.lax.reduce_window(
        t, -np.inf, jax.lax.max, (1, 1, 2, 2), (1, 1, 2, 2), "VALID")
    b = lambda v: v[None, :, None, None]
    y = pool(jax.nn.relu(conv(x, params["conv1_w"]) + b(params["conv1_b"])))
    y = pool(jax.nn.relu(conv(y, params["conv2_w"]) + b(params["conv2_b"])))
    y = conv(y, params["conv3_w"]) + b(params["conv3_b"])
    y = y.reshape(y.shape[0], -1)
    y = jax.nn.relu(y @ params["fc1_w"].T + params["fc1_b"])
    return y @ params["fc2_w"].T + params["fc2_b"]


# ---------------------------------------------------------------------------
# Deterministic parameter init + run
# ---------------------------------------------------------------------------
def _make_params(key):
    keys = jax.random.split(key, 10)

    def u(k, shape, fan_in):
        bound = 1.0 / float(fan_in) ** 0.5  # PyTorch default-style uniform
        return jax.random.uniform(k, shape, jnp.float32, -bound, bound)

    return {
        "conv1_w": u(keys[0], (6, 1, 5, 5), 1 * 25),
        "conv1_b": u(keys[1], (6,), 1 * 25),
        "conv2_w": u(keys[2], (16, 6, 5, 5), 6 * 25),
        "conv2_b": u(keys[3], (16,), 6 * 25),
        "conv3_w": u(keys[4], (120, 16, 5, 5), 16 * 25),
        "conv3_b": u(keys[5], (120,), 16 * 25),
        "fc1_w": u(keys[6], (84, 120), 120),
        "fc1_b": u(keys[7], (84,), 120),
        "fc2_w": u(keys[8], (10, 84), 84),
        "fc2_b": u(keys[9], (10,), 84),
    }


if __name__ == "__main__":
    root = jax.random.PRNGKey(0)
    pkey, xkey = jax.random.split(root)
    params = _make_params(pkey)
    prep = prepare_params(params, batch=2)   # one-time pre-transform, outside jit

    # LeNet5 requires 32x32 single-channel input (two pools + three 5x5 convs).
    x = jax.random.normal(xkey, (2, 1, 32, 32), jnp.float32)

    out = jax.jit(lenet5_forward)(x, prep)
    jax.block_until_ready(out)
    assert out.shape == (2, 10), out.shape

    # Structural correctness check vs. a pure-XLA reference (loose tolerance:
    # only MXU f32-pass rounding may differ; any layout/selection bug would be
    # O(1) wrong).
    ref = _reference_forward(x, params)
    np.testing.assert_allclose(np.asarray(out), np.asarray(ref),
                               rtol=2e-2, atol=2e-2)
    print("KERNEL_OK")
</pallas_src>

<mosaic_0001>
module attributes {stable_mosaic.version = 11 : i64} {
  func.func @_lenet5_kernel(%arg0: memref<64x32xf32, #tpu.memory_space<vmem>>, %arg1: memref<5x32x168xf32, #tpu.memory_space<vmem>>, %arg2: memref<1x168xf32, #tpu.memory_space<vmem>>, %arg3: memref<28x59xf32, #tpu.memory_space<vmem>>, %arg4: memref<162x88xf32, #tpu.memory_space<vmem>>, %arg5: memref<5x88x160xf32, #tpu.memory_space<vmem>>, %arg6: memref<1x160xf32, #tpu.memory_space<vmem>>, %arg7: memref<10x23xf32, #tpu.memory_space<vmem>>, %arg8: memref<144x80xf32, #tpu.memory_space<vmem>>, %arg9: memref<5x80x120xf32, #tpu.memory_space<vmem>>, %arg10: memref<1x120xf32, #tpu.memory_space<vmem>>, %arg11: memref<2x6xf32, #tpu.memory_space<vmem>>, %arg12: memref<120x84xf32, #tpu.memory_space<vmem>>, %arg13: memref<1x84xf32, #tpu.memory_space<vmem>>, %arg14: memref<84x10xf32, #tpu.memory_space<vmem>>, %arg15: memref<1x10xf32, #tpu.memory_space<vmem>>, %arg16: memref<2x10xf32, #tpu.memory_space<vmem>>) attributes {dimension_semantics = [], scalar_prefetch = 0 : i64, scratch_operands = 0 : i64, tpu.core_type = #tpu.core_type<tc>} {
    %c0 = arith.constant 0 : index
    %c0_0 = arith.constant 0 : index
    %0 = vector.load %arg0[%c0, %c0_0] : memref<64x32xf32, #tpu.memory_space<vmem>>, vector<64x32xf32>
    %1 = vector.extract_strided_slice %0 {offsets = [0, 0], sizes = [60, 32], strides = [1, 1]} : vector<64x32xf32> to vector<60x32xf32>
    %c0_1 = arith.constant 0 : index
    %c0_2 = arith.constant 0 : index
    %c0_3 = arith.constant 0 : index
    %2 = vector.load %arg1[%c0_1, %c0_2, %c0_3] : memref<5x32x168xf32, #tpu.memory_space<vmem>>, vector<1x32x168xf32>
    %3 = vector.shape_cast %2 : vector<1x32x168xf32> to vector<32x168xf32>
    %cst = arith.constant dense<0.000000e+00> : vector<60x168xf32>
    %4 = tpu.matmul %1, %3, %cst {dimension_numbers = #tpu.dot_dimension_numbers<[1], [0], [0], [1], [0, 0, 1, 1], [], []>} : vector<60x32xf32>, vector<32x168xf32>, vector<60x168xf32> -> vector<60x168xf32>
    %5 = vector.extract_strided_slice %0 {offsets = [1, 0], sizes = [60, 32], strides = [1, 1]} : vector<64x32xf32> to vector<60x32xf32>
    %c1 = arith.constant 1 : index
    %c0_4 = arith.constant 0 : index
    %c0_5 = arith.constant 0 : index
    %6 = vector.load %arg1[%c1, %c0_4, %c0_5] : memref<5x32x168xf32, #tpu.memory_space<vmem>>, vector<1x32x168xf32>
    %7 = vector.shape_cast %6 : vector<1x32x168xf32> to vector<32x168xf32>
    %cst_6 = arith.constant dense<0.000000e+00> : vector<60x168xf32>
    %8 = tpu.matmul %5, %7, %cst_6 {dimension_numbers = #tpu.dot_dimension_numbers<[1], [0], [0], [1], [0, 0, 1, 1], [], []>} : vector<60x32xf32>, vector<32x168xf32>, vector<60x168xf32> -> vector<60x168xf32>
    %9 = arith.addf %4, %8 : vector<60x168xf32>
    %10 = vector.extract_strided_slice %0 {offsets = [2, 0], sizes = [60, 32], strides = [1, 1]} : vector<64x32xf32> to vector<60x32xf32>
    %c2 = arith.constant 2 : index
    %c0_7 = arith.constant 0 : index
    %c0_8 = arith.constant 0 : index
    %11 = vector.load %arg1[%c2, %c0_7, %c0_8] : memref<5x32x168xf32, #tpu.memory_space<vmem>>, vector<1x32x168xf32>
    %12 = vector.shape_cast %11 : vector<1x32x168xf32> to vector<32x168xf32>
    %cst_9 = arith.constant dense<0.000000e+00> : vector<60x168xf32>
    %13 = tpu.matmul %10, %12, %cst_9 {dimension_numbers = #tpu.dot_dimension_numbers<[1], [0], [0], [1], [0, 0, 1, 1], [], []>} : vector<60x32xf32>, vector<32x168xf32>, vector<60x168xf32> -> vector<60x168xf32>
    %14 = arith.addf %9, %13 : vector<60x168xf32>
    %15 = vector.extract_strided_slice %0 {offsets = [3, 0], sizes = [60, 32], strides = [1, 1]} : vector<64x32xf32> to vector<60x32xf32>
    %c3 = arith.constant 3 : index
    %c0_10 = arith.constant 0 : index
    %c0_11 = arith.constant 0 : index
    %16 = vector.load %arg1[%c3, %c0_10, %c0_11] : memref<5x32x168xf32, #tpu.memory_space<vmem>>, vector<1x32x168xf32>
    %17 = vector.shape_cast %16 : vector<1x32x168xf32> to vector<32x168xf32>
    %cst_12 = arith.constant dense<0.000000e+00> : vector<60x168xf32>
    %18 = tpu.matmul %15, %17, %cst_12 {dimension_numbers = #tpu.dot_dimension_numbers<[1], [0], [0], [1], [0, 0, 1, 1], [], []>} : vector<60x32xf32>, vector<32x168xf32>, vector<60x168xf32> -> vector<60x168xf32>
    %19 = arith.addf %14, %18 : vector<60x168xf32>
    %20 = vector.extract_strided_slice %0 {offsets = [4, 0], sizes = [60, 32], strides = [1, 1]} : vector<64x32xf32> to vector<60x32xf32>
    %c4 = arith.constant 4 : index
    %c0_13 = arith.constant 0 : index
    %c0_14 = arith.constant 0 : index
    %21 = vector.load %arg1[%c4, %c0_13, %c0_14] : memref<5x32x168xf32, #tpu.memory_space<vmem>>, vector<1x32x168xf32>
    %22 = vector.shape_cast %21 : vector<1x32x168xf32> to vector<32x168xf32>
    %cst_15 = arith.constant dense<0.000000e+00> : vector<60x168xf32>
    %23 = tpu.matmul %20, %22, %cst_15 {dimension_numbers = #tpu.dot_dimension_numbers<[1], [0], [0], [1], [0, 0, 1, 1], [], []>} : vector<60x32xf32>, vector<32x168xf32>, vector<60x168xf32> -> vector<60x168xf32>
    %24 = arith.addf %19, %23 : vector<60x168xf32>
    %c0_16 = arith.constant 0 : index
    %c0_17 = arith.constant 0 : index
    %25 = vector.load %arg2[%c0_16, %c0_17] : memref<1x168xf32, #tpu.memory_space<vmem>>, vector<1x168xf32>
    %26 = vector.broadcast %25 : vector<1x168xf32> to vector<60x168xf32>
    %27 = arith.addf %24, %26 : vector<60x168xf32>
    %cst_18 = arith.constant 0.000000e+00 : f32
    %28 = vector.broadcast %cst_18 : f32 to vector<60x168xf32>
    %29 = arith.maximumf %27, %28 : vector<60x168xf32>
    %30 = vector.extract_strided_slice %29 {offsets = [0, 0], sizes = [59, 168], strides = [1, 1]} : vector<60x168xf32> to vector<59x168xf32>
    %31 = vector.extract_strided_slice %29 {offsets = [1, 0], sizes = [59, 168], strides = [1, 1]} : vector<60x168xf32> to vector<59x168xf32>
    %32 = arith.maximumf %30, %31 : vector<59x168xf32>
    %33 = vector.extract_strided_slice %32 {offsets = [0, 0], sizes = [59, 162], strides = [1, 1]} : vector<59x168xf32> to vector<59x162xf32>
    %34 = vector.extract_strided_slice %32 {offsets = [0, 6], sizes = [59, 162], strides = [1, 1]} : vector<59x168xf32> to vector<59x162xf32>
    %35 = arith.maximumf %33, %34 : vector<59x162xf32>
    %c0_19 = arith.constant 0 : index
    %c0_20 = arith.constant 0 : index
    %36 = vector.load %arg3[%c0_19, %c0_20] : memref<28x59xf32, #tpu.memory_space<vmem>>, vector<28x59xf32>
    %cst_21 = arith.constant dense<0.000000e+00> : vector<28x162xf32>
    %37 = tpu.matmul %36, %35, %cst_21 {dimension_numbers = #tpu.dot_dimension_numbers<[1], [0], [0], [1], [0, 0, 1, 1], [], []>} : vector<28x59xf32>, vector<59x162xf32>, vector<28x162xf32> -> vector<28x162xf32>
    %c0_22 = arith.constant 0 : index
    %c0_23 = arith.constant 0 : index
    %38 = vector.load %arg4[%c0_22, %c0_23] : memref<162x88xf32, #tpu.memory_space<vmem>>, vector<162x88xf32>
    %cst_24 = arith.constant dense<0.000000e+00> : vector<28x88xf32>
    %39 = tpu.matmul %37, %38, %cst_24 {dimension_numbers = #tpu.dot_dimension_numbers<[1], [0], [0], [1], [0, 0, 1, 1], [], []>} : vector<28x162xf32>, vector<162x88xf32>, vector<28x88xf32> -> vector<28x88xf32>
    %40 = vector.extract_strided_slice %39 {offsets = [0, 0], sizes = [24, 88], strides = [1, 1]} : vector<28x88xf32> to vector<24x88xf32>
    %c0_25 = arith.constant 0 : index
    %c0_26 = arith.constant 0 : index
    %c0_27 = arith.constant 0 : index
    %41 = vector.load %arg5[%c0_25, %c0_26, %c0_27] : memref<5x88x160xf32, #tpu.memory_space<vmem>>, vector<1x88x160xf32>
    %42 = vector.shape_cast %41 : vector<1x88x160xf32> to vector<88x160xf32>
    %cst_28 = arith.constant dense<0.000000e+00> : vector<24x160xf32>
    %43 = tpu.matmul %40, %42, %cst_28 {dimension_numbers = #tpu.dot_dimension_numbers<[1], [0], [0], [1], [0, 0, 1, 1], [], []>} : vector<24x88xf32>, vector<88x160xf32>, vector<24x160xf32> -> vector<24x160xf32>
    %44 = vector.extract_strided_slice %39 {offsets = [1, 0], sizes = [24, 88], strides = [1, 1]} : vector<28x88xf32> to vector<24x88xf32>
    %c1_29 = arith.constant 1 : index
    %c0_30 = arith.constant 0 : index
    %c0_31 = arith.constant 0 : index
    %45 = vector.load %arg5[%c1_29, %c0_30, %c0_31] : memref<5x88x160xf32, #tpu.memory_space<vmem>>, vector<1x88x160xf32>
    %46 = vector.shape_cast %45 : vector<1x88x160xf32> to vector<88x160xf32>
    %cst_32 = arith.constant dense<0.000000e+00> : vector<24x160xf32>
    %47 = tpu.matmul %44, %46, %cst_32 {dimension_numbers = #tpu.dot_dimension_numbers<[1], [0], [0], [1], [0, 0, 1, 1], [], []>} : vector<24x88xf32>, vector<88x160xf32>, vector<24x160xf32> -> vector<24x160xf32>
    %48 = arith.addf %43, %47 : vector<24x160xf32>
    %49 = vector.extract_strided_slice %39 {offsets = [2, 0], sizes = [24, 88], strides = [1, 1]} : vector<28x88xf32> to vector<24x88xf32>
    %c2_33 = arith.constant 2 : index
    %c0_34 = arith.constant 0 : index
    %c0_35 = arith.constant 0 : index
    %50 = vector.load %arg5[%c2_33, %c0_34, %c0_35] : memref<5x88x160xf32, #tpu.memory_space<vmem>>, vector<1x88x160xf32>
    %51 = vector.shape_cast %50 : vector<1x88x160xf32> to vector<88x160xf32>
    %cst_36 = arith.constant dense<0.000000e+00> : vector<24x160xf32>
    %52 = tpu.matmul %49, %51, %cst_36 {dimension_numbers = #tpu.dot_dimension_numbers<[1], [0], [0], [1], [0, 0, 1, 1], [], []>} : vector<24x88xf32>, vector<88x160xf32>, vector<24x160xf32> -> vector<24x160xf32>
    %53 = arith.addf %48, %52 : vector<24x160xf32>
    %54 = vector.extract_strided_slice %39 {offsets = [3, 0], sizes = [24, 88], strides = [1, 1]} : vector<28x88xf32> to vector<24x88xf32>
    %c3_37 = arith.constant 3 : index
    %c0_38 = arith.constant 0 : index
    %c0_39 = arith.constant 0 : index
    %55 = vector.load %arg5[%c3_37, %c0_38, %c0_39] : memref<5x88x160xf32, #tpu.memory_space<vmem>>, vector<1x88x160xf32>
    %56 = vector.shape_cast %55 : vector<1x88x160xf32> to vector<88x160xf32>
    %cst_40 = arith.constant dense<0.000000e+00> : vector<24x160xf32>
    %57 = tpu.matmul %54, %56, %cst_40 {dimension_numbers = #tpu.dot_dimension_numbers<[1], [0], [0], [1], [0, 0, 1, 1], [], []>} : vector<24x88xf32>, vector<88x160xf32>, vector<24x160xf32> -> vector<24x160xf32>
    %58 = arith.addf %53, %57 : vector<24x160xf32>
    %59 = vector.extract_strided_slice %39 {offsets = [4, 0], sizes = [24, 88], strides = [1, 1]} : vector<28x88xf32> to vector<24x88xf32>
    %c4_41 = arith.constant 4 : index
    %c0_42 = arith.constant 0 : index
    %c0_43 = arith.constant 0 : index
    %60 = vector.load %arg5[%c4_41, %c0_42, %c0_43] : memref<5x88x160xf32, #tpu.memory_space<vmem>>, vector<1x88x160xf32>
    %61 = vector.shape_cast %60 : vector<1x88x160xf32> to vector<88x160xf32>
    %cst_44 = arith.constant dense<0.000000e+00> : vector<24x160xf32>
    %62 = tpu.matmul %59, %61, %cst_44 {dimension_numbers = #tpu.dot_dimension_numbers<[1], [0], [0], [1], [0, 0, 1, 1], [], []>} : vector<24x88xf32>, vector<88x160xf32>, vector<24x160xf32> -> vector<24x160xf32>
    %63 = arith.addf %58, %62 : vector<24x160xf32>
    %c0_45 = arith.constant 0 : index
    %c0_46 = arith.constant 0 : index
    %64 = vector.load %arg6[%c0_45, %c0_46] : memref<1x160xf32, #tpu.memory_space<vmem>>, vector<1x160xf32>
    %65 = vector.broadcast %64 : vector<1x160xf32> to vector<24x160xf32>
    %66 = arith.addf %63, %65 : vector<24x160xf32>
    %cst_47 = arith.constant 0.000000e+00 : f32
    %67 = vector.broadcast %cst_47 : f32 to vector<24x160xf32>
    %68 = arith.maximumf %66, %67 : vector<24x160xf32>
    %69 = vector.extract_strided_slice %68 {offsets = [0, 0], sizes = [23, 160], strides = [1, 1]} : vector<24x160xf32> to vector<23x160xf32>
    %70 = vector.extract_strided_slice %68 {offsets = [1, 0], sizes = [23, 160], strides = [1, 1]} : vector<24x160xf32> to vector<23x160xf32>
    %71 = arith.maximumf %69, %70 : vector<23x160xf32>
    %72 = vector.extract_strided_slice %71 {offsets = [0, 0], sizes = [23, 144], strides = [1, 1]} : vector<23x160xf32> to vector<23x144xf32>
    %73 = vector.extract_strided_slice %71 {offsets = [0, 16], sizes = [23, 144], strides = [1, 1]} : vector<23x160xf32> to vector<23x144xf32>
    %74 = arith.maximumf %72, %73 : vector<23x144xf32>
    %c0_48 = arith.constant 0 : index
    %c0_49 = arith.constant 0 : index
    %75 = vector.load %arg7[%c0_48, %c0_49] : memref<10x23xf32, #tpu.memory_space<vmem>>, vector<10x23xf32>
    %cst_50 = arith.constant dense<0.000000e+00> : vector<10x144xf32>
    %76 = tpu.matmul %75, %74, %cst_50 {dimension_numbers = #tpu.dot_dimension_numbers<[1], [0], [0], [1], [0, 0, 1, 1], [], []>} : vector<10x23xf32>, vector<23x144xf32>, vector<10x144xf32> -> vector<10x144xf32>
    %c0_51 = arith.constant 0 : index
    %c0_52 = arith.constant 0 : index
    %77 = vector.load %arg8[%c0_51, %c0_52] : memref<144x80xf32, #tpu.memory_space<vmem>>, vector<144x80xf32>
    %cst_53 = arith.constant dense<0.000000e+00> : vector<10x80xf32>
    %78 = tpu.matmul %76, %77, %cst_53 {dimension_numbers = #tpu.dot_dimension_numbers<[1], [0], [0], [1], [0, 0, 1, 1], [], []>} : vector<10x144xf32>, vector<144x80xf32>, vector<10x80xf32> -> vector<10x80xf32>
    %79 = vector.extract_strided_slice %78 {offsets = [0, 0], sizes = [6, 80], strides = [1, 1]} : vector<10x80xf32> to vector<6x80xf32>
    %c0_54 = arith.constant 0 : index
    %c0_55 = arith.constant 0 : index
    %c0_56 = arith.constant 0 : index
    %80 = vector.load %arg9[%c0_54, %c0_55, %c0_56] : memref<5x80x120xf32, #tpu.memory_space<vmem>>, vector<1x80x120xf32>
    %81 = vector.shape_cast %80 : vector<1x80x120xf32> to vector<80x120xf32>
    %cst_57 = arith.constant dense<0.000000e+00> : vector<6x120xf32>
    %82 = tpu.matmul %79, %81, %cst_57 {dimension_numbers = #tpu.dot_dimension_numbers<[1], [0], [0], [1], [0, 0, 1, 1], [], []>} : vector<6x80xf32>, vector<80x120xf32>, vector<6x120xf32> -> vector<6x120xf32>
    %83 = vector.extract_strided_slice %78 {offsets = [1, 0], sizes = [6, 80], strides = [1, 1]} : vector<10x80xf32> to vector<6x80xf32>
    %c1_58 = arith.constant 1 : index
    %c0_59 = arith.constant 0 : index
    %c0_60 = arith.constant 0 : index
    %84 = vector.load %arg9[%c1_58, %c0_59, %c0_60] : memref<5x80x120xf32, #tpu.memory_space<vmem>>, vector<1x80x120xf32>
    %85 = vector.shape_cast %84 : vector<1x80x120xf32> to vector<80x120xf32>
    %cst_61 = arith.constant dense<0.000000e+00> : vector<6x120xf32>
    %86 = tpu.matmul %83, %85, %cst_61 {dimension_numbers = #tpu.dot_dimension_numbers<[1], [0], [0], [1], [0, 0, 1, 1], [], []>} : vector<6x80xf32>, vector<80x120xf32>, vector<6x120xf32> -> vector<6x120xf32>
    %87 = arith.addf %82, %86 : vector<6x120xf32>
    %88 = vector.extract_strided_slice %78 {offsets = [2, 0], sizes = [6, 80], strides = [1, 1]} : vector<10x80xf32> to vector<6x80xf32>
    %c2_62 = arith.constant 2 : index
    %c0_63 = arith.constant 0 : index
    %c0_64 = arith.constant 0 : index
    %89 = vector.load %arg9[%c2_62, %c0_63, %c0_64] : memref<5x80x120xf32, #tpu.memory_space<vmem>>, vector<1x80x120xf32>
    %90 = vector.shape_cast %89 : vector<1x80x120xf32> to vector<80x120xf32>
    %cst_65 = arith.constant dense<0.000000e+00> : vector<6x120xf32>
    %91 = tpu.matmul %88, %90, %cst_65 {dimension_numbers = #tpu.dot_dimension_numbers<[1], [0], [0], [1], [0, 0, 1, 1], [], []>} : vector<6x80xf32>, vector<80x120xf32>, vector<6x120xf32> -> vector<6x120xf32>
    %92 = arith.addf %87, %91 : vector<6x120xf32>
    %93 = vector.extract_strided_slice %78 {offsets = [3, 0], sizes = [6, 80], strides = [1, 1]} : vector<10x80xf32> to vector<6x80xf32>
    %c3_66 = arith.constant 3 : index
    %c0_67 = arith.constant 0 : index
    %c0_68 = arith.constant 0 : index
    %94 = vector.load %arg9[%c3_66, %c0_67, %c0_68] : memref<5x80x120xf32, #tpu.memory_space<vmem>>, vector<1x80x120xf32>
    %95 = vector.shape_cast %94 : vector<1x80x120xf32> to vector<80x120xf32>
    %cst_69 = arith.constant dense<0.000000e+00> : vector<6x120xf32>
    %96 = tpu.matmul %93, %95, %cst_69 {dimension_numbers = #tpu.dot_dimension_numbers<[1], [0], [0], [1], [0, 0, 1, 1], [], []>} : vector<6x80xf32>, vector<80x120xf32>, vector<6x120xf32> -> vector<6x120xf32>
    %97 = arith.addf %92, %96 : vector<6x120xf32>
    %98 = vector.extract_strided_slice %78 {offsets = [4, 0], sizes = [6, 80], strides = [1, 1]} : vector<10x80xf32> to vector<6x80xf32>
    %c4_70 = arith.constant 4 : index
    %c0_71 = arith.constant 0 : index
    %c0_72 = arith.constant 0 : index
    %99 = vector.load %arg9[%c4_70, %c0_71, %c0_72] : memref<5x80x120xf32, #tpu.memory_space<vmem>>, vector<1x80x120xf32>
    %100 = vector.shape_cast %99 : vector<1x80x120xf32> to vector<80x120xf32>
    %cst_73 = arith.constant dense<0.000000e+00> : vector<6x120xf32>
    %101 = tpu.matmul %98, %100, %cst_73 {dimension_numbers = #tpu.dot_dimension_numbers<[1], [0], [0], [1], [0, 0, 1, 1], [], []>} : vector<6x80xf32>, vector<80x120xf32>, vector<6x120xf32> -> vector<6x120xf32>
    %102 = arith.addf %97, %101 : vector<6x120xf32>
    %c0_74 = arith.constant 0 : index
    %c0_75 = arith.constant 0 : index
    %103 = vector.load %arg10[%c0_74, %c0_75] : memref<1x120xf32, #tpu.memory_space<vmem>>, vector<1x120xf32>
    %104 = vector.broadcast %103 : vector<1x120xf32> to vector<6x120xf32>
    %105 = arith.addf %102, %104 : vector<6x120xf32>
    %c0_76 = arith.constant 0 : index
    %c0_77 = arith.constant 0 : index
    %106 = vector.load %arg11[%c0_76, %c0_77] : memref<2x6xf32, #tpu.memory_space<vmem>>, vector<2x6xf32>
    %cst_78 = arith.constant dense<0.000000e+00> : vector<2x120xf32>
    %107 = tpu.matmul %106, %105, %cst_78 {dimension_numbers = #tpu.dot_dimension_numbers<[1], [0], [0], [1], [0, 0, 1, 1], [], []>} : vector<2x6xf32>, vector<6x120xf32>, vector<2x120xf32> -> vector<2x120xf32>
    %c0_79 = arith.constant 0 : index
    %c0_80 = arith.constant 0 : index
    %108 = vector.load %arg12[%c0_79, %c0_80] : memref<120x84xf32, #tpu.memory_space<vmem>>, vector<120x84xf32>
    %cst_81 = arith.constant dense<0.000000e+00> : vector<2x84xf32>
    %109 = tpu.matmul %107, %108, %cst_81 {dimension_numbers = #tpu.dot_dimension_numbers<[1], [0], [0], [1], [0, 0, 1, 1], [], []>} : vector<2x120xf32>, vector<120x84xf32>, vector<2x84xf32> -> vector<2x84xf32>
    %c0_82 = arith.constant 0 : index
    %c0_83 = arith.constant 0 : index
    %110 = vector.load %arg13[%c0_82, %c0_83] : memref<1x84xf32, #tpu.memory_space<vmem>>, vector<1x84xf32>
    %111 = vector.broadcast %110 : vector<1x84xf32> to vector<2x84xf32>
    %112 = arith.addf %109, %111 : vector<2x84xf32>
    %cst_84 = arith.constant 0.000000e+00 : f32
    %113 = vector.broadcast %cst_84 : f32 to vector<2x84xf32>
    %114 = arith.maximumf %112, %113 : vector<2x84xf32>
    %c0_85 = arith.constant 0 : index
    %c0_86 = arith.constant 0 : index
    %115 = vector.load %arg14[%c0_85, %c0_86] : memref<84x10xf32, #tpu.memory_space<vmem>>, vector<84x10xf32>
    %cst_87 = arith.constant dense<0.000000e+00> : vector<2x10xf32>
    %116 = tpu.matmul %114, %115, %cst_87 {dimension_numbers = #tpu.dot_dimension_numbers<[1], [0], [0], [1], [0, 0, 1, 1], [], []>} : vector<2x84xf32>, vector<84x10xf32>, vector<2x10xf32> -> vector<2x10xf32>
    %c0_88 = arith.constant 0 : index
    %c0_89 = arith.constant 0 : index
    %117 = vector.load %arg15[%c0_88, %c0_89] : memref<1x10xf32, #tpu.memory_space<vmem>>, vector<1x10xf32>
    %118 = vector.broadcast %117 : vector<1x10xf32> to vector<2x10xf32>
    %119 = arith.addf %116, %118 : vector<2x10xf32>
    %c0_90 = arith.constant 0 : index
    %c0_91 = arith.constant 0 : index
    %120 = vector.load %arg16[%c0_90, %c0_91] : memref<2x10xf32, #tpu.memory_space<vmem>>, vector<2x10xf32>
    tpu.vector_store %arg16[%c0_90, %c0_91], %119 {strides = array<i32>} : memref<2x10xf32, #tpu.memory_space<vmem>>, vector<2x10xf32>,
    return
  }
}

</mosaic_0001>

<llo_original>
// kernel: lenet5_forward.1
$region0: #{lenet5_forward.1}
  #allocation0 [shape = 'u32[]', space=smem, size = 0x4, offset = 0x4, fixed_abs, tag = 'smem constant byte address 0x4 - core index']
  #allocation1 [shape = 'u32[144,128]{1,0:T(1,128)}', space=vmem, size = 0x12000, scoped, tag = 'internal scratch']
  %s0 = inlined_call_operand.vmem [shape: f32[64,32], index: 0, kind: input, shape index: {}]
  %s1 = inlined_call_operand.vmem [shape: f32[5,32,168], index: 1, kind: input, shape index: {}]
  %s2 = inlined_call_operand.vmem [shape: f32[1,168], index: 2, kind: input, shape index: {}]
  %s3 = inlined_call_operand.vmem [shape: f32[28,59], index: 3, kind: input, shape index: {}]
  %s4 = inlined_call_operand.vmem [shape: f32[162,88], index: 4, kind: input, shape index: {}]
  %s5 = inlined_call_operand.vmem [shape: f32[5,88,160], index: 5, kind: input, shape index: {}]
  %s6 = inlined_call_operand.vmem [shape: f32[1,160], index: 6, kind: input, shape index: {}]
  %s7 = inlined_call_operand.vmem [shape: f32[10,23], index: 7, kind: input, shape index: {}]
  %s8 = inlined_call_operand.vmem [shape: f32[144,80], index: 8, kind: input, shape index: {}]
  %s9 = inlined_call_operand.vmem [shape: f32[5,80,120], index: 9, kind: input, shape index: {}]
  %s10 = inlined_call_operand.vmem [shape: f32[1,120], index: 10, kind: input, shape index: {}]
  %s11 = inlined_call_operand.vmem [shape: f32[2,6], index: 11, kind: input, shape index: {}]
  %s12 = inlined_call_operand.vmem [shape: f32[120,84], index: 12, kind: input, shape index: {}]
  %s13 = inlined_call_operand.vmem [shape: f32[1,84], index: 13, kind: input, shape index: {}]
  %s14 = inlined_call_operand.vmem [shape: f32[84,10], index: 14, kind: input, shape index: {}]
  %s15 = inlined_call_operand.vmem [shape: f32[1,10], index: 15, kind: input, shape index: {}]
  %s16 = inlined_call_operand.hbm [shape: f32[2,10], index: 16, kind: output, shape index: {}]
  %s17 = sld [smem:[#allocation0]]
  $region74: #{lenet5_forward.1} parent=0
    _
  %s19 = ssub.s32 1, %s17
  %s20 = scalar_select 0, %s19, %s17
  $region1: #{lenet5_forward.1} parent=0
    #allocation2 [shape = 'u8[1024]{0}', space=vmem, size = 0x400, scoped, tag = 'output window, operand 0, single buffered']
    #allocation3 [shape = 's32[1]{0}', space=sflag, size = 0x4, scoped, tag = 'scoped memory for lenet5_forward.1']
    %21 = vsyncpa [#allocation3], 0
    // Predicated region
    $region2: #{lenet5_forward.1} parent=1 // pred_check
      _
    $region3: #{lenet5_forward.1} parent=1 // pred_check_branch
      %23 = sbr.rel (0) target = $region5
    $region4: #{lenet5_forward.1} parent=1 // pred_region
      _
    $region5: #{lenet5_forward.1} parent=1 // pred_fallthru
      _
    // Predicated region
    $region6: #{lenet5_forward.1} parent=1 // pred_check
      _
    $region7: #{lenet5_forward.1} parent=1 // pred_check_branch
      %25 = sbr.rel (0) target = $region9
    $region8: #{lenet5_forward.1} parent=1 // pred_region
      _
    $region9: #{lenet5_forward.1} parent=1 // pred_fallthru
      _
    // Predicated region
    $region10: #{lenet5_forward.1} parent=1 // pred_check
      _
    $region11: #{lenet5_forward.1} parent=1 // pred_check_branch
      %27 = sbr.rel (0) target = $region13
    $region12: #{lenet5_forward.1} parent=1 // pred_region
      _
    $region13: #{lenet5_forward.1} parent=1 // pred_fallthru
      _
    // Predicated region
    $region14: #{lenet5_forward.1} parent=1 // pred_check
      _
    $region15: #{lenet5_forward.1} parent=1 // pred_check_branch
      %29 = sbr.rel (0) target = $region17
    $region16: #{lenet5_forward.1} parent=1 // pred_region
      _
    $region17: #{lenet5_forward.1} parent=1 // pred_fallthru
      _
    // Predicated region
    $region18: #{lenet5_forward.1} parent=1 // pred_check
      _
    $region19: #{lenet5_forward.1} parent=1 // pred_check_branch
      %31 = sbr.rel (0) target = $region21
    $region20: #{lenet5_forward.1} parent=1 // pred_region
      _
    $region21: #{lenet5_forward.1} parent=1 // pred_fallthru
      _
    // Predicated region
    $region22: #{lenet5_forward.1} parent=1 // pred_check
      _
    $region23: #{lenet5_forward.1} parent=1 // pred_check_branch
      %33 = sbr.rel (0) target = $region25
    $region24: #{lenet5_forward.1} parent=1 // pred_region
      _
    $region25: #{lenet5_forward.1} parent=1 // pred_fallthru
      _
    // Predicated region
    $region26: #{lenet5_forward.1} parent=1 // pred_check
      _
    $region27: #{lenet5_forward.1} parent=1 // pred_check_branch
      %35 = sbr.rel (0) target = $region29
    $region28: #{lenet5_forward.1} parent=1 // pred_region
      _
    $region29: #{lenet5_forward.1} parent=1 // pred_fallthru
      _
    // Predicated region
    $region30: #{lenet5_forward.1} parent=1 // pred_check
      _
    $region31: #{lenet5_forward.1} parent=1 // pred_check_branch
      %37 = sbr.rel (0) target = $region33
    $region32: #{lenet5_forward.1} parent=1 // pred_region
      _
    $region33: #{lenet5_forward.1} parent=1 // pred_fallthru
      _
    // Predicated region
    $region34: #{lenet5_forward.1} parent=1 // pred_check
      _
    $region35: #{lenet5_forward.1} parent=1 // pred_check_branch
      %39 = sbr.rel (0) target = $region37
    $region36: #{lenet5_forward.1} parent=1 // pred_region
      _
    $region37: #{lenet5_forward.1} parent=1 // pred_fallthru
      _
    // Predicated region
    $region38: #{lenet5_forward.1} parent=1 // pred_check
      _
    $region39: #{lenet5_forward.1} parent=1 // pred_check_branch
      %41 = sbr.rel (0) target = $region41
    $region40: #{lenet5_forward.1} parent=1 // pred_region
      _
    $region41: #{lenet5_forward.1} parent=1 // pred_fallthru
      _
    // Predicated region
    $region42: #{lenet5_forward.1} parent=1 // pred_check
      _
    $region43: #{lenet5_forward.1} parent=1 // pred_check_branch
      %43 = sbr.rel (0) target = $region45
    $region44: #{lenet5_forward.1} parent=1 // pred_region
      _
    $region45: #{lenet5_forward.1} parent=1 // pred_fallthru
      _
    // Predicated region
    $region46: #{lenet5_forward.1} parent=1 // pred_check
      _
    $region47: #{lenet5_forward.1} parent=1 // pred_check_branch
      %45 = sbr.rel (0) target = $region49
    $region48: #{lenet5_forward.1} parent=1 // pred_region
      _
    $region49: #{lenet5_forward.1} parent=1 // pred_fallthru
      _
    // Predicated region
    $region50: #{lenet5_forward.1} parent=1 // pred_check
      _
    $region51: #{lenet5_forward.1} parent=1 // pred_check_branch
      %47 = sbr.rel (0) target = $region53
    $region52: #{lenet5_forward.1} parent=1 // pred_region
      _
    $region53: #{lenet5_forward.1} parent=1 // pred_fallthru
      _
    // Predicated region
    $region54: #{lenet5_forward.1} parent=1 // pred_check
      _
    $region55: #{lenet5_forward.1} parent=1 // pred_check_branch
      %49 = sbr.rel (0) target = $region57
    $region56: #{lenet5_forward.1} parent=1 // pred_region
      _
    $region57: #{lenet5_forward.1} parent=1 // pred_fallthru
      _
    // Predicated region
    $region58: #{lenet5_forward.1} parent=1 // pred_check
      _
    $region59: #{lenet5_forward.1} parent=1 // pred_check_branch
      %51 = sbr.rel (0) target = $region61
    $region60: #{lenet5_forward.1} parent=1 // pred_region
      _
    $region61: #{lenet5_forward.1} parent=1 // pred_fallthru
      _
    // Predicated region
    $region62: #{lenet5_forward.1} parent=1 // pred_check
      _
    $region63: #{lenet5_forward.1} parent=1 // pred_check_branch
      %53 = sbr.rel (0) target = $region65
    $region64: #{lenet5_forward.1} parent=1 // pred_region
      _
    $region65: #{lenet5_forward.1} parent=1 // pred_fallthru
      _
    %v54 = vld [vmem:[%s0] sm:$0xff]
    %v55 = vld [vmem:[%s0 + $0x8] sm:$0xff]
    %v56 = vld [vmem:[%s0 + $0x10] sm:$0xff]
    %v57 = vld [vmem:[%s0 + $0x18] sm:$0xff]
    %v58 = vld [vmem:[%s0 + $0x20] sm:$0xff]
    %v59 = vld [vmem:[%s0 + $0x28] sm:$0xff]
    %v60 = vld [vmem:[%s0 + $0x30] sm:$0xff]
    %v61 = vld [vmem:[%s0 + $0x38] sm:$0xff]
    %v62 = vld [vmem:[%s1] sm:$0xff]
    %v63 = vld [vmem:[%s1 + $0x8] sm:$0xff]
    %v64 = vld [vmem:[%s1 + $0x10] sm:$0xff]
    %v65 = vld [vmem:[%s1 + $0x18] sm:$0xff]
    %v66 = vld [vmem:[%s1 + $0x20] sm:$0xff]
    %v67 = vld [vmem:[%s1 + $0x28] sm:$0xff]
    %v68 = vld [vmem:[%s1 + $0x30] sm:$0xff]
    %v69 = vld [vmem:[%s1 + $0x38] sm:$0xff]
    %s70 = scalar_lea.vmem %s1, 64
    %v71 = vld [vmem:[%s70] sm:$0xff]
    %v72 = vld [vmem:[%s70 + $0x8] sm:$0xff]
    %v73 = vld [vmem:[%s70 + $0x10] sm:$0xff]
    %v74 = vld [vmem:[%s70 + $0x18] sm:$0xff]
    %v75 = vld [vmem:[%s70 + $0x20] sm:$0xff]
    %v76 = vld [vmem:[%s70 + $0x28] sm:$0xff]
    %v77 = vld [vmem:[%s70 + $0x30] sm:$0xff]
    %v78 = vld [vmem:[%s70 + $0x38] sm:$0xff]
    %vm87 = vcmask 1046528
    %v88 = vrot.slane %v54, 1
    %v89 = vrot.slane %v55, 1
    %v90 = vsel %vm87, %v88, %v89
    %v91 = vrot.slane %v56, 1
    %v92 = vsel %vm87, %v89, %v91
    %v93 = vrot.slane %v57, 1
    %v94 = vsel %vm87, %v91, %v93
    %v95 = vrot.slane %v58, 1
    %v96 = vsel %vm87, %v93, %v95
    %v97 = vrot.slane %v59, 1
    %v98 = vsel %vm87, %v95, %v97
    %v99 = vrot.slane %v60, 1
    %v100 = vsel %vm87, %v97, %v99
    %v101 = vrot.slane %v61, 1
    %v102 = vsel %vm87, %v99, %v101
    %vm103 = vcmask 261120
    %v104 = vsel %vm103, %v90, 0
    %v106 = vsel %vm103, %v92, 0
    %v108 = vsel %vm103, %v94, 0
    %v110 = vsel %vm103, %v96, 0
    %v112 = vsel %vm103, %v98, 0
    %v114 = vsel %vm103, %v100, 0
    %v116 = vsel %vm103, %v102, 0
    %v118 = vsel %vm103, %v101, 0
    %120 = vmatprep.subr.mxu0 %v72
    %121 = vmatpush1.msra.mxu0 %v71
    %122 = vmatprep.subr.mxu0 %v74
    %123 = vmatpush1.msra.mxu0 %v73
    %124 = vmatprep.subr.mxu0 %v76
    %125 = vmatpush1.msra.mxu0 %v75
    %126 = vmatprep.subr.mxu0 %v78
    %127 = vmatpush1.msra.mxu0 %v77
    %128 = vmatprep.subr.mxu0 0.0
    %129 = vmatpush1.msra.mxu0 0.0
    %130 = vmatprep.subr.mxu0 0.0
    %131 = vmatpush1.msra.mxu0 0.0
    %132 = vmatprep.subr.mxu0 0.0
    %133 = vmatpush1.msra.mxu0 0.0
    %134 = vmatprep.subr.mxu0 0.0
    %135 = vmatpush1.msra.mxu0 0.0
    %136 = vmatprep.subr.mxu0 0.0
    %137 = vmatpush1.msra.mxu0 0.0
    %138 = vmatprep.subr.mxu0 0.0
    %139 = vmatpush1.msra.mxu0 0.0
    %140 = vmatprep.subr.mxu0 0.0
    %141 = vmatpush1.msra.mxu0 0.0
    %142 = vmatprep.subr.mxu0 0.0
    %143 = vmatpush1.msra.mxu0 0.0
    %144 = vmatprep.subr.mxu0 0.0
    %145 = vmatpush1.msra.mxu0 0.0
    %146 = vmatprep.subr.mxu0 0.0
    %147 = vmatpush1.msra.mxu0 0.0
    %148 = vmatprep.subr.mxu0 0.0
    %149 = vmatpush1.msra.mxu0 0.0
    %150 = vmatprep.subr.mxu0 0.0
    %151 = vmatpush1.msra.mxu0 0.0
    %152 = vmatprep.subr.mxu0 0.0
    %153 = vmatpush1.msra.mxu0 0.0
    %154 = vmatprep.subr.mxu0 0.0
    %155 = vmatpush1.msra.mxu0 0.0
    %156 = vmatprep.subr.mxu0 0.0
    %157 = vmatpush1.msra.mxu0 0.0
    %158 = vmatprep.subr.mxu0 0.0
    %159 = vmatpush1.msra.mxu0 0.0
    %160 = vmatprep.subr.mxu0 0.0
    %161 = vmatpush1.msra.mxu0 0.0
    %162 = vmatprep.subr.mxu0 0.0
    %163 = vmatpush1.msra.mxu0 0.0
    %164 = vmatprep.subr.mxu0 0.0
    %165 = vmatpush1.msra.mxu0 0.0
    %166 = vmatprep.subr.mxu0 0.0
    %167 = vmatpush1.msra.mxu0 0.0
    %168 = vmatprep.subr.mxu0 0.0
    %169 = vmatpush1.msra.mxu0 0.0
    %170 = vmatprep.subr.mxu0 0.0
    %171 = vmatpush1.msra.mxu0 0.0
    %172 = vmatprep.subr.mxu0 0.0
    %173 = vmatpush1.msra.mxu0 0.0
    %174 = vmatprep.subr.mxu0 0.0
    %175 = vmatpush1.msra.mxu0 0.0
    %176 = vmatprep.subr.mxu0 0.0
    %177 = vmatpush1.msra.mxu0 0.0
    %178 = vmatprep.subr.mxu0 0.0
    %179 = vmatpush1.msra.mxu0 0.0
    %180 = vmatprep.subr.mxu0 0.0
    %181 = vmatpush1.msra.mxu0 0.0
    %182 = vmatprep.subr.mxu0 0.0
    %183 = vmatpush1.msra.mxu0 0.0
    %184 = vmatprep.mubr.f32.mxu0 0.0
    %185 = vmatmul.mubr.f32.gmra.mrb[0].mxu0 %v104
    %v186 = vpop.f32.mrb[0].mxu0
    %v187 = vadd.f32 0.0, %v186
    %v188 = vpop.f32.mrb[0].mxu0
    %v189 = vadd.f32 0.0, %v188
    %190 = vmatprep.mubr.f32.mxu0 0.0
    %191 = vmatmul.mubr.f32.gmra.mrb[0].mxu0 %v106
    %v192 = vpop.f32.mrb[0].mxu0
    %v193 = vadd.f32 0.0, %v192
    %v194 = vpop.f32.mrb[0].mxu0
    %v195 = vadd.f32 0.0, %v194
    %196 = vmatprep.mubr.f32.mxu0 0.0
    %197 = vmatmul.mubr.f32.gmra.mrb[0].mxu0 %v108
    %v198 = vpop.f32.mrb[0].mxu0
    %v199 = vadd.f32 0.0, %v198
    %v200 = vpop.f32.mrb[0].mxu0
    %v201 = vadd.f32 0.0, %v200
    %202 = vmatprep.mubr.f32.mxu0 0.0
    %203 = vmatmul.mubr.f32.gmra.mrb[0].mxu0 %v110
    %v204 = vpop.f32.mrb[0].mxu0
    %v205 = vadd.f32 0.0, %v204
    %v206 = vpop.f32.mrb[0].mxu0
    %v207 = vadd.f32 0.0, %v206
    %208 = vmatprep.mubr.f32.mxu0 0.0
    %209 = vmatmul.mubr.f32.gmra.mrb[0].mxu0 %v112
    %v210 = vpop.f32.mrb[0].mxu0
    %v211 = vadd.f32 0.0, %v210
    %v212 = vpop.f32.mrb[0].mxu0
    %v213 = vadd.f32 0.0, %v212
    %214 = vmatprep.mubr.f32.mxu0 0.0
    %215 = vmatmul.mubr.f32.gmra.mrb[0].mxu0 %v114
    %v216 = vpop.f32.mrb[0].mxu0
    %v217 = vadd.f32 0.0, %v216
    %v218 = vpop.f32.mrb[0].mxu0
    %v219 = vadd.f32 0.0, %v218
    %220 = vmatprep.mubr.f32.mxu0 0.0
    %221 = vmatmul.mubr.f32.gmra.mrb[0].mxu0 %v116
    %v222 = vpop.f32.mrb[0].mxu0
    %v223 = vadd.f32 0.0, %v222
    %v224 = vpop.f32.mrb[0].mxu0
    %v225 = vadd.f32 0.0, %v224
    %226 = vmatprep.mubr.f32.mxu0 0.0
    %227 = vmatmul.mubr.f32.gmra.mrb[0].mxu0 %v118
    %v228 = vpop.f32.mrb[0].mxu0
    %v229 = vadd.f32 0.0, %v228
    %v230 = vpop.f32.mrb[0].mxu0
    %v231 = vadd.f32 0.0, %v230
    %232 = vdwg.mxu0
    %v233 = vsel %vm103, %v54, 0
    %v235 = vsel %vm103, %v55, 0
    %v237 = vsel %vm103, %v56, 0
    %v239 = vsel %vm103, %v57, 0
    %v241 = vsel %vm103, %v58, 0
    %v243 = vsel %vm103, %v59, 0
    %v245 = vsel %vm103, %v60, 0
    %v247 = vsel %vm103, %v61, 0
    %249 = vmatprep.subr.mxu0 %v63
    %250 = vmatpush1.msra.mxu0 %v62
    %251 = vmatprep.subr.mxu0 %v65
    %252 = vmatpush1.msra.mxu0 %v64
    %253 = vmatprep.subr.mxu0 %v67
    %254 = vmatpush1.msra.mxu0 %v66
    %255 = vmatprep.subr.mxu0 %v69
    %256 = vmatpush1.msra.mxu0 %v68
    %257 = vmatprep.subr.mxu0 0.0
    %258 = vmatpush1.msra.mxu0 0.0
    %259 = vmatprep.subr.mxu0 0.0
    %260 = vmatpush1.msra.mxu0 0.0
    %261 = vmatprep.subr.mxu0 0.0
    %262 = vmatpush1.msra.mxu0 0.0
    %263 = vmatprep.subr.mxu0 0.0
    %264 = vmatpush1.msra.mxu0 0.0
    %265 = vmatprep.subr.mxu0 0.0
    %266 = vmatpush1.msra.mxu0 0.0
    %267 = vmatprep.subr.mxu0 0.0
    %268 = vmatpush1.msra.mxu0 0.0
    %269 = vmatprep.subr.mxu0 0.0
    %270 = vmatpush1.msra.mxu0 0.0
    %271 = vmatprep.subr.mxu0 0.0
    %272 = vmatpush1.msra.mxu0 0.0
    %273 = vmatprep.subr.mxu0 0.0
    %274 = vmatpush1.msra.mxu0 0.0
    %275 = vmatprep.subr.mxu0 0.0
    %276 = vmatpush1.msra.mxu0 0.0
    %277 = vmatprep.subr.mxu0 0.0
    %278 = vmatpush1.msra.mxu0 0.0
    %279 = vmatprep.subr.mxu0 0.0
    %280 = vmatpush1.msra.mxu0 0.0
    %281 = vmatprep.subr.mxu0 0.0
    %282 = vmatpush1.msra.mxu0 0.0
    %283 = vmatprep.subr.mxu0 0.0
    %284 = vmatpush1.msra.mxu0 0.0
    %285 = vmatprep.subr.mxu0 0.0
    %286 = vmatpush1.msra.mxu0 0.0
    %287 = vmatprep.subr.mxu0 0.0
    %288 = vmatpush1.msra.mxu0 0.0
    %289 = vmatprep.subr.mxu0 0.0
    %290 = vmatpush1.msra.mxu0 0.0
    %291 = vmatprep.subr.mxu0 0.0
    %292 = vmatpush1.msra.mxu0 0.0
    %293 = vmatprep.subr.mxu0 0.0
    %294 = vmatpush1.msra.mxu0 0.0
    %295 = vmatprep.subr.mxu0 0.0
    %296 = vmatpush1.msra.mxu0 0.0
    %297 = vmatprep.subr.mxu0 0.0
    %298 = vmatpush1.msra.mxu0 0.0
    %299 = vmatprep.subr.mxu0 0.0
    %300 = vmatpush1.msra.mxu0 0.0
    %301 = vmatprep.subr.mxu0 0.0
    %302 = vmatpush1.msra.mxu0 0.0
    %303 = vmatprep.subr.mxu0 0.0
    %304 = vmatpush1.msra.mxu0 0.0
    %305 = vmatprep.subr.mxu0 0.0
    %306 = vmatpush1.msra.mxu0 0.0
    %307 = vmatprep.subr.mxu0 0.0
    %308 = vmatpush1.msra.mxu0 0.0
    %309 = vmatprep.subr.mxu0 0.0
    %310 = vmatpush1.msra.mxu0 0.0
    %311 = vmatprep.subr.mxu0 0.0
    %312 = vmatpush1.msra.mxu0 0.0
    %313 = vmatprep.mubr.f32.mxu0 0.0
    %314 = vmatmul.mubr.f32.gmra.mrb[0].mxu0 %v233
    %v315 = vpop.f32.mrb[0].mxu0
    %v316 = vadd.f32 %v187, %v315
    %v317 = vpop.f32.mrb[0].mxu0
    %v318 = vadd.f32 %v189, %v317
    %319 = vmatprep.mubr.f32.mxu0 0.0
    %320 = vmatmul.mubr.f32.gmra.mrb[0].mxu0 %v235
    %v321 = vpop.f32.mrb[0].mxu0
    %v322 = vadd.f32 %v193, %v321
    %v323 = vpop.f32.mrb[0].mxu0
    %v324 = vadd.f32 %v195, %v323
    %325 = vmatprep.mubr.f32.mxu0 0.0
    %326 = vmatmul.mubr.f32.gmra.mrb[0].mxu0 %v237
    %v327 = vpop.f32.mrb[0].mxu0
    %v328 = vadd.f32 %v199, %v327
    %v329 = vpop.f32.mrb[0].mxu0
    %v330 = vadd.f32 %v201, %v329
    %331 = vmatprep.mubr.f32.mxu0 0.0
    %332 = vmatmul.mubr.f32.gmra.mrb[0].mxu0 %v239
    %v333 = vpop.f32.mrb[0].mxu0
    %v334 = vadd.f32 %v205, %v333
    %v335 = vpop.f32.mrb[0].mxu0
    %v336 = vadd.f32 %v207, %v335
    %337 = vmatprep.mubr.f32.mxu0 0.0
    %338 = vmatmul.mubr.f32.gmra.mrb[0].mxu0 %v241
    %v339 = vpop.f32.mrb[0].mxu0
    %v340 = vadd.f32 %v211, %v339
    %v341 = vpop.f32.mrb[0].mxu0
    %v342 = vadd.f32 %v213, %v341
    %343 = vmatprep.mubr.f32.mxu0 0.0
    %344 = vmatmul.mubr.f32.gmra.mrb[0].mxu0 %v243
    %v345 = vpop.f32.mrb[0].mxu0
    %v346 = vadd.f32 %v217, %v345
    %v347 = vpop.f32.mrb[0].mxu0
    %v348 = vadd.f32 %v219, %v347
    %349 = vmatprep.mubr.f32.mxu0 0.0
    %350 = vmatmul.mubr.f32.gmra.mrb[0].mxu0 %v245
    %v351 = vpop.f32.mrb[0].mxu0
    %v352 = vadd.f32 %v223, %v351
    %v353 = vpop.f32.mrb[0].mxu0
    %v354 = vadd.f32 %v225, %v353
    %355 = vmatprep.mubr.f32.mxu0 0.0
    %356 = vmatmul.mubr.f32.gmra.mrb[0].mxu0 %v247
    %v357 = vpop.f32.mrb[0].mxu0
    %v358 = vadd.f32 %v229, %v357
    %v359 = vpop.f32.mrb[0].mxu0
    %v360 = vadd.f32 %v231, %v359
    %361 = vdwg.mxu0
    %s362 = scalar_lea.vmem %s1, 128
    %v363 = vld [vmem:[%s362] sm:$0xff]
    %v364 = vld [vmem:[%s362 + $0x8] sm:$0xff]
    %v365 = vld [vmem:[%s362 + $0x10] sm:$0xff]
    %v366 = vld [vmem:[%s362 + $0x18] sm:$0xff]
    %v367 = vld [vmem:[%s362 + $0x20] sm:$0xff]
    %v368 = vld [vmem:[%s362 + $0x28] sm:$0xff]
    %v369 = vld [vmem:[%s362 + $0x30] sm:$0xff]
    %v370 = vld [vmem:[%s362 + $0x38] sm:$0xff]
    %vm371 = vcmask 1045504
    %v372 = vrot.slane %v54, 2
    %v373 = vrot.slane %v55, 2
    %v374 = vsel %vm371, %v372, %v373
    %v375 = vrot.slane %v56, 2
    %v376 = vsel %vm371, %v373, %v375
    %v377 = vrot.slane %v57, 2
    %v378 = vsel %vm371, %v375, %v377
    %v379 = vrot.slane %v58, 2
    %v380 = vsel %vm371, %v377, %v379
    %v381 = vrot.slane %v59, 2
    %v382 = vsel %vm371, %v379, %v381
    %v383 = vrot.slane %v60, 2
    %v384 = vsel %vm371, %v381, %v383
    %v385 = vrot.slane %v61, 2
    %v386 = vsel %vm371, %v383, %v385
    %v387 = vsel %vm103, %v374, 0
    %v389 = vsel %vm103, %v376, 0
    %v391 = vsel %vm103, %v378, 0
    %v393 = vsel %vm103, %v380, 0
    %v395 = vsel %vm103, %v382, 0
    %v397 = vsel %vm103, %v384, 0
    %v399 = vsel %vm103, %v386, 0
    %v401 = vsel %vm103, %v385, 0
    %403 = vmatprep.subr.mxu0 %v364
    %404 = vmatpush1.msra.mxu0 %v363
    %405 = vmatprep.subr.mxu0 %v366
    %406 = vmatpush1.msra.mxu0 %v365
    %407 = vmatprep.subr.mxu0 %v368
    %408 = vmatpush1.msra.mxu0 %v367
    %409 = vmatprep.subr.mxu0 %v370
    %410 = vmatpush1.msra.mxu0 %v369
    %411 = vmatprep.subr.mxu0 0.0
    %412 = vmatpush1.msra.mxu0 0.0
    %413 = vmatprep.subr.mxu0 0.0
    %414 = vmatpush1.msra.mxu0 0.0
    %415 = vmatprep.subr.mxu0 0.0
    %416 = vmatpush1.msra.mxu0 0.0
    %417 = vmatprep.subr.mxu0 0.0
    %418 = vmatpush1.msra.mxu0 0.0
    %419 = vmatprep.subr.mxu0 0.0
    %420 = vmatpush1.msra.mxu0 0.0
    %421 = vmatprep.subr.mxu0 0.0
    %422 = vmatpush1.msra.mxu0 0.0
    %423 = vmatprep.subr.mxu0 0.0
    %424 = vmatpush1.msra.mxu0 0.0
    %425 = vmatprep.subr.mxu0 0.0
    %426 = vmatpush1.msra.mxu0 0.0
    %427 = vmatprep.subr.mxu0 0.0
    %428 = vmatpush1.msra.mxu0 0.0
    %429 = vmatprep.subr.mxu0 0.0
    %430 = vmatpush1.msra.mxu0 0.0
    %431 = vmatprep.subr.mxu0 0.0
    %432 = vmatpush1.msra.mxu0 0.0
    %433 = vmatprep.subr.mxu0 0.0
    %434 = vmatpush1.msra.mxu0 0.0
    %435 = vmatprep.subr.mxu0 0.0
    %436 = vmatpush1.msra.mxu0 0.0
    %437 = vmatprep.subr.mxu0 0.0
    %438 = vmatpush1.msra.mxu0 0.0
    %439 = vmatprep.subr.mxu0 0.0
    %440 = vmatpush1.msra.mxu0 0.0
    %441 = vmatprep.subr.mxu0 0.0
    %442 = vmatpush1.msra.mxu0 0.0
    %443 = vmatprep.subr.mxu0 0.0
    %444 = vmatpush1.msra.mxu0 0.0
    %445 = vmatprep.subr.mxu0 0.0
    %446 = vmatpush1.msra.mxu0 0.0
    %447 = vmatprep.subr.mxu0 0.0
    %448 = vmatpush1.msra.mxu0 0.0
    %449 = vmatprep.subr.mxu0 0.0
    %450 = vmatpush1.msra.mxu0 0.0
    %451 = vmatprep.subr.mxu0 0.0
    %452 = vmatpush1.msra.mxu0 0.0
    %453 = vmatprep.subr.mxu0 0.0
    %454 = vmatpush1.msra.mxu0 0.0
    %455 = vmatprep.subr.mxu0 0.0
    %456 = vmatpush1.msra.mxu0 0.0
    %457 = vmatprep.subr.mxu0 0.0
    %458 = vmatpush1.msra.mxu0 0.0
    %459 = vmatprep.subr.mxu0 0.0
    %460 = vmatpush1.msra.mxu0 0.0
    %461 = vmatprep.subr.mxu0 0.0
    %462 = vmatpush1.msra.mxu0 0.0
    %463 = vmatprep.subr.mxu0 0.0
    %464 = vmatpush1.msra.mxu0 0.0
    %465 = vmatprep.subr.mxu0 0.0
    %466 = vmatpush1.msra.mxu0 0.0
    %467 = vmatprep.mubr.f32.mxu0 0.0
    %468 = vmatmul.mubr.f32.gmra.mrb[0].mxu0 %v387
    %v469 = vpop.f32.mrb[0].mxu0
    %v470 = vadd.f32 0.0, %v469
    %v471 = vpop.f32.mrb[0].mxu0
    %v472 = vadd.f32 0.0, %v471
    %473 = vmatprep.mubr.f32.mxu0 0.0
    %474 = vmatmul.mubr.f32.gmra.mrb[0].mxu0 %v389
    %v475 = vpop.f32.mrb[0].mxu0
    %v476 = vadd.f32 0.0, %v475
    %v477 = vpop.f32.mrb[0].mxu0
    %v478 = vadd.f32 0.0, %v477
    %479 = vmatprep.mubr.f32.mxu0 0.0
    %480 = vmatmul.mubr.f32.gmra.mrb[0].mxu0 %v391
    %v481 = vpop.f32.mrb[0].mxu0
    %v482 = vadd.f32 0.0, %v481
    %v483 = vpop.f32.mrb[0].mxu0
    %v484 = vadd.f32 0.0, %v483
    %485 = vmatprep.mubr.f32.mxu0 0.0
    %486 = vmatmul.mubr.f32.gmra.mrb[0].mxu0 %v393
    %v487 = vpop.f32.mrb[0].mxu0
    %v488 = vadd.f32 0.0, %v487
    %v489 = vpop.f32.mrb[0].mxu0
    %v490 = vadd.f32 0.0, %v489
    %491 = vmatprep.mubr.f32.mxu0 0.0
    %492 = vmatmul.mubr.f32.gmra.mrb[0].mxu0 %v395
    %v493 = vpop.f32.mrb[0].mxu0
    %v494 = vadd.f32 0.0, %v493
    %v495 = vpop.f32.mrb[0].mxu0
    %v496 = vadd.f32 0.0, %v495
    %497 = vmatprep.mubr.f32.mxu0 0.0
    %498 = vmatmul.mubr.f32.gmra.mrb[0].mxu0 %v397
    %v499 = vpop.f32.mrb[0].mxu0
    %v500 = vadd.f32 0.0, %v499
    %v501 = vpop.f32.mrb[0].mxu0
    %v502 = vadd.f32 0.0, %v501
    %503 = vmatprep.mubr.f32.mxu0 0.0
    %504 = vmatmul.mubr.f32.gmra.mrb[0].mxu0 %v399
    %v505 = vpop.f32.mrb[0].mxu0
    %v506 = vadd.f32 0.0, %v505
    %v507 = vpop.f32.mrb[0].mxu0
    %v508 = vadd.f32 0.0, %v507
    %509 = vmatprep.mubr.f32.mxu0 0.0
    %510 = vmatmul.mubr.f32.gmra.mrb[0].mxu0 %v401
    %v511 = vpop.f32.mrb[0].mxu0
    %v512 = vadd.f32 0.0, %v511
    %v513 = vpop.f32.mrb[0].mxu0
    %v514 = vadd.f32 0.0, %v513
    %515 = vdwg.mxu0
    %v516 = vadd.f32 %v316, %v470
    %v517 = vadd.f32 %v318, %v472
    %v518 = vadd.f32 %v322, %v476
    %v519 = vadd.f32 %v324, %v478
    %v520 = vadd.f32 %v328, %v482
    %v521 = vadd.f32 %v330, %v484
    %v522 = vadd.f32 %v334, %v488
    %v523 = vadd.f32 %v336, %v490
    %v524 = vadd.f32 %v340, %v494
    %v525 = vadd.f32 %v342, %v496
    %v526 = vadd.f32 %v346, %v500
    %v527 = vadd.f32 %v348, %v502
    %v528 = vadd.f32 %v352, %v506
    %v529 = vadd.f32 %v354, %v508
    %v530 = vadd.f32 %v358, %v512
    %v531 = vadd.f32 %v360, %v514
    %s532 = scalar_lea.vmem %s1, 192
    %v533 = vld [vmem:[%s532] sm:$0xff]
    %v534 = vld [vmem:[%s532 + $0x8] sm:$0xff]
    %v535 = vld [vmem:[%s532 + $0x10] sm:$0xff]
    %v536 = vld [vmem:[%s532 + $0x18] sm:$0xff]
    %v537 = vld [vmem:[%s532 + $0x20] sm:$0xff]
    %v538 = vld [vmem:[%s532 + $0x28] sm:$0xff]
    %v539 = vld [vmem:[%s532 + $0x30] sm:$0xff]
    %v540 = vld [vmem:[%s532 + $0x38] sm:$0xff]
    %vm541 = vcmask 1044480
    %v542 = vrot.slane %v54, 3
    %v543 = vrot.slane %v55, 3
    %v544 = vsel %vm541, %v542, %v543
    %v545 = vrot.slane %v56, 3
    %v546 = vsel %vm541, %v543, %v545
    %v547 = vrot.slane %v57, 3
    %v548 = vsel %vm541, %v545, %v547
    %v549 = vrot.slane %v58, 3
    %v550 = vsel %vm541, %v547, %v549
    %v551 = vrot.slane %v59, 3
    %v552 = vsel %vm541, %v549, %v551
    %v553 = vrot.slane %v60, 3
    %v554 = vsel %vm541, %v551, %v553
    %v555 = vrot.slane %v61, 3
    %v556 = vsel %vm541, %v553, %v555
    %v557 = vsel %vm103, %v544, 0
    %v559 = vsel %vm103, %v546, 0
    %v561 = vsel %vm103, %v548, 0
    %v563 = vsel %vm103, %v550, 0
    %v565 = vsel %vm103, %v552, 0
    %v567 = vsel %vm103, %v554, 0
    %v569 = vsel %vm103, %v556, 0
    %v571 = vsel %vm103, %v555, 0
    %573 = vmatprep.subr.mxu0 %v534
    %574 = vmatpush1.msra.mxu0 %v533
    %575 = vmatprep.subr.mxu0 %v536
    %576 = vmatpush1.msra.mxu0 %v535
    %577 = vmatprep.subr.mxu0 %v538
    %578 = vmatpush1.msra.mxu0 %v537
    %579 = vmatprep.subr.mxu0 %v540
    %580 = vmatpush1.msra.mxu0 %v539
    %581 = vmatprep.subr.mxu0 0.0
    %582 = vmatpush1.msra.mxu0 0.0
    %583 = vmatprep.subr.mxu0 0.0
    %584 = vmatpush1.msra.mxu0 0.0
    %585 = vmatprep.subr.mxu0 0.0
    %586 = vmatpush1.msra.mxu0 0.0
    %587 = vmatprep.subr.mxu0 0.0
    %588 = vmatpush1.msra.mxu0 0.0
    %589 = vmatprep.subr.mxu0 0.0
    %590 = vmatpush1.msra.mxu0 0.0
    %591 = vmatprep.subr.mxu0 0.0
    %592 = vmatpush1.msra.mxu0 0.0
    %593 = vmatprep.subr.mxu0 0.0
    %594 = vmatpush1.msra.mxu0 0.0
    %595 = vmatprep.subr.mxu0 0.0
    %596 = vmatpush1.msra.mxu0 0.0
    %597 = vmatprep.subr.mxu0 0.0
    %598 = vmatpush1.msra.mxu0 0.0
    %599 = vmatprep.subr.mxu0 0.0
    %600 = vmatpush1.msra.mxu0 0.0
    %601 = vmatprep.subr.mxu0 0.0
    %602 = vmatpush1.msra.mxu0 0.0
    %603 = vmatprep.subr.mxu0 0.0
    %604 = vmatpush1.msra.mxu0 0.0
    %605 = vmatprep.subr.mxu0 0.0
    %606 = vmatpush1.msra.mxu0 0.0
    %607 = vmatprep.subr.mxu0 0.0
    %608 = vmatpush1.msra.mxu0 0.0
    %609 = vmatprep.subr.mxu0 0.0
    %610 = vmatpush1.msra.mxu0 0.0
    %611 = vmatprep.subr.mxu0 0.0
    %612 = vmatpush1.msra.mxu0 0.0
    %613 = vmatprep.subr.mxu0 0.0
    %614 = vmatpush1.msra.mxu0 0.0
    %615 = vmatprep.subr.mxu0 0.0
    %616 = vmatpush1.msra.mxu0 0.0
    %617 = vmatprep.subr.mxu0 0.0
    %618 = vmatpush1.msra.mxu0 0.0
    %619 = vmatprep.subr.mxu0 0.0
    %620 = vmatpush1.msra.mxu0 0.0
    %621 = vmatprep.subr.mxu0 0.0
    %622 = vmatpush1.msra.mxu0 0.0
    %623 = vmatprep.subr.mxu0 0.0
    %624 = vmatpush1.msra.mxu0 0.0
    %625 = vmatprep.subr.mxu0 0.0
    %626 = vmatpush1.msra.mxu0 0.0
    %627 = vmatprep.subr.mxu0 0.0
    %628 = vmatpush1.msra.mxu0 0.0
    %629 = vmatprep.subr.mxu0 0.0
    %630 = vmatpush1.msra.mxu0 0.0
    %631 = vmatprep.subr.mxu0 0.0
    %632 = vmatpush1.msra.mxu0 0.0
    %633 = vmatprep.subr.mxu0 0.0
    %634 = vmatpush1.msra.mxu0 0.0
    %635 = vmatprep.subr.mxu0 0.0
    %636 = vmatpush1.msra.mxu0 0.0
    %637 = vmatprep.mubr.f32.mxu0 0.0
    %638 = vmatmul.mubr.f32.gmra.mrb[0].mxu0 %v557
    %v639 = vpop.f32.mrb[0].mxu0
    %v640 = vadd.f32 0.0, %v639
    %v641 = vpop.f32.mrb[0].mxu0
    %v642 = vadd.f32 0.0, %v641
    %643 = vmatprep.mubr.f32.mxu0 0.0
    %644 = vmatmul.mubr.f32.gmra.mrb[0].mxu0 %v559
    %v645 = vpop.f32.mrb[0].mxu0
    %v646 = vadd.f32 0.0, %v645
    %v647 = vpop.f32.mrb[0].mxu0
    %v648 = vadd.f32 0.0, %v647
    %649 = vmatprep.mubr.f32.mxu0 0.0
    %650 = vmatmul.mubr.f32.gmra.mrb[0].mxu0 %v561
    %v651 = vpop.f32.mrb[0].mxu0
    %v652 = vadd.f32 0.0, %v651
    %v653 = vpop.f32.mrb[0].mxu0
    %v654 = vadd.f32 0.0, %v653
    %655 = vmatprep.mubr.f32.mxu0 0.0
    %656 = vmatmul.mubr.f32.gmra.mrb[0].mxu0 %v563
    %v657 = vpop.f32.mrb[0].mxu0
    %v658 = vadd.f32 0.0, %v657
    %v659 = vpop.f32.mrb[0].mxu0
    %v660 = vadd.f32 0.0, %v659
    %661 = vmatprep.mubr.f32.mxu0 0.0
    %662 = vmatmul.mubr.f32.gmra.mrb[0].mxu0 %v565
    %v663 = vpop.f32.mrb[0].mxu0
    %v664 = vadd.f32 0.0, %v663
    %v665 = vpop.f32.mrb[0].mxu0
    %v666 = vadd.f32 0.0, %v665
    %667 = vmatprep.mubr.f32.mxu0 0.0
    %668 = vmatmul.mubr.f32.gmra.mrb[0].mxu0 %v567
    %v669 = vpop.f32.mrb[0].mxu0
    %v670 = vadd.f32 0.0, %v669
    %v671 = vpop.f32.mrb[0].mxu0
    %v672 = vadd.f32 0.0, %v671
    %673 = vmatprep.mubr.f32.mxu0 0.0
    %674 = vmatmul.mubr.f32.gmra.mrb[0].mxu0 %v569
    %v675 = vpop.f32.mrb[0].mxu0
    %v676 = vadd.f32 0.0, %v675
    %v677 = vpop.f32.mrb[0].mxu0
    %v678 = vadd.f32 0.0, %v677
    %679 = vmatprep.mubr.f32.mxu0 0.0
    %680 = vmatmul.mubr.f32.gmra.mrb[0].mxu0 %v571
    %v681 = vpop.f32.mrb[0].mxu0
    %v682 = vadd.f32 0.0, %v681
    %v683 = vpop.f32.mrb[0].mxu0
    %v684 = vadd.f32 0.0, %v683
    %685 = vdwg.mxu0
    %v686 = vadd.f32 %v516, %v640
    %v687 = vadd.f32 %v517, %v642
    %v688 = vadd.f32 %v518, %v646
    %v689 = vadd.f32 %v519, %v648
    %v690 = vadd.f32 %v520, %v652
    %v691 = vadd.f32 %v521, %v654
    %v692 = vadd.f32 %v522, %v658
    %v693 = vadd.f32 %v523, %v660
    %v694 = vadd.f32 %v524, %v664
    %v695 = vadd.f32 %v525, %v666
    %v696 = vadd.f32 %v526, %v670
    %v697 = vadd.f32 %v527, %v672
    %v698 = vadd.f32 %v528, %v676
    %v699 = vadd.f32 %v529, %v678
    %v700 = vadd.f32 %v530, %v682
    %v701 = vadd.f32 %v531, %v684
    %s702 = scalar_lea.vmem %s1, 256
    %v703 = vld [vmem:[%s702] sm:$0xff]
    %v704 = vld [vmem:[%s702 + $0x8] sm:$0xff]
    %v705 = vld [vmem:[%s702 + $0x10] sm:$0xff]
    %v706 = vld [vmem:[%s702 + $0x18] sm:$0xff]
    %v707 = vld [vmem:[%s702 + $0x20] sm:$0xff]
    %v708 = vld [vmem:[%s702 + $0x28] sm:$0xff]
    %v709 = vld [vmem:[%s702 + $0x30] sm:$0xff]
    %v710 = vld [vmem:[%s702 + $0x38] sm:$0xff]
    %vm711 = vcmask 1043456
    %v712 = vrot.slane %v54, 4
    %v713 = vrot.slane %v55, 4
    %v714 = vsel %vm711, %v712, %v713
    %v715 = vrot.slane %v56, 4
    %v716 = vsel %vm711, %v713, %v715
    %v717 = vrot.slane %v57, 4
    %v718 = vsel %vm711, %v715, %v717
    %v719 = vrot.slane %v58, 4
    %v720 = vsel %vm711, %v717, %v719
    %v721 = vrot.slane %v59, 4
    %v722 = vsel %vm711, %v719, %v721
    %v723 = vrot.slane %v60, 4
    %v724 = vsel %vm711, %v721, %v723
    %v725 = vrot.slane %v61, 4
    %v726 = vsel %vm711, %v723, %v725
    %v727 = vsel %vm103, %v714, 0
    %v729 = vsel %vm103, %v716, 0
    %v731 = vsel %vm103, %v718, 0
    %v733 = vsel %vm103, %v720, 0
    %v735 = vsel %vm103, %v722, 0
    %v737 = vsel %vm103, %v724, 0
    %v739 = vsel %vm103, %v726, 0
    %v741 = vsel %vm103, %v725, 0
    %743 = vmatprep.subr.mxu0 %v704
    %744 = vmatpush1.msra.mxu0 %v703
    %745 = vmatprep.subr.mxu0 %v706
    %746 = vmatpush1.msra.mxu0 %v705
    %747 = vmatprep.subr.mxu0 %v708
    %748 = vmatpush1.msra.mxu0 %v707
    %749 = vmatprep.subr.mxu0 %v710
    %750 = vmatpush1.msra.mxu0 %v709
    %751 = vmatprep.subr.mxu0 0.0
    %752 = vmatpush1.msra.mxu0 0.0
    %753 = vmatprep.subr.mxu0 0.0
    %754 = vmatpush1.msra.mxu0 0.0
    %755 = vmatprep.subr.mxu0 0.0
    %756 = vmatpush1.msra.mxu0 0.0
    %757 = vmatprep.subr.mxu0 0.0
    %758 = vmatpush1.msra.mxu0 0.0
    %759 = vmatprep.subr.mxu0 0.0
    %760 = vmatpush1.msra.mxu0 0.0
    %761 = vmatprep.subr.mxu0 0.0
    %762 = vmatpush1.msra.mxu0 0.0
    %763 = vmatprep.subr.mxu0 0.0
    %764 = vmatpush1.msra.mxu0 0.0
    %765 = vmatprep.subr.mxu0 0.0
    %766 = vmatpush1.msra.mxu0 0.0
    %767 = vmatprep.subr.mxu0 0.0
    %768 = vmatpush1.msra.mxu0 0.0
    %769 = vmatprep.subr.mxu0 0.0
    %770 = vmatpush1.msra.mxu0 0.0
    %771 = vmatprep.subr.mxu0 0.0
    %772 = vmatpush1.msra.mxu0 0.0
    %773 = vmatprep.subr.mxu0 0.0
    %774 = vmatpush1.msra.mxu0 0.0
    %775 = vmatprep.subr.mxu0 0.0
    %776 = vmatpush1.msra.mxu0 0.0
    %777 = vmatprep.subr.mxu0 0.0
    %778 = vmatpush1.msra.mxu0 0.0
    %779 = vmatprep.subr.mxu0 0.0
    %780 = vmatpush1.msra.mxu0 0.0
    %781 = vmatprep.subr.mxu0 0.0
    %782 = vmatpush1.msra.mxu0 0.0
    %783 = vmatprep.subr.mxu0 0.0
    %784 = vmatpush1.msra.mxu0 0.0
    %785 = vmatprep.subr.mxu0 0.0
    %786 = vmatpush1.msra.mxu0 0.0
    %787 = vmatprep.subr.mxu0 0.0
    %788 = vmatpush1.msra.mxu0 0.0
    %789 = vmatprep.subr.mxu0 0.0
    %790 = vmatpush1.msra.mxu0 0.0
    %791 = vmatprep.subr.mxu0 0.0
    %792 = vmatpush1.msra.mxu0 0.0
    %793 = vmatprep.subr.mxu0 0.0
    %794 = vmatpush1.msra.mxu0 0.0
    %795 = vmatprep.subr.mxu0 0.0
    %796 = vmatpush1.msra.mxu0 0.0
    %797 = vmatprep.subr.mxu0 0.0
    %798 = vmatpush1.msra.mxu0 0.0
    %799 = vmatprep.subr.mxu0 0.0
    %800 = vmatpush1.msra.mxu0 0.0
    %801 = vmatprep.subr.mxu0 0.0
    %802 = vmatpush1.msra.mxu0 0.0
    %803 = vmatprep.subr.mxu0 0.0
    %804 = vmatpush1.msra.mxu0 0.0
    %805 = vmatprep.subr.mxu0 0.0
    %806 = vmatpush1.msra.mxu0 0.0
    %807 = vmatprep.mubr.f32.mxu0 0.0
    %808 = vmatmul.mubr.f32.gmra.mrb[0].mxu0 %v727
    %v809 = vpop.f32.mrb[0].mxu0
    %v810 = vadd.f32 0.0, %v809
    %v811 = vpop.f32.mrb[0].mxu0
    %v812 = vadd.f32 0.0, %v811
    %813 = vmatprep.mubr.f32.mxu0 0.0
    %814 = vmatmul.mubr.f32.gmra.mrb[0].mxu0 %v729
    %v815 = vpop.f32.mrb[0].mxu0
    %v816 = vadd.f32 0.0, %v815
    %v817 = vpop.f32.mrb[0].mxu0
    %v818 = vadd.f32 0.0, %v817
    %819 = vmatprep.mubr.f32.mxu0 0.0
    %820 = vmatmul.mubr.f32.gmra.mrb[0].mxu0 %v731
    %v821 = vpop.f32.mrb[0].mxu0
    %v822 = vadd.f32 0.0, %v821
    %v823 = vpop.f32.mrb[0].mxu0
    %v824 = vadd.f32 0.0, %v823
    %825 = vmatprep.mubr.f32.mxu0 0.0
    %826 = vmatmul.mubr.f32.gmra.mrb[0].mxu0 %v733
    %v827 = vpop.f32.mrb[0].mxu0
    %v828 = vadd.f32 0.0, %v827
    %v829 = vpop.f32.mrb[0].mxu0
    %v830 = vadd.f32 0.0, %v829
    %831 = vmatprep.mubr.f32.mxu0 0.0
    %832 = vmatmul.mubr.f32.gmra.mrb[0].mxu0 %v735
    %v833 = vpop.f32.mrb[0].mxu0
    %v834 = vadd.f32 0.0, %v833
    %v835 = vpop.f32.mrb[0].mxu0
    %v836 = vadd.f32 0.0, %v835
    %837 = vmatprep.mubr.f32.mxu0 0.0
    %838 = vmatmul.mubr.f32.gmra.mrb[0].mxu0 %v737
    %v839 = vpop.f32.mrb[0].mxu0
    %v840 = vadd.f32 0.0, %v839
    %v841 = vpop.f32.mrb[0].mxu0
    %v842 = vadd.f32 0.0, %v841
    %843 = vmatprep.mubr.f32.mxu0 0.0
    %844 = vmatmul.mubr.f32.gmra.mrb[0].mxu0 %v739
    %v845 = vpop.f32.mrb[0].mxu0
    %v846 = vadd.f32 0.0, %v845
    %v847 = vpop.f32.mrb[0].mxu0
    %v848 = vadd.f32 0.0, %v847
    %849 = vmatprep.mubr.f32.mxu0 0.0
    %850 = vmatmul.mubr.f32.gmra.mrb[0].mxu0 %v741
    %v851 = vpop.f32.mrb[0].mxu0
    %v852 = vadd.f32 0.0, %v851
    %v853 = vpop.f32.mrb[0].mxu0
    %v854 = vadd.f32 0.0, %v853
    %855 = vdwg.mxu0
    %v856 = vadd.f32 %v686, %v810
    %v857 = vadd.f32 %v687, %v812
    %v858 = vadd.f32 %v688, %v816
    %v859 = vadd.f32 %v689, %v818
    %v860 = vadd.f32 %v690, %v822
    %v861 = vadd.f32 %v691, %v824
    %v862 = vadd.f32 %v692, %v828
    %v863 = vadd.f32 %v693, %v830
    %v864 = vadd.f32 %v694, %v834
    %v865 = vadd.f32 %v695, %v836
    %v866 = vadd.f32 %v696, %v840
    %v867 = vadd.f32 %v697, %v842
    %v868 = vadd.f32 %v698, %v846
    %v869 = vadd.f32 %v699, %v848
    %v870 = vadd.f32 %v700, %v852
    %v871 = vadd.f32 %v701, %v854
    %v872 = vld [vmem:[%s2] sm:$0x3]
    %v874 = vlaneseq
    %v875 = vshrl.u32 %v874, 7
    %v876 = vsub.s32 0, %v875
    %v877 = vrot.slane %v872, %v876
    %v878 = vlaneseq
    %v879 = vshrl.u32 %v878, 7
    %v880 = vsub.s32 1, %v879
    %v881 = vrot.slane %v872, %v880
    %v884 = vadd.f32 %v856, %v877
    %v885 = vadd.f32 %v857, %v881
    %v886 = vadd.f32 %v858, %v877
    %v887 = vadd.f32 %v859, %v881
    %v888 = vadd.f32 %v860, %v877
    %v889 = vadd.f32 %v861, %v881
    %v890 = vadd.f32 %v862, %v877
    %v891 = vadd.f32 %v863, %v881
    %v892 = vadd.f32 %v864, %v877
    %v893 = vadd.f32 %v865, %v881
    %v894 = vadd.f32 %v866, %v877
    %v895 = vadd.f32 %v867, %v881
    %v896 = vadd.f32 %v868, %v877
    %v897 = vadd.f32 %v869, %v881
    %v898 = vadd.f32 %v870, %v877
    %v899 = vadd.f32 %v871, %v881
    %v900 = vmax.f32 %v884, 0.0
    %v901 = vmax.f32 %v885, 0.0
    %v902 = vmax.f32 %v886, 0.0
    %v903 = vmax.f32 %v887, 0.0
    %v904 = vmax.f32 %v888, 0.0
    %v905 = vmax.f32 %v889, 0.0
    %v906 = vmax.f32 %v890, 0.0
    %v907 = vmax.f32 %v891, 0.0
    %v908 = vmax.f32 %v892, 0.0
    %v909 = vmax.f32 %v893, 0.0
    %v910 = vmax.f32 %v894, 0.0
    %v911 = vmax.f32 %v895, 0.0
    %v912 = vmax.f32 %v896, 0.0
    %v913 = vmax.f32 %v897, 0.0
    %v914 = vmax.f32 %v898, 0.0
    %v915 = vmax.f32 %v899, 0.0
    %v932 = vrot.slane %v900, 1
    %v933 = vrot.slane %v902, 1
    %v934 = vsel %vm87, %v932, %v933
    %v935 = vrot.slane %v901, 1
    %v936 = vrot.slane %v903, 1
    %v937 = vsel %vm87, %v935, %v936
    %v938 = vrot.slane %v904, 1
    %v939 = vsel %vm87, %v933, %v938
    %v940 = vrot.slane %v905, 1
    %v941 = vsel %vm87, %v936, %v940
    %v942 = vrot.slane %v906, 1
    %v943 = vsel %vm87, %v938, %v942
    %v944 = vrot.slane %v907, 1
    %v945 = vsel %vm87, %v940, %v944
    %v946 = vrot.slane %v908, 1
    %v947 = vsel %vm87, %v942, %v946
    %v948 = vrot.slane %v909, 1
    %v949 = vsel %vm87, %v944, %v948
    %v950 = vrot.slane %v910, 1
    %v951 = vsel %vm87, %v946, %v950
    %v952 = vrot.slane %v911, 1
    %v953 = vsel %vm87, %v948, %v952
    %v954 = vrot.slane %v912, 1
    %v955 = vsel %vm87, %v950, %v954
    %v956 = vrot.slane %v913, 1
    %v957 = vsel %vm87, %v952, %v956
    %v958 = vrot.slane %v914, 1
    %v959 = vsel %vm87, %v954, %v958
    %v960 = vrot.slane %v915, 1
    %v961 = vsel %vm87, %v956, %v960
    %v978 = vmax.f32 %v900, %v934
    %v979 = vmax.f32 %v901, %v937
    %v980 = vmax.f32 %v902, %v939
    %v981 = vmax.f32 %v903, %v941
    %v982 = vmax.f32 %v904, %v943
    %v983 = vmax.f32 %v905, %v945
    %v984 = vmax.f32 %v906, %v947
    %v985 = vmax.f32 %v907, %v949
    %v986 = vmax.f32 %v908, %v951
    %v987 = vmax.f32 %v909, %v953
    %v988 = vmax.f32 %v910, %v955
    %v989 = vmax.f32 %v911, %v957
    %v990 = vmax.f32 %v912, %v959
    %v991 = vmax.f32 %v913, %v961
    %v992 = vmax.f32 %v914, %v958
    %v993 = vmax.f32 %v915, %v960
    %1010 = vrot.lane.b32.xlu0 %v978, 122
    %v1011 = vpop.permute.xlu0 %1010
    %1012 = vrot.lane.b32.xlu0 %v979, 122
    %v1013 = vpop.permute.xlu0 %1012
    %1014 = vrot.lane.b32.xlu0 %v980, 122
    %v1015 = vpop.permute.xlu0 %1014
    %1016 = vrot.lane.b32.xlu0 %v981, 122
    %v1017 = vpop.permute.xlu0 %1016
    %1018 = vrot.lane.b32.xlu0 %v982, 122
    %v1019 = vpop.permute.xlu0 %1018
    %1020 = vrot.lane.b32.xlu0 %v983, 122
    %v1021 = vpop.permute.xlu0 %1020
    %1022 = vrot.lane.b32.xlu0 %v984, 122
    %v1023 = vpop.permute.xlu0 %1022
    %1024 = vrot.lane.b32.xlu0 %v985, 122
    %v1025 = vpop.permute.xlu0 %1024
    %1026 = vrot.lane.b32.xlu0 %v986, 122
    %v1027 = vpop.permute.xlu0 %1026
    %1028 = vrot.lane.b32.xlu0 %v987, 122
    %v1029 = vpop.permute.xlu0 %1028
    %1030 = vrot.lane.b32.xlu0 %v988, 122
    %v1031 = vpop.permute.xlu0 %1030
    %1032 = vrot.lane.b32.xlu0 %v989, 122
    %v1033 = vpop.permute.xlu0 %1032
    %1034 = vrot.lane.b32.xlu0 %v990, 122
    %v1035 = vpop.permute.xlu0 %1034
    %1036 = vrot.lane.b32.xlu0 %v991, 122
    %v1037 = vpop.permute.xlu0 %1036
    %1038 = vrot.lane.b32.xlu0 %v992, 122
    %v1039 = vpop.permute.xlu0 %1038
    %1040 = vrot.lane.b32.xlu0 %v993, 122
    %v1041 = vpop.permute.xlu0 %1040
    %vm1042 = vcmask 998400
    %v1043 = vsel %vm1042, %v1011, %v1013
    %v1044 = vsel %vm1042, %v1015, %v1017
    %v1045 = vsel %vm1042, %v1019, %v1021
    %v1046 = vsel %vm1042, %v1023, %v1025
    %v1047 = vsel %vm1042, %v1027, %v1029
    %v1048 = vsel %vm1042, %v1031, %v1033
    %v1049 = vsel %vm1042, %v1035, %v1037
    %v1050 = vsel %vm1042, %v1039, %v1041
    %v1067 = vmax.f32 %v978, %v1043
    %v1068 = vmax.f32 %v979, %v1013
    %v1069 = vmax.f32 %v980, %v1044
    %v1070 = vmax.f32 %v981, %v1017
    %v1071 = vmax.f32 %v982, %v1045
    %v1072 = vmax.f32 %v983, %v1021
    %v1073 = vmax.f32 %v984, %v1046
    %v1074 = vmax.f32 %v985, %v1025
    %v1075 = vmax.f32 %v986, %v1047
    %v1076 = vmax.f32 %v987, %v1029
    %v1077 = vmax.f32 %v988, %v1048
    %v1078 = vmax.f32 %v989, %v1033
    %v1079 = vmax.f32 %v990, %v1049
    %v1080 = vmax.f32 %v991, %v1037
    %v1081 = vmax.f32 %v992, %v1050
    %v1082 = vmax.f32 %v993, %v1041
    %v1083 = vld [vmem:[%s3] sm:$0xff]
    %v1084 = vld [vmem:[%s3 + $0x8] sm:$0xff]
    %v1085 = vld [vmem:[%s3 + $0x10] sm:$0xff]
    %v1086 = vld [vmem:[%s3 + $0x18] sm:$0xf]
    %vm1087 = vcmask 482304
    %v1089 = vsel %vm1087, %v1083, 0
    %v1092 = vsel %vm1087, %v1084, 0
    %v1095 = vsel %vm1087, %v1085, 0
    %v1098 = vsel %vm1087, %v1086, 0
    %vm1100 = vcmask 1042432
    %v1102 = vsel %vm1100, %v1081, 0
    %v1105 = vsel %vm1100, %v1082, 0
    %1107 = vmatprep.subr.mxu0 %v1068
    %1108 = vmatpush1.msra.mxu0 %v1067
    %1109 = vmatprep.subr.mxu0 %v1070
    %1110 = vmatpush1.msra.mxu0 %v1069
    %1111 = vmatprep.subr.mxu0 %v1072
    %1112 = vmatpush1.msra.mxu0 %v1071
    %1113 = vmatprep.subr.mxu0 %v1074
    %1114 = vmatpush1.msra.mxu0 %v1073
    %1115 = vmatprep.subr.mxu0 %v1076
    %1116 = vmatpush1.msra.mxu0 %v1075
    %1117 = vmatprep.subr.mxu0 %v1078
    %1118 = vmatpush1.msra.mxu0 %v1077
    %1119 = vmatprep.subr.mxu0 %v1080
    %1120 = vmatpush1.msra.mxu0 %v1079
    %1121 = vmatprep.subr.mxu0 %v1105
    %1122 = vmatpush1.msra.mxu0 %v1102
    %1123 = vmatprep.subr.mxu0 0.0
    %1124 = vmatpush1.msra.mxu0 0.0
    %1125 = vmatprep.subr.mxu0 0.0
    %1126 = vmatpush1.msra.mxu0 0.0
    %1127 = vmatprep.subr.mxu0 0.0
    %1128 = vmatpush1.msra.mxu0 0.0
    %1129 = vmatprep.subr.mxu0 0.0
    %1130 = vmatpush1.msra.mxu0 0.0
    %1131 = vmatprep.subr.mxu0 0.0
    %1132 = vmatpush1.msra.mxu0 0.0
    %1133 = vmatprep.subr.mxu0 0.0
    %1134 = vmatpush1.msra.mxu0 0.0
    %1135 = vmatprep.subr.mxu0 0.0
    %1136 = vmatpush1.msra.mxu0 0.0
    %1137 = vmatprep.subr.mxu0 0.0
    %1138 = vmatpush1.msra.mxu0 0.0
    %1139 = vmatprep.subr.mxu0 0.0
    %1140 = vmatpush1.msra.mxu0 0.0
    %1141 = vmatprep.subr.mxu0 0.0
    %1142 = vmatpush1.msra.mxu0 0.0
    %1143 = vmatprep.subr.mxu0 0.0
    %1144 = vmatpush1.msra.mxu0 0.0
    %1145 = vmatprep.subr.mxu0 0.0
    %1146 = vmatpush1.msra.mxu0 0.0
    %1147 = vmatprep.subr.mxu0 0.0
    %1148 = vmatpush1.msra.mxu0 0.0
    %1149 = vmatprep.subr.mxu0 0.0
    %1150 = vmatpush1.msra.mxu0 0.0
    %1151 = vmatprep.subr.mxu0 0.0
    %1152 = vmatpush1.msra.mxu0 0.0
    %1153 = vmatprep.subr.mxu0 0.0
    %1154 = vmatpush1.msra.mxu0 0.0
    %1155 = vmatprep.subr.mxu0 0.0
    %1156 = vmatpush1.msra.mxu0 0.0
    %1157 = vmatprep.subr.mxu0 0.0
    %1158 = vmatpush1.msra.mxu0 0.0
    %1159 = vmatprep.subr.mxu0 0.0
    %1160 = vmatpush1.msra.mxu0 0.0
    %1161 = vmatprep.subr.mxu0 0.0
    %1162 = vmatpush1.msra.mxu0 0.0
    %1163 = vmatprep.subr.mxu0 0.0
    %1164 = vmatpush1.msra.mxu0 0.0
    %1165 = vmatprep.subr.mxu0 0.0
    %1166 = vmatpush1.msra.mxu0 0.0
    %1167 = vmatprep.subr.mxu0 0.0
    %1168 = vmatpush1.msra.mxu0 0.0
    %1169 = vmatprep.subr.mxu0 0.0
    %1170 = vmatpush1.msra.mxu0 0.0
    %1171 = vmatprep.mubr.f32.mxu0 0.0
    %1172 = vmatmul.mubr.f32.gmra.mrb[0].mxu0 %v1089
    %v1173 = vpop.f32.mrb[0].mxu0
    %v1174 = vadd.f32 0.0, %v1173
    %v1175 = vpop.f32.mrb[0].mxu0
    %v1176 = vadd.f32 0.0, %v1175
    %1177 = vmatprep.mubr.f32.mxu0 0.0
    %1178 = vmatmul.mubr.f32.gmra.mrb[0].mxu0 %v1092
    %v1179 = vpop.f32.mrb[0].mxu0
    %v1180 = vadd.f32 0.0, %v1179
    %v1181 = vpop.f32.mrb[0].mxu0
    %v1182 = vadd.f32 0.0, %v1181
    %1183 = vmatprep.mubr.f32.mxu0 0.0
    %1184 = vmatmul.mubr.f32.gmra.mrb[0].mxu0 %v1095
    %v1185 = vpop.f32.mrb[0].mxu0
    %v1186 = vadd.f32 0.0, %v1185
    %v1187 = vpop.f32.mrb[0].mxu0
    %v1188 = vadd.f32 0.0, %v1187
    %1189 = vmatprep.mubr.f32.mxu0 0.0
    %1190 = vmatmul.mubr.f32.gmra.mrb[0].mxu0 %v1098
    %v1191 = vpop.f32.mrb[0].mxu0
    %v1192 = vadd.f32 0.0, %v1191
    %v1193 = vpop.f32.mrb[0].mxu0
    %v1194 = vadd.f32 0.0, %v1193
    %1195 = vdwg.mxu0
    %v1196 = vld [vmem:[%s4] sm:$0xff]
    %v1197 = vld [vmem:[%s4 + $0x8] sm:$0xff]
    %v1198 = vld [vmem:[%s4 + $0x10] sm:$0xff]
    %v1199 = vld [vmem:[%s4 + $0x18] sm:$0xff]
    %v1200 = vld [vmem:[%s4 + $0x20] sm:$0xff]
    %v1201 = vld [vmem:[%s4 + $0x28] sm:$0xff]
    %v1202 = vld [vmem:[%s4 + $0x30] sm:$0xff]
    %v1203 = vld [vmem:[%s4 + $0x38] sm:$0xff]
    %v1204 = vld [vmem:[%s4 + $0x40] sm:$0xff]
    %v1205 = vld [vmem:[%s4 + $0x48] sm:$0xff]
    %v1206 = vld [vmem:[%s4 + $0x50] sm:$0xff]
    %v1207 = vld [vmem:[%s4 + $0x58] sm:$0xff]
    %v1208 = vld [vmem:[%s4 + $0x60] sm:$0xff]
    %v1209 = vld [vmem:[%s4 + $0x68] sm:$0xff]
    %v1210 = vld [vmem:[%s4 + $0x70] sm:$0xff]
    %v1211 = vld [vmem:[%s4 + $0x78] sm:$0xff]
    %v1212 = vld [vmem:[%s4 + $0x80] sm:$0xff]
    %v1213 = vld [vmem:[%s4 + $0x88] sm:$0xff]
    %v1214 = vld [vmem:[%s4 + $0x90] sm:$0xff]
    %v1215 = vld [vmem:[%s4 + $0x98] sm:$0xff]
    %v1216 = vld [vmem:[%s4 + $0xa0] sm:$0x3]
    %vm1217 = vcmask 277504
    %v1219 = vsel %vm1217, %v1176, 0
    %v1222 = vsel %vm1217, %v1182, 0
    %v1225 = vsel %vm1217, %v1188, 0
    %v1228 = vsel %vm1217, %v1194, 0
    %vm1230 = vcmask 1041408
    %v1232 = vsel %vm1230, %v1216, 0
    %1234 = vmatprep.subr.mxu0 0.0
    %1235 = vmatpush1.msra.mxu0 %v1196
    %1236 = vmatprep.subr.mxu0 0.0
    %1237 = vmatpush1.msra.mxu0 %v1197
    %1238 = vmatprep.subr.mxu0 0.0
    %1239 = vmatpush1.msra.mxu0 %v1198
    %1240 = vmatprep.subr.mxu0 0.0
    %1241 = vmatpush1.msra.mxu0 %v1199
    %1242 = vmatprep.subr.mxu0 0.0
    %1243 = vmatpush1.msra.mxu0 %v1200
    %1244 = vmatprep.subr.mxu0 0.0
    %1245 = vmatpush1.msra.mxu0 %v1201
    %1246 = vmatprep.subr.mxu0 0.0
    %1247 = vmatpush1.msra.mxu0 %v1202
    %1248 = vmatprep.subr.mxu0 0.0
    %1249 = vmatpush1.msra.mxu0 %v1203
    %1250 = vmatprep.subr.mxu0 0.0
    %1251 = vmatpush1.msra.mxu0 %v1204
    %1252 = vmatprep.subr.mxu0 0.0
    %1253 = vmatpush1.msra.mxu0 %v1205
    %1254 = vmatprep.subr.mxu0 0.0
    %1255 = vmatpush1.msra.mxu0 %v1206
    %1256 = vmatprep.subr.mxu0 0.0
    %1257 = vmatpush1.msra.mxu0 %v1207
    %1258 = vmatprep.subr.mxu0 0.0
    %1259 = vmatpush1.msra.mxu0 %v1208
    %1260 = vmatprep.subr.mxu0 0.0
    %1261 = vmatpush1.msra.mxu0 %v1209
    %1262 = vmatprep.subr.mxu0 0.0
    %1263 = vmatpush1.msra.mxu0 %v1210
    %1264 = vmatprep.subr.mxu0 0.0
    %1265 = vmatpush1.msra.mxu0 %v1211
    %1266 = vmatprep.subr.mxu0 0.0
    %1267 = vmatpush1.msra.mxu0 %v1212
    %1268 = vmatprep.subr.mxu0 0.0
    %1269 = vmatpush1.msra.mxu0 %v1213
    %1270 = vmatprep.subr.mxu0 0.0
    %1271 = vmatpush1.msra.mxu0 %v1214
    %1272 = vmatprep.subr.mxu0 0.0
    %1273 = vmatpush1.msra.mxu0 %v1215
    %1274 = vmatprep.subr.mxu0 0.0
    %1275 = vmatpush1.msra.mxu0 %v1232
    %1276 = vmatprep.subr.mxu0 0.0
    %1277 = vmatpush1.msra.mxu0 0.0
    %1278 = vmatprep.subr.mxu0 0.0
    %1279 = vmatpush1.msra.mxu0 0.0
    %1280 = vmatprep.subr.mxu0 0.0
    %1281 = vmatpush1.msra.mxu0 0.0
    %1282 = vmatprep.subr.mxu0 0.0
    %1283 = vmatpush1.msra.mxu0 0.0
    %1284 = vmatprep.subr.mxu0 0.0
    %1285 = vmatpush1.msra.mxu0 0.0
    %1286 = vmatprep.subr.mxu0 0.0
    %1287 = vmatpush1.msra.mxu0 0.0
    %1288 = vmatprep.subr.mxu0 0.0
    %1289 = vmatpush1.msra.mxu0 0.0
    %1290 = vmatprep.subr.mxu0 0.0
    %1291 = vmatpush1.msra.mxu0 0.0
    %1292 = vmatprep.subr.mxu0 0.0
    %1293 = vmatpush1.msra.mxu0 0.0
    %1294 = vmatprep.subr.mxu0 0.0
    %1295 = vmatpush1.msra.mxu0 0.0
    %1296 = vmatprep.subr.mxu0 0.0
    %1297 = vmatpush1.msra.mxu0 0.0
    %1298 = vmatprep.mubr.f32.mxu0 %v1219
    %1299 = vmatmul.mubr.f32.gmra.mrb[0].mxu0 %v1174
    %v1300 = vpop.f32.mrb[0].mxu0
    %v1301 = vadd.f32 0.0, %v1300
    %v1302 = vpop.f32.mrb[0].mxu0
    %1303 = vmatprep.mubr.f32.mxu0 %v1222
    %1304 = vmatmul.mubr.f32.gmra.mrb[0].mxu0 %v1180
    %v1305 = vpop.f32.mrb[0].mxu0
    %v1306 = vadd.f32 0.0, %v1305
    %v1307 = vpop.f32.mrb[0].mxu0
    %1308 = vmatprep.mubr.f32.mxu0 %v1225
    %1309 = vmatmul.mubr.f32.gmra.mrb[0].mxu0 %v1186
    %v1310 = vpop.f32.mrb[0].mxu0
    %v1311 = vadd.f32 0.0, %v1310
    %v1312 = vpop.f32.mrb[0].mxu0
    %1313 = vmatprep.mubr.f32.mxu0 %v1228
    %1314 = vmatmul.mubr.f32.gmra.mrb[0].mxu0 %v1192
    %v1315 = vpop.f32.mrb[0].mxu0
    %v1316 = vadd.f32 0.0, %v1315
    %v1317 = vpop.f32.mrb[0].mxu0
    %1318 = vdwg.mxu0
    %v1319 = vld [vmem:[%s5] sm:$0xff]
    %v1320 = vld [vmem:[%s5 + $0x8] sm:$0xff]
    %v1321 = vld [vmem:[%s5 + $0x10] sm:$0xff]
    %v1322 = vld [vmem:[%s5 + $0x18] sm:$0xff]
    %v1323 = vld [vmem:[%s5 + $0x20] sm:$0xff]
    %v1324 = vld [vmem:[%s5 + $0x28] sm:$0xff]
    %v1325 = vld [vmem:[%s5 + $0x30] sm:$0xff]
    %v1326 = vld [vmem:[%s5 + $0x38] sm:$0xff]
    %v1327 = vld [vmem:[%s5 + $0x40] sm:$0xff]
    %v1328 = vld [vmem:[%s5 + $0x48] sm:$0xff]
    %v1329 = vld [vmem:[%s5 + $0x50] sm:$0xff]
    %v1330 = vld [vmem:[%s5 + $0x58] sm:$0xff]
    %v1331 = vld [vmem:[%s5 + $0x60] sm:$0xff]
    %v1332 = vld [vmem:[%s5 + $0x68] sm:$0xff]
    %v1333 = vld [vmem:[%s5 + $0x70] sm:$0xff]
    %v1334 = vld [vmem:[%s5 + $0x78] sm:$0xff]
    %v1335 = vld [vmem:[%s5 + $0x80] sm:$0xff]
    %v1336 = vld [vmem:[%s5 + $0x88] sm:$0xff]
    %v1337 = vld [vmem:[%s5 + $0x90] sm:$0xff]
    %v1338 = vld [vmem:[%s5 + $0x98] sm:$0xff]
    %v1339 = vld [vmem:[%s5 + $0xa0] sm:$0xff]
    %v1340 = vld [vmem:[%s5 + $0xa8] sm:$0xff]
    %s1341 = scalar_lea.vmem %s5, 176
    %v1342 = vld [vmem:[%s1341] sm:$0xff]
    %v1343 = vld [vmem:[%s1341 + $0x8] sm:$0xff]
    %v1344 = vld [vmem:[%s1341 + $0x10] sm:$0xff]
    %v1345 = vld [vmem:[%s1341 + $0x18] sm:$0xff]
    %v1346 = vld [vmem:[%s1341 + $0x20] sm:$0xff]
    %v1347 = vld [vmem:[%s1341 + $0x28] sm:$0xff]
    %v1348 = vld [vmem:[%s1341 + $0x30] sm:$0xff]
    %v1349 = vld [vmem:[%s1341 + $0x38] sm:$0xff]
    %v1350 = vld [vmem:[%s1341 + $0x40] sm:$0xff]
    %v1351 = vld [vmem:[%s1341 + $0x48] sm:$0xff]
    %v1352 = vld [vmem:[%s1341 + $0x50] sm:$0xff]
    %v1353 = vld [vmem:[%s1341 + $0x58] sm:$0xff]
    %v1354 = vld [vmem:[%s1341 + $0x60] sm:$0xff]
    %v1355 = vld [vmem:[%s1341 + $0x68] sm:$0xff]
    %v1356 = vld [vmem:[%s1341 + $0x70] sm:$0xff]
    %v1357 = vld [vmem:[%s1341 + $0x78] sm:$0xff]
    %v1358 = vld [vmem:[%s1341 + $0x80] sm:$0xff]
    %v1359 = vld [vmem:[%s1341 + $0x88] sm:$0xff]
    %v1360 = vld [vmem:[%s1341 + $0x90] sm:$0xff]
    %v1361 = vld [vmem:[%s1341 + $0x98] sm:$0xff]
    %v1362 = vld [vmem:[%s1341 + $0xa0] sm:$0xff]
    %v1363 = vld [vmem:[%s1341 + $0xa8] sm:$0xff]
    %v1368 = vrot.slane %v1301, 1
    %v1369 = vrot.slane %v1306, 1
    %v1370 = vsel %vm87, %v1368, %v1369
    %v1371 = vrot.slane %v1311, 1
    %v1372 = vsel %vm87, %v1369, %v1371
    %v1373 = vrot.slane %v1316, 1
    %v1374 = vsel %vm87, %v1371, %v1373
    %vm1375 = vcmask 719872
    %v1376 = vsel %vm1375, %v1370, 0
    %v1378 = vsel %vm1375, %v1372, 0
    %v1380 = vsel %vm1375, %v1374, 0
    %1382 = vmatprep.subr.mxu0 %v1343
    %1383 = vmatpush1.msra.mxu0 %v1342
    %1384 = vmatprep.subr.mxu0 %v1345
    %1385 = vmatpush1.msra.mxu0 %v1344
    %1386 = vmatprep.subr.mxu0 %v1347
    %1387 = vmatpush1.msra.mxu0 %v1346
    %1388 = vmatprep.subr.mxu0 %v1349
    %1389 = vmatpush1.msra.mxu0 %v1348
    %1390 = vmatprep.subr.mxu0 %v1351
    %1391 = vmatpush1.msra.mxu0 %v1350
    %1392 = vmatprep.subr.mxu0 %v1353
    %1393 = vmatpush1.msra.mxu0 %v1352
    %1394 = vmatprep.subr.mxu0 %v1355
    %1395 = vmatpush1.msra.mxu0 %v1354
    %1396 = vmatprep.subr.mxu0 %v1357
    %1397 = vmatpush1.msra.mxu0 %v1356
    %1398 = vmatprep.subr.mxu0 %v1359
    %1399 = vmatpush1.msra.mxu0 %v1358
    %1400 = vmatprep.subr.mxu0 %v1361
    %1401 = vmatpush1.msra.mxu0 %v1360
    %1402 = vmatprep.subr.mxu0 %v1363
    %1403 = vmatpush1.msra.mxu0 %v1362
    %1404 = vmatprep.subr.mxu0 0.0
    %1405 = vmatpush1.msra.mxu0 0.0
    %1406 = vmatprep.subr.mxu0 0.0
    %1407 = vmatpush1.msra.mxu0 0.0
    %1408 = vmatprep.subr.mxu0 0.0
    %1409 = vmatpush1.msra.mxu0 0.0
    %1410 = vmatprep.subr.mxu0 0.0
    %1411 = vmatpush1.msra.mxu0 0.0
    %1412 = vmatprep.subr.mxu0 0.0
    %1413 = vmatpush1.msra.mxu0 0.0
    %1414 = vmatprep.subr.mxu0 0.0
    %1415 = vmatpush1.msra.mxu0 0.0
    %1416 = vmatprep.subr.mxu0 0.0
    %1417 = vmatpush1.msra.mxu0 0.0
    %1418 = vmatprep.subr.mxu0 0.0
    %1419 = vmatpush1.msra.mxu0 0.0
    %1420 = vmatprep.subr.mxu0 0.0
    %1421 = vmatpush1.msra.mxu0 0.0
    %1422 = vmatprep.subr.mxu0 0.0
    %1423 = vmatpush1.msra.mxu0 0.0
    %1424 = vmatprep.subr.mxu0 0.0
    %1425 = vmatpush1.msra.mxu0 0.0
    %1426 = vmatprep.subr.mxu0 0.0
    %1427 = vmatpush1.msra.mxu0 0.0
    %1428 = vmatprep.subr.mxu0 0.0
    %1429 = vmatpush1.msra.mxu0 0.0
    %1430 = vmatprep.subr.mxu0 0.0
    %1431 = vmatpush1.msra.mxu0 0.0
    %1432 = vmatprep.subr.mxu0 0.0
    %1433 = vmatpush1.msra.mxu0 0.0
    %1434 = vmatprep.subr.mxu0 0.0
    %1435 = vmatpush1.msra.mxu0 0.0
    %1436 = vmatprep.subr.mxu0 0.0
    %1437 = vmatpush1.msra.mxu0 0.0
    %1438 = vmatprep.subr.mxu0 0.0
    %1439 = vmatpush1.msra.mxu0 0.0
    %1440 = vmatprep.subr.mxu0 0.0
    %1441 = vmatpush1.msra.mxu0 0.0
    %1442 = vmatprep.subr.mxu0 0.0
    %1443 = vmatpush1.msra.mxu0 0.0
    %1444 = vmatprep.subr.mxu0 0.0
    %1445 = vmatpush1.msra.mxu0 0.0
    %1446 = vmatprep.mubr.f32.mxu0 0.0
    %1447 = vmatmul.mubr.f32.gmra.mrb[0].mxu0 %v1376
    %v1448 = vpop.f32.mrb[0].mxu0
    %v1449 = vadd.f32 0.0, %v1448
    %v1450 = vpop.f32.mrb[0].mxu0
    %v1451 = vadd.f32 0.0, %v1450
    %1452 = vmatprep.mubr.f32.mxu0 0.0
    %1453 = vmatmul.mubr.f32.gmra.mrb[0].mxu0 %v1378
    %v1454 = vpop.f32.mrb[0].mxu0
    %v1455 = vadd.f32 0.0, %v1454
    %v1456 = vpop.f32.mrb[0].mxu0
    %v1457 = vadd.f32 0.0, %v1456
    %1458 = vmatprep.mubr.f32.mxu0 0.0
    %1459 = vmatmul.mubr.f32.gmra.mrb[0].mxu0 %v1380
    %v1460 = vpop.f32.mrb[0].mxu0
    %v1461 = vadd.f32 0.0, %v1460
    %v1462 = vpop.f32.mrb[0].mxu0
    %v1463 = vadd.f32 0.0, %v1462
    %1464 = vdwg.mxu0
    %v1465 = vsel %vm1375, %v1301, 0
    %v1467 = vsel %vm1375, %v1306, 0
    %v1469 = vsel %vm1375, %v1311, 0
    %1471 = vmatprep.subr.mxu0 %v1320
    %1472 = vmatpush1.msra.mxu0 %v1319
    %1473 = vmatprep.subr.mxu0 %v1322
    %1474 = vmatpush1.msra.mxu0 %v1321
    %1475 = vmatprep.subr.mxu0 %v1324
    %1476 = vmatpush1.msra.mxu0 %v1323
    %1477 = vmatprep.subr.mxu0 %v1326
    %1478 = vmatpush1.msra.mxu0 %v1325
    %1479 = vmatprep.subr.mxu0 %v1328
    %1480 = vmatpush1.msra.mxu0 %v1327
    %1481 = vmatprep.subr.mxu0 %v1330
    %1482 = vmatpush1.msra.mxu0 %v1329
    %1483 = vmatprep.subr.mxu0 %v1332
    %1484 = vmatpush1.msra.mxu0 %v1331
    %1485 = vmatprep.subr.mxu0 %v1334
    %1486 = vmatpush1.msra.mxu0 %v1333
    %1487 = vmatprep.subr.mxu0 %v1336
    %1488 = vmatpush1.msra.mxu0 %v1335
    %1489 = vmatprep.subr.mxu0 %v1338
    %1490 = vmatpush1.msra.mxu0 %v1337
    %1491 = vmatprep.subr.mxu0 %v1340
    %1492 = vmatpush1.msra.mxu0 %v1339
    %1493 = vmatprep.subr.mxu0 0.0
    %1494 = vmatpush1.msra.mxu0 0.0
    %1495 = vmatprep.subr.mxu0 0.0
    %1496 = vmatpush1.msra.mxu0 0.0
    %1497 = vmatprep.subr.mxu0 0.0
    %1498 = vmatpush1.msra.mxu0 0.0
    %1499 = vmatprep.subr.mxu0 0.0
    %1500 = vmatpush1.msra.mxu0 0.0
    %1501 = vmatprep.subr.mxu0 0.0
    %1502 = vmatpush1.msra.mxu0 0.0
    %1503 = vmatprep.subr.mxu0 0.0
    %1504 = vmatpush1.msra.mxu0 0.0
    %1505 = vmatprep.subr.mxu0 0.0
    %1506 = vmatpush1.msra.mxu0 0.0
    %1507 = vmatprep.subr.mxu0 0.0
    %1508 = vmatpush1.msra.mxu0 0.0
    %1509 = vmatprep.subr.mxu0 0.0
    %1510 = vmatpush1.msra.mxu0 0.0
    %1511 = vmatprep.subr.mxu0 0.0
    %1512 = vmatpush1.msra.mxu0 0.0
    %1513 = vmatprep.subr.mxu0 0.0
    %1514 = vmatpush1.msra.mxu0 0.0
    %1515 = vmatprep.subr.mxu0 0.0
    %1516 = vmatpush1.msra.mxu0 0.0
    %1517 = vmatprep.subr.mxu0 0.0
    %1518 = vmatpush1.msra.mxu0 0.0
    %1519 = vmatprep.subr.mxu0 0.0
    %1520 = vmatpush1.msra.mxu0 0.0
    %1521 = vmatprep.subr.mxu0 0.0
    %1522 = vmatpush1.msra.mxu0 0.0
    %1523 = vmatprep.subr.mxu0 0.0
    %1524 = vmatpush1.msra.mxu0 0.0
    %1525 = vmatprep.subr.mxu0 0.0
    %1526 = vmatpush1.msra.mxu0 0.0
    %1527 = vmatprep.subr.mxu0 0.0
    %1528 = vmatpush1.msra.mxu0 0.0
    %1529 = vmatprep.subr.mxu0 0.0
    %1530 = vmatpush1.msra.mxu0 0.0
    %1531 = vmatprep.subr.mxu0 0.0
    %1532 = vmatpush1.msra.mxu0 0.0
    %1533 = vmatprep.subr.mxu0 0.0
    %1534 = vmatpush1.msra.mxu0 0.0
    %1535 = vmatprep.mubr.f32.mxu0 0.0
    %1536 = vmatmul.mubr.f32.gmra.mrb[0].mxu0 %v1465
    %v1537 = vpop.f32.mrb[0].mxu0
    %v1538 = vadd.f32 %v1449, %v1537
    %v1539 = vpop.f32.mrb[0].mxu0
    %v1540 = vadd.f32 %v1451, %v1539
    %1541 = vmatprep.mubr.f32.mxu0 0.0
    %1542 = vmatmul.mubr.f32.gmra.mrb[0].mxu0 %v1467
    %v1543 = vpop.f32.mrb[0].mxu0
    %v1544 = vadd.f32 %v1455, %v1543
    %v1545 = vpop.f32.mrb[0].mxu0
    %v1546 = vadd.f32 %v1457, %v1545
    %1547 = vmatprep.mubr.f32.mxu0 0.0
    %1548 = vmatmul.mubr.f32.gmra.mrb[0].mxu0 %v1469
    %v1549 = vpop.f32.mrb[0].mxu0
    %v1550 = vadd.f32 %v1461, %v1549
    %v1551 = vpop.f32.mrb[0].mxu0
    %v1552 = vadd.f32 %v1463, %v1551
    %1553 = vdwg.mxu0
    %s1554 = scalar_lea.vmem %s5, 352
    %v1555 = vld [vmem:[%s1554] sm:$0xff]
    %v1556 = vld [vmem:[%s1554 + $0x8] sm:$0xff]
    %v1557 = vld [vmem:[%s1554 + $0x10] sm:$0xff]
    %v1558 = vld [vmem:[%s1554 + $0x18] sm:$0xff]
    %v1559 = vld [vmem:[%s1554 + $0x20] sm:$0xff]
    %v1560 = vld [vmem:[%s1554 + $0x28] sm:$0xff]
    %v1561 = vld [vmem:[%s1554 + $0x30] sm:$0xff]
    %v1562 = vld [vmem:[%s1554 + $0x38] sm:$0xff]
    %v1563 = vld [vmem:[%s1554 + $0x40] sm:$0xff]
    %v1564 = vld [vmem:[%s1554 + $0x48] sm:$0xff]
    %v1565 = vld [vmem:[%s1554 + $0x50] sm:$0xff]
    %v1566 = vld [vmem:[%s1554 + $0x58] sm:$0xff]
    %v1567 = vld [vmem:[%s1554 + $0x60] sm:$0xff]
    %v1568 = vld [vmem:[%s1554 + $0x68] sm:$0xff]
    %v1569 = vld [vmem:[%s1554 + $0x70] sm:$0xff]
    %v1570 = vld [vmem:[%s1554 + $0x78] sm:$0xff]
    %v1571 = vld [vmem:[%s1554 + $0x80] sm:$0xff]
    %v1572 = vld [vmem:[%s1554 + $0x88] sm:$0xff]
    %v1573 = vld [vmem:[%s1554 + $0x90] sm:$0xff]
    %v1574 = vld [vmem:[%s1554 + $0x98] sm:$0xff]
    %v1575 = vld [vmem:[%s1554 + $0xa0] sm:$0xff]
    %v1576 = vld [vmem:[%s1554 + $0xa8] sm:$0xff]
    %v1577 = vrot.slane %v1301, 2
    %v1578 = vrot.slane %v1306, 2
    %v1579 = vsel %vm371, %v1577, %v1578
    %v1580 = vrot.slane %v1311, 2
    %v1581 = vsel %vm371, %v1578, %v1580
    %v1582 = vrot.slane %v1316, 2
    %v1583 = vsel %vm371, %v1580, %v1582
    %v1584 = vsel %vm1375, %v1579, 0
    %v1586 = vsel %vm1375, %v1581, 0
    %v1588 = vsel %vm1375, %v1583, 0
    %1590 = vmatprep.subr.mxu0 %v1556
    %1591 = vmatpush1.msra.mxu0 %v1555
    %1592 = vmatprep.subr.mxu0 %v1558
    %1593 = vmatpush1.msra.mxu0 %v1557
    %1594 = vmatprep.subr.mxu0 %v1560
    %1595 = vmatpush1.msra.mxu0 %v1559
    %1596 = vmatprep.subr.mxu0 %v1562
    %1597 = vmatpush1.msra.mxu0 %v1561
    %1598 = vmatprep.subr.mxu0 %v1564
    %1599 = vmatpush1.msra.mxu0 %v1563
    %1600 = vmatprep.subr.mxu0 %v1566
    %1601 = vmatpush1.msra.mxu0 %v1565
    %1602 = vmatprep.subr.mxu0 %v1568
    %1603 = vmatpush1.msra.mxu0 %v1567
    %1604 = vmatprep.subr.mxu0 %v1570
    %1605 = vmatpush1.msra.mxu0 %v1569
    %1606 = vmatprep.subr.mxu0 %v1572
    %1607 = vmatpush1.msra.mxu0 %v1571
    %1608 = vmatprep.subr.mxu0 %v1574
    %1609 = vmatpush1.msra.mxu0 %v1573
    %1610 = vmatprep.subr.mxu0 %v1576
    %1611 = vmatpush1.msra.mxu0 %v1575
    %1612 = vmatprep.subr.mxu0 0.0
    %1613 = vmatpush1.msra.mxu0 0.0
    %1614 = vmatprep.subr.mxu0 0.0
    %1615 = vmatpush1.msra.mxu0 0.0
    %1616 = vmatprep.subr.mxu0 0.0
    %1617 = vmatpush1.msra.mxu0 0.0
    %1618 = vmatprep.subr.mxu0 0.0
    %1619 = vmatpush1.msra.mxu0 0.0
    %1620 = vmatprep.subr.mxu0 0.0
    %1621 = vmatpush1.msra.mxu0 0.0
    %1622 = vmatprep.subr.mxu0 0.0
    %1623 = vmatpush1.msra.mxu0 0.0
    %1624 = vmatprep.subr.mxu0 0.0
    %1625 = vmatpush1.msra.mxu0 0.0
    %1626 = vmatprep.subr.mxu0 0.0
    %1627 = vmatpush1.msra.mxu0 0.0
    %1628 = vmatprep.subr.mxu0 0.0
    %1629 = vmatpush1.msra.mxu0 0.0
    %1630 = vmatprep.subr.mxu0 0.0
    %1631 = vmatpush1.msra.mxu0 0.0
    %1632 = vmatprep.subr.mxu0 0.0
    %1633 = vmatpush1.msra.mxu0 0.0
    %1634 = vmatprep.subr.mxu0 0.0
    %1635 = vmatpush1.msra.mxu0 0.0
    %1636 = vmatprep.subr.mxu0 0.0
    %1637 = vmatpush1.msra.mxu0 0.0
    %1638 = vmatprep.subr.mxu0 0.0
    %1639 = vmatpush1.msra.mxu0 0.0
    %1640 = vmatprep.subr.mxu0 0.0
    %1641 = vmatpush1.msra.mxu0 0.0
    %1642 = vmatprep.subr.mxu0 0.0
    %1643 = vmatpush1.msra.mxu0 0.0
    %1644 = vmatprep.subr.mxu0 0.0
    %1645 = vmatpush1.msra.mxu0 0.0
    %1646 = vmatprep.subr.mxu0 0.0
    %1647 = vmatpush1.msra.mxu0 0.0
    %1648 = vmatprep.subr.mxu0 0.0
    %1649 = vmatpush1.msra.mxu0 0.0
    %1650 = vmatprep.subr.mxu0 0.0
    %1651 = vmatpush1.msra.mxu0 0.0
    %1652 = vmatprep.subr.mxu0 0.0
    %1653 = vmatpush1.msra.mxu0 0.0
    %1654 = vmatprep.mubr.f32.mxu0 0.0
    %1655 = vmatmul.mubr.f32.gmra.mrb[0].mxu0 %v1584
    %v1656 = vpop.f32.mrb[0].mxu0
    %v1657 = vadd.f32 0.0, %v1656
    %v1658 = vpop.f32.mrb[0].mxu0
    %v1659 = vadd.f32 0.0, %v1658
    %1660 = vmatprep.mubr.f32.mxu0 0.0
    %1661 = vmatmul.mubr.f32.gmra.mrb[0].mxu0 %v1586
    %v1662 = vpop.f32.mrb[0].mxu0
    %v1663 = vadd.f32 0.0, %v1662
    %v1664 = vpop.f32.mrb[0].mxu0
    %v1665 = vadd.f32 0.0, %v1664
    %1666 = vmatprep.mubr.f32.mxu0 0.0
    %1667 = vmatmul.mubr.f32.gmra.mrb[0].mxu0 %v1588
    %v1668 = vpop.f32.mrb[0].mxu0
    %v1669 = vadd.f32 0.0, %v1668
    %v1670 = vpop.f32.mrb[0].mxu0
    %v1671 = vadd.f32 0.0, %v1670
    %1672 = vdwg.mxu0
    %v1673 = vadd.f32 %v1538, %v1657
    %v1674 = vadd.f32 %v1540, %v1659
    %v1675 = vadd.f32 %v1544, %v1663
    %v1676 = vadd.f32 %v1546, %v1665
    %v1677 = vadd.f32 %v1550, %v1669
    %v1678 = vadd.f32 %v1552, %v1671
    %s1679 = scalar_lea.vmem %s5, 528
    %v1680 = vld [vmem:[%s1679] sm:$0xff]
    %v1681 = vld [vmem:[%s1679 + $0x8] sm:$0xff]
    %v1682 = vld [vmem:[%s1679 + $0x10] sm:$0xff]
    %v1683 = vld [vmem:[%s1679 + $0x18] sm:$0xff]
    %v1684 = vld [vmem:[%s1679 + $0x20] sm:$0xff]
    %v1685 = vld [vmem:[%s1679 + $0x28] sm:$0xff]
    %v1686 = vld [vmem:[%s1679 + $0x30] sm:$0xff]
    %v1687 = vld [vmem:[%s1679 + $0x38] sm:$0xff]
    %v1688 = vld [vmem:[%s1679 + $0x40] sm:$0xff]
    %v1689 = vld [vmem:[%s1679 + $0x48] sm:$0xff]
    %v1690 = vld [vmem:[%s1679 + $0x50] sm:$0xff]
    %v1691 = vld [vmem:[%s1679 + $0x58] sm:$0xff]
    %v1692 = vld [vmem:[%s1679 + $0x60] sm:$0xff]
    %v1693 = vld [vmem:[%s1679 + $0x68] sm:$0xff]
    %v1694 = vld [vmem:[%s1679 + $0x70] sm:$0xff]
    %v1695 = vld [vmem:[%s1679 + $0x78] sm:$0xff]
    %v1696 = vld [vmem:[%s1679 + $0x80] sm:$0xff]
    %v1697 = vld [vmem:[%s1679 + $0x88] sm:$0xff]
    %v1698 = vld [vmem:[%s1679 + $0x90] sm:$0xff]
    %v1699 = vld [vmem:[%s1679 + $0x98] sm:$0xff]
    %v1700 = vld [vmem:[%s1679 + $0xa0] sm:$0xff]
    %v1701 = vld [vmem:[%s1679 + $0xa8] sm:$0xff]
    %v1702 = vrot.slane %v1301, 3
    %v1703 = vrot.slane %v1306, 3
    %v1704 = vsel %vm541, %v1702, %v1703
    %v1705 = vrot.slane %v1311, 3
    %v1706 = vsel %vm541, %v1703, %v1705
    %v1707 = vrot.slane %v1316, 3
    %v1708 = vsel %vm541, %v1705, %v1707
    %v1709 = vsel %vm1375, %v1704, 0
    %v1711 = vsel %vm1375, %v1706, 0
    %v1713 = vsel %vm1375, %v1708, 0
    %1715 = vmatprep.subr.mxu0 %v1681
    %1716 = vmatpush1.msra.mxu0 %v1680
    %1717 = vmatprep.subr.mxu0 %v1683
    %1718 = vmatpush1.msra.mxu0 %v1682
    %1719 = vmatprep.subr.mxu0 %v1685
    %1720 = vmatpush1.msra.mxu0 %v1684
    %1721 = vmatprep.subr.mxu0 %v1687
    %1722 = vmatpush1.msra.mxu0 %v1686
    %1723 = vmatprep.subr.mxu0 %v1689
    %1724 = vmatpush1.msra.mxu0 %v1688
    %1725 = vmatprep.subr.mxu0 %v1691
    %1726 = vmatpush1.msra.mxu0 %v1690
    %1727 = vmatprep.subr.mxu0 %v1693
    %1728 = vmatpush1.msra.mxu0 %v1692
    %1729 = vmatprep.subr.mxu0 %v1695
    %1730 = vmatpush1.msra.mxu0 %v1694
    %1731 = vmatprep.subr.mxu0 %v1697
    %1732 = vmatpush1.msra.mxu0 %v1696
    %1733 = vmatprep.subr.mxu0 %v1699
    %1734 = vmatpush1.msra.mxu0 %v1698
    %1735 = vmatprep.subr.mxu0 %v1701
    %1736 = vmatpush1.msra.mxu0 %v1700
    %1737 = vmatprep.subr.mxu0 0.0
    %1738 = vmatpush1.msra.mxu0 0.0
    %1739 = vmatprep.subr.mxu0 0.0
    %1740 = vmatpush1.msra.mxu0 0.0
    %1741 = vmatprep.subr.mxu0 0.0
    %1742 = vmatpush1.msra.mxu0 0.0
    %1743 = vmatprep.subr.mxu0 0.0
    %1744 = vmatpush1.msra.mxu0 0.0
    %1745 = vmatprep.subr.mxu0 0.0
    %1746 = vmatpush1.msra.mxu0 0.0
    %1747 = vmatprep.subr.mxu0 0.0
    %1748 = vmatpush1.msra.mxu0 0.0
    %1749 = vmatprep.subr.mxu0 0.0
    %1750 = vmatpush1.msra.mxu0 0.0
    %1751 = vmatprep.subr.mxu0 0.0
    %1752 = vmatpush1.msra.mxu0 0.0
    %1753 = vmatprep.subr.mxu0 0.0
    %1754 = vmatpush1.msra.mxu0 0.0
    %1755 = vmatprep.subr.mxu0 0.0
    %1756 = vmatpush1.msra.mxu0 0.0
    %1757 = vmatprep.subr.mxu0 0.0
    %1758 = vmatpush1.msra.mxu0 0.0
    %1759 = vmatprep.subr.mxu0 0.0
    %1760 = vmatpush1.msra.mxu0 0.0
    %1761 = vmatprep.subr.mxu0 0.0
    %1762 = vmatpush1.msra.mxu0 0.0
    %1763 = vmatprep.subr.mxu0 0.0
    %1764 = vmatpush1.msra.mxu0 0.0
    %1765 = vmatprep.subr.mxu0 0.0
    %1766 = vmatpush1.msra.mxu0 0.0
    %1767 = vmatprep.subr.mxu0 0.0
    %1768 = vmatpush1.msra.mxu0 0.0
    %1769 = vmatprep.subr.mxu0 0.0
    %1770 = vmatpush1.msra.mxu0 0.0
    %1771 = vmatprep.subr.mxu0 0.0
    %1772 = vmatpush1.msra.mxu0 0.0
    %1773 = vmatprep.subr.mxu0 0.0
    %1774 = vmatpush1.msra.mxu0 0.0
    %1775 = vmatprep.subr.mxu0 0.0
    %1776 = vmatpush1.msra.mxu0 0.0
    %1777 = vmatprep.subr.mxu0 0.0
    %1778 = vmatpush1.msra.mxu0 0.0
    %1779 = vmatprep.mubr.f32.mxu0 0.0
    %1780 = vmatmul.mubr.f32.gmra.mrb[0].mxu0 %v1709
    %v1781 = vpop.f32.mrb[0].mxu0
    %v1782 = vadd.f32 0.0, %v1781
    %v1783 = vpop.f32.mrb[0].mxu0
    %v1784 = vadd.f32 0.0, %v1783
    %1785 = vmatprep.mubr.f32.mxu0 0.0
    %1786 = vmatmul.mubr.f32.gmra.mrb[0].mxu0 %v1711
    %v1787 = vpop.f32.mrb[0].mxu0
    %v1788 = vadd.f32 0.0, %v1787
    %v1789 = vpop.f32.mrb[0].mxu0
    %v1790 = vadd.f32 0.0, %v1789
    %1791 = vmatprep.mubr.f32.mxu0 0.0
    %1792 = vmatmul.mubr.f32.gmra.mrb[0].mxu0 %v1713
    %v1793 = vpop.f32.mrb[0].mxu0
    %v1794 = vadd.f32 0.0, %v1793
    %v1795 = vpop.f32.mrb[0].mxu0
    %v1796 = vadd.f32 0.0, %v1795
    %1797 = vdwg.mxu0
    %v1798 = vadd.f32 %v1673, %v1782
    %v1799 = vadd.f32 %v1674, %v1784
    %v1800 = vadd.f32 %v1675, %v1788
    %v1801 = vadd.f32 %v1676, %v1790
    %v1802 = vadd.f32 %v1677, %v1794
    %v1803 = vadd.f32 %v1678, %v1796
    %s1804 = scalar_lea.vmem %s5, 704
    %v1805 = vld [vmem:[%s1804] sm:$0xff]
    %v1806 = vld [vmem:[%s1804 + $0x8] sm:$0xff]
    %v1807 = vld [vmem:[%s1804 + $0x10] sm:$0xff]
    %v1808 = vld [vmem:[%s1804 + $0x18] sm:$0xff]
    %v1809 = vld [vmem:[%s1804 + $0x20] sm:$0xff]
    %v1810 = vld [vmem:[%s1804 + $0x28] sm:$0xff]
    %v1811 = vld [vmem:[%s1804 + $0x30] sm:$0xff]
    %v1812 = vld [vmem:[%s1804 + $0x38] sm:$0xff]
    %v1813 = vld [vmem:[%s1804 + $0x40] sm:$0xff]
    %v1814 = vld [vmem:[%s1804 + $0x48] sm:$0xff]
    %v1815 = vld [vmem:[%s1804 + $0x50] sm:$0xff]
    %v1816 = vld [vmem:[%s1804 + $0x58] sm:$0xff]
    %v1817 = vld [vmem:[%s1804 + $0x60] sm:$0xff]
    %v1818 = vld [vmem:[%s1804 + $0x68] sm:$0xff]
    %v1819 = vld [vmem:[%s1804 + $0x70] sm:$0xff]
    %v1820 = vld [vmem:[%s1804 + $0x78] sm:$0xff]
    %v1821 = vld [vmem:[%s1804 + $0x80] sm:$0xff]
    %v1822 = vld [vmem:[%s1804 + $0x88] sm:$0xff]
    %v1823 = vld [vmem:[%s1804 + $0x90] sm:$0xff]
    %v1824 = vld [vmem:[%s1804 + $0x98] sm:$0xff]
    %v1825 = vld [vmem:[%s1804 + $0xa0] sm:$0xff]
    %v1826 = vld [vmem:[%s1804 + $0xa8] sm:$0xff]
    %v1827 = vrot.slane %v1301, 4
    %v1828 = vrot.slane %v1306, 4
    %v1829 = vsel %vm711, %v1827, %v1828
    %v1830 = vrot.slane %v1311, 4
    %v1831 = vsel %vm711, %v1828, %v1830
    %v1832 = vrot.slane %v1316, 4
    %v1833 = vsel %vm711, %v1830, %v1832
    %v1834 = vsel %vm1375, %v1829, 0
    %v1836 = vsel %vm1375, %v1831, 0
    %v1838 = vsel %vm1375, %v1833, 0
    %1840 = vmatprep.subr.mxu0 %v1806
    %1841 = vmatpush1.msra.mxu0 %v1805
    %1842 = vmatprep.subr.mxu0 %v1808
    %1843 = vmatpush1.msra.mxu0 %v1807
    %1844 = vmatprep.subr.mxu0 %v1810
    %1845 = vmatpush1.msra.mxu0 %v1809
    %1846 = vmatprep.subr.mxu0 %v1812
    %1847 = vmatpush1.msra.mxu0 %v1811
    %1848 = vmatprep.subr.mxu0 %v1814
    %1849 = vmatpush1.msra.mxu0 %v1813
    %1850 = vmatprep.subr.mxu0 %v1816
    %1851 = vmatpush1.msra.mxu0 %v1815
    %1852 = vmatprep.subr.mxu0 %v1818
    %1853 = vmatpush1.msra.mxu0 %v1817
    %1854 = vmatprep.subr.mxu0 %v1820
    %1855 = vmatpush1.msra.mxu0 %v1819
    %1856 = vmatprep.subr.mxu0 %v1822
    %1857 = vmatpush1.msra.mxu0 %v1821
    %1858 = vmatprep.subr.mxu0 %v1824
    %1859 = vmatpush1.msra.mxu0 %v1823
    %1860 = vmatprep.subr.mxu0 %v1826
    %1861 = vmatpush1.msra.mxu0 %v1825
    %1862 = vmatprep.subr.mxu0 0.0
    %1863 = vmatpush1.msra.mxu0 0.0
    %1864 = vmatprep.subr.mxu0 0.0
    %1865 = vmatpush1.msra.mxu0 0.0
    %1866 = vmatprep.subr.mxu0 0.0
    %1867 = vmatpush1.msra.mxu0 0.0
    %1868 = vmatprep.subr.mxu0 0.0
    %1869 = vmatpush1.msra.mxu0 0.0
    %1870 = vmatprep.subr.mxu0 0.0
    %1871 = vmatpush1.msra.mxu0 0.0
    %1872 = vmatprep.subr.mxu0 0.0
    %1873 = vmatpush1.msra.mxu0 0.0
    %1874 = vmatprep.subr.mxu0 0.0
    %1875 = vmatpush1.msra.mxu0 0.0
    %1876 = vmatprep.subr.mxu0 0.0
    %1877 = vmatpush1.msra.mxu0 0.0
    %1878 = vmatprep.subr.mxu0 0.0
    %1879 = vmatpush1.msra.mxu0 0.0
    %1880 = vmatprep.subr.mxu0 0.0
    %1881 = vmatpush1.msra.mxu0 0.0
    %1882 = vmatprep.subr.mxu0 0.0
    %1883 = vmatpush1.msra.mxu0 0.0
    %1884 = vmatprep.subr.mxu0 0.0
    %1885 = vmatpush1.msra.mxu0 0.0
    %1886 = vmatprep.subr.mxu0 0.0
    %1887 = vmatpush1.msra.mxu0 0.0
    %1888 = vmatprep.subr.mxu0 0.0
    %1889 = vmatpush1.msra.mxu0 0.0
    %1890 = vmatprep.subr.mxu0 0.0
    %1891 = vmatpush1.msra.mxu0 0.0
    %1892 = vmatprep.subr.mxu0 0.0
    %1893 = vmatpush1.msra.mxu0 0.0
    %1894 = vmatprep.subr.mxu0 0.0
    %1895 = vmatpush1.msra.mxu0 0.0
    %1896 = vmatprep.subr.mxu0 0.0
    %1897 = vmatpush1.msra.mxu0 0.0
    %1898 = vmatprep.subr.mxu0 0.0
    %1899 = vmatpush1.msra.mxu0 0.0
    %1900 = vmatprep.subr.mxu0 0.0
    %1901 = vmatpush1.msra.mxu0 0.0
    %1902 = vmatprep.subr.mxu0 0.0
    %1903 = vmatpush1.msra.mxu0 0.0
    %1904 = vmatprep.mubr.f32.mxu0 0.0
    %1905 = vmatmul.mubr.f32.gmra.mrb[0].mxu0 %v1834
    %v1906 = vpop.f32.mrb[0].mxu0
    %v1907 = vadd.f32 0.0, %v1906
    %v1908 = vpop.f32.mrb[0].mxu0
    %v1909 = vadd.f32 0.0, %v1908
    %1910 = vmatprep.mubr.f32.mxu0 0.0
    %1911 = vmatmul.mubr.f32.gmra.mrb[0].mxu0 %v1836
    %v1912 = vpop.f32.mrb[0].mxu0
    %v1913 = vadd.f32 0.0, %v1912
    %v1914 = vpop.f32.mrb[0].mxu0
    %v1915 = vadd.f32 0.0, %v1914
    %1916 = vmatprep.mubr.f32.mxu0 0.0
    %1917 = vmatmul.mubr.f32.gmra.mrb[0].mxu0 %v1838
    %v1918 = vpop.f32.mrb[0].mxu0
    %v1919 = vadd.f32 0.0, %v1918
    %v1920 = vpop.f32.mrb[0].mxu0
    %v1921 = vadd.f32 0.0, %v1920
    %1922 = vdwg.mxu0
    %v1923 = vadd.f32 %v1798, %v1907
    %v1924 = vadd.f32 %v1799, %v1909
    %v1925 = vadd.f32 %v1800, %v1913
    %v1926 = vadd.f32 %v1801, %v1915
    %v1927 = vadd.f32 %v1802, %v1919
    %v1928 = vadd.f32 %v1803, %v1921
    %v1929 = vld [vmem:[%s6] sm:$0x3]
    %v1931 = vlaneseq
    %v1932 = vshrl.u32 %v1931, 7
    %v1933 = vsub.s32 0, %v1932
    %v1934 = vrot.slane %v1929, %v1933
    %v1935 = vlaneseq
    %v1936 = vshrl.u32 %v1935, 7
    %v1937 = vsub.s32 1, %v1936
    %v1938 = vrot.slane %v1929, %v1937
    %v1941 = vadd.f32 %v1923, %v1934
    %v1942 = vadd.f32 %v1924, %v1938
    %v1943 = vadd.f32 %v1925, %v1934
    %v1944 = vadd.f32 %v1926, %v1938
    %v1945 = vadd.f32 %v1927, %v1934
    %v1946 = vadd.f32 %v1928, %v1938
    %v1947 = vmax.f32 %v1941, 0.0
    %v1948 = vmax.f32 %v1942, 0.0
    %v1949 = vmax.f32 %v1943, 0.0
    %v1950 = vmax.f32 %v1944, 0.0
    %v1951 = vmax.f32 %v1945, 0.0
    %v1952 = vmax.f32 %v1946, 0.0
    %v1959 = vrot.slane %v1947, 1
    %v1960 = vrot.slane %v1949, 1
    %v1961 = vsel %vm87, %v1959, %v1960
    %v1962 = vrot.slane %v1948, 1
    %v1963 = vrot.slane %v1950, 1
    %v1964 = vsel %vm87, %v1962, %v1963
    %v1965 = vrot.slane %v1951, 1
    %v1966 = vsel %vm87, %v1960, %v1965
    %v1967 = vrot.slane %v1952, 1
    %v1968 = vsel %vm87, %v1963, %v1967
    %v1975 = vmax.f32 %v1947, %v1961
    %v1976 = vmax.f32 %v1948, %v1964
    %v1977 = vmax.f32 %v1949, %v1966
    %v1978 = vmax.f32 %v1950, %v1968
    %v1979 = vmax.f32 %v1951, %v1965
    %v1980 = vmax.f32 %v1952, %v1967
    %1987 = vrot.lane.b32.xlu0 %v1975, 112
    %v1988 = vpop.permute.xlu0 %1987
    %1989 = vrot.lane.b32.xlu0 %v1976, 112
    %v1990 = vpop.permute.xlu0 %1989
    %1991 = vrot.lane.b32.xlu0 %v1977, 112
    %v1992 = vpop.permute.xlu0 %1991
    %1993 = vrot.lane.b32.xlu0 %v1978, 112
    %v1994 = vpop.permute.xlu0 %1993
    %1995 = vrot.lane.b32.xlu0 %v1979, 112
    %v1996 = vpop.permute.xlu0 %1995
    %1997 = vrot.lane.b32.xlu0 %v1980, 112
    %v1998 = vpop.permute.xlu0 %1997
    %vm1999 = vcmask 916480
    %v2000 = vsel %vm1999, %v1988, %v1990
    %v2001 = vsel %vm1999, %v1992, %v1994
    %v2002 = vsel %vm1999, %v1996, %v1998
    %v2009 = vmax.f32 %v1975, %v2000
    %v2010 = vmax.f32 %v1976, %v1990
    %v2011 = vmax.f32 %v1977, %v2001
    %v2012 = vmax.f32 %v1978, %v1994
    %v2013 = vmax.f32 %v1979, %v2002
    %v2014 = vmax.f32 %v1980, %v1998
    %v2015 = vld [vmem:[%s7] sm:$0xff]
    %v2016 = vld [vmem:[%s7 + $0x8] sm:$0x3]
    %vm2017 = vcmask 187392
    %v2019 = vsel %vm2017, %v2015, 0
    %v2022 = vsel %vm2017, %v2016, 0
    %v2025 = vsel %vm87, %v2013, 0
    %v2028 = vsel %vm87, %v2014, 0
    %2030 = vmatprep.subr.mxu0 %v2010
    %2031 = vmatpush1.msra.mxu0 %v2009
    %2032 = vmatprep.subr.mxu0 %v2012
    %2033 = vmatpush1.msra.mxu0 %v2011
    %2034 = vmatprep.subr.mxu0 %v2028
    %2035 = vmatpush1.msra.mxu0 %v2025
    %2036 = vmatprep.subr.mxu0 0.0
    %2037 = vmatpush1.msra.mxu0 0.0
    %2038 = vmatprep.subr.mxu0 0.0
    %2039 = vmatpush1.msra.mxu0 0.0
    %2040 = vmatprep.subr.mxu0 0.0
    %2041 = vmatpush1.msra.mxu0 0.0
    %2042 = vmatprep.subr.mxu0 0.0
    %2043 = vmatpush1.msra.mxu0 0.0
    %2044 = vmatprep.subr.mxu0 0.0
    %2045 = vmatpush1.msra.mxu0 0.0
    %2046 = vmatprep.subr.mxu0 0.0
    %2047 = vmatpush1.msra.mxu0 0.0
    %2048 = vmatprep.subr.mxu0 0.0
    %2049 = vmatpush1.msra.mxu0 0.0
    %2050 = vmatprep.subr.mxu0 0.0
    %2051 = vmatpush1.msra.mxu0 0.0
    %2052 = vmatprep.subr.mxu0 0.0
    %2053 = vmatpush1.msra.mxu0 0.0
    %2054 = vmatprep.subr.mxu0 0.0
    %2055 = vmatpush1.msra.mxu0 0.0
    %2056 = vmatprep.subr.mxu0 0.0
    %2057 = vmatpush1.msra.mxu0 0.0
    %2058 = vmatprep.subr.mxu0 0.0
    %2059 = vmatpush1.msra.mxu0 0.0
    %2060 = vmatprep.subr.mxu0 0.0
    %2061 = vmatpush1.msra.mxu0 0.0
    %2062 = vmatprep.subr.mxu0 0.0
    %2063 = vmatpush1.msra.mxu0 0.0
    %2064 = vmatprep.subr.mxu0 0.0
    %2065 = vmatpush1.msra.mxu0 0.0
    %2066 = vmatprep.subr.mxu0 0.0
    %2067 = vmatpush1.msra.mxu0 0.0
    %2068 = vmatprep.subr.mxu0 0.0
    %2069 = vmatpush1.msra.mxu0 0.0
    %2070 = vmatprep.subr.mxu0 0.0
    %2071 = vmatpush1.msra.mxu0 0.0
    %2072 = vmatprep.subr.mxu0 0.0
    %2073 = vmatpush1.msra.mxu0 0.0
    %2074 = vmatprep.subr.mxu0 0.0
    %2075 = vmatpush1.msra.mxu0 0.0
    %2076 = vmatprep.subr.mxu0 0.0
    %2077 = vmatpush1.msra.mxu0 0.0
    %2078 = vmatprep.subr.mxu0 0.0
    %2079 = vmatpush1.msra.mxu0 0.0
    %2080 = vmatprep.subr.mxu0 0.0
    %2081 = vmatpush1.msra.mxu0 0.0
    %2082 = vmatprep.subr.mxu0 0.0
    %2083 = vmatpush1.msra.mxu0 0.0
    %2084 = vmatprep.subr.mxu0 0.0
    %2085 = vmatpush1.msra.mxu0 0.0
    %2086 = vmatprep.subr.mxu0 0.0
    %2087 = vmatpush1.msra.mxu0 0.0
    %2088 = vmatprep.subr.mxu0 0.0
    %2089 = vmatpush1.msra.mxu0 0.0
    %2090 = vmatprep.subr.mxu0 0.0
    %2091 = vmatpush1.msra.mxu0 0.0
    %2092 = vmatprep.subr.mxu0 0.0
    %2093 = vmatpush1.msra.mxu0 0.0
    %2094 = vmatprep.mubr.f32.mxu0 0.0
    %2095 = vmatmul.mubr.f32.gmra.mrb[0].mxu0 %v2019
    %v2096 = vpop.f32.mrb[0].mxu0
    %v2097 = vadd.f32 0.0, %v2096
    %v2098 = vpop.f32.mrb[0].mxu0
    %v2099 = vadd.f32 0.0, %v2098
    %2100 = vmatprep.mubr.f32.mxu0 0.0
    %2101 = vmatmul.mubr.f32.gmra.mrb[0].mxu0 %v2022
    %v2102 = vpop.f32.mrb[0].mxu0
    %v2103 = vadd.f32 0.0, %v2102
    %v2104 = vpop.f32.mrb[0].mxu0
    %v2105 = vadd.f32 0.0, %v2104
    %2106 = vdwg.mxu0
    %v2107 = vld [vmem:[%s8] sm:$0xff]
    %v2108 = vld [vmem:[%s8 + $0x8] sm:$0xff]
    %v2109 = vld [vmem:[%s8 + $0x10] sm:$0xff]
    %v2110 = vld [vmem:[%s8 + $0x18] sm:$0xff]
    %v2111 = vld [vmem:[%s8 + $0x20] sm:$0xff]
    %v2112 = vld [vmem:[%s8 + $0x28] sm:$0xff]
    %v2113 = vld [vmem:[%s8 + $0x30] sm:$0xff]
    %v2114 = vld [vmem:[%s8 + $0x38] sm:$0xff]
    %v2115 = vld [vmem:[%s8 + $0x40] sm:$0xff]
    %v2116 = vld [vmem:[%s8 + $0x48] sm:$0xff]
    %v2117 = vld [vmem:[%s8 + $0x50] sm:$0xff]
    %v2118 = vld [vmem:[%s8 + $0x58] sm:$0xff]
    %v2119 = vld [vmem:[%s8 + $0x60] sm:$0xff]
    %v2120 = vld [vmem:[%s8 + $0x68] sm:$0xff]
    %v2121 = vld [vmem:[%s8 + $0x70] sm:$0xff]
    %v2122 = vld [vmem:[%s8 + $0x78] sm:$0xff]
    %v2123 = vld [vmem:[%s8 + $0x80] sm:$0xff]
    %v2124 = vld [vmem:[%s8 + $0x88] sm:$0xff]
    %vm2125 = vcmask 130048
    %v2127 = vsel %vm2125, %v2099, 0
    %v2130 = vsel %vm2125, %v2105, 0
    %2132 = vmatprep.subr.mxu0 0.0
    %2133 = vmatpush1.msra.mxu0 %v2107
    %2134 = vmatprep.subr.mxu0 0.0
    %2135 = vmatpush1.msra.mxu0 %v2108
    %2136 = vmatprep.subr.mxu0 0.0
    %2137 = vmatpush1.msra.mxu0 %v2109
    %2138 = vmatprep.subr.mxu0 0.0
    %2139 = vmatpush1.msra.mxu0 %v2110
    %2140 = vmatprep.subr.mxu0 0.0
    %2141 = vmatpush1.msra.mxu0 %v2111
    %2142 = vmatprep.subr.mxu0 0.0
    %2143 = vmatpush1.msra.mxu0 %v2112
    %2144 = vmatprep.subr.mxu0 0.0
    %2145 = vmatpush1.msra.mxu0 %v2113
    %2146 = vmatprep.subr.mxu0 0.0
    %2147 = vmatpush1.msra.mxu0 %v2114
    %2148 = vmatprep.subr.mxu0 0.0
    %2149 = vmatpush1.msra.mxu0 %v2115
    %2150 = vmatprep.subr.mxu0 0.0
    %2151 = vmatpush1.msra.mxu0 %v2116
    %2152 = vmatprep.subr.mxu0 0.0
    %2153 = vmatpush1.msra.mxu0 %v2117
    %2154 = vmatprep.subr.mxu0 0.0
    %2155 = vmatpush1.msra.mxu0 %v2118
    %2156 = vmatprep.subr.mxu0 0.0
    %2157 = vmatpush1.msra.mxu0 %v2119
    %2158 = vmatprep.subr.mxu0 0.0
    %2159 = vmatpush1.msra.mxu0 %v2120
    %2160 = vmatprep.subr.mxu0 0.0
    %2161 = vmatpush1.msra.mxu0 %v2121
    %2162 = vmatprep.subr.mxu0 0.0
    %2163 = vmatpush1.msra.mxu0 %v2122
    %2164 = vmatprep.subr.mxu0 0.0
    %2165 = vmatpush1.msra.mxu0 %v2123
    %2166 = vmatprep.subr.mxu0 0.0
    %2167 = vmatpush1.msra.mxu0 %v2124
    %2168 = vmatprep.subr.mxu0 0.0
    %2169 = vmatpush1.msra.mxu0 0.0
    %2170 = vmatprep.subr.mxu0 0.0
    %2171 = vmatpush1.msra.mxu0 0.0
    %2172 = vmatprep.subr.mxu0 0.0
    %2173 = vmatpush1.msra.mxu0 0.0
    %2174 = vmatprep.subr.mxu0 0.0
    %2175 = vmatpush1.msra.mxu0 0.0
    %2176 = vmatprep.subr.mxu0 0.0
    %2177 = vmatpush1.msra.mxu0 0.0
    %2178 = vmatprep.subr.mxu0 0.0
    %2179 = vmatpush1.msra.mxu0 0.0
    %2180 = vmatprep.subr.mxu0 0.0
    %2181 = vmatpush1.msra.mxu0 0.0
    %2182 = vmatprep.subr.mxu0 0.0
    %2183 = vmatpush1.msra.mxu0 0.0
    %2184 = vmatprep.subr.mxu0 0.0
    %2185 = vmatpush1.msra.mxu0 0.0
    %2186 = vmatprep.subr.mxu0 0.0
    %2187 = vmatpush1.msra.mxu0 0.0
    %2188 = vmatprep.subr.mxu0 0.0
    %2189 = vmatpush1.msra.mxu0 0.0
    %2190 = vmatprep.subr.mxu0 0.0
    %2191 = vmatpush1.msra.mxu0 0.0
    %2192 = vmatprep.subr.mxu0 0.0
    %2193 = vmatpush1.msra.mxu0 0.0
    %2194 = vmatprep.subr.mxu0 0.0
    %2195 = vmatpush1.msra.mxu0 0.0
    %2196 = vmatprep.mubr.f32.mxu0 %v2127
    %2197 = vmatmul.mubr.f32.gmra.mrb[0].mxu0 %v2097
    %v2198 = vpop.f32.mrb[0].mxu0
    %v2199 = vadd.f32 0.0, %v2198
    %v2200 = vpop.f32.mrb[0].mxu0
    %2201 = vmatprep.mubr.f32.mxu0 %v2130
    %2202 = vmatmul.mubr.f32.gmra.mrb[0].mxu0 %v2103
    %v2203 = vpop.f32.mrb[0].mxu0
    %v2204 = vadd.f32 0.0, %v2203
    %v2205 = vpop.f32.mrb[0].mxu0
    %2206 = vdwg.mxu0
    %v2207 = vld [vmem:[%s9] sm:$0xff]
    %v2208 = vld [vmem:[%s9 + $0x8] sm:$0xff]
    %v2209 = vld [vmem:[%s9 + $0x10] sm:$0xff]
    %v2210 = vld [vmem:[%s9 + $0x18] sm:$0xff]
    %v2211 = vld [vmem:[%s9 + $0x20] sm:$0xff]
    %v2212 = vld [vmem:[%s9 + $0x28] sm:$0xff]
    %v2213 = vld [vmem:[%s9 + $0x30] sm:$0xff]
    %v2214 = vld [vmem:[%s9 + $0x38] sm:$0xff]
    %v2215 = vld [vmem:[%s9 + $0x40] sm:$0xff]
    %v2216 = vld [vmem:[%s9 + $0x48] sm:$0xff]
    %s2217 = scalar_lea.vmem %s9, 80
    %v2218 = vld [vmem:[%s2217] sm:$0xff]
    %v2219 = vld [vmem:[%s2217 + $0x8] sm:$0xff]
    %v2220 = vld [vmem:[%s2217 + $0x10] sm:$0xff]
    %v2221 = vld [vmem:[%s2217 + $0x18] sm:$0xff]
    %v2222 = vld [vmem:[%s2217 + $0x20] sm:$0xff]
    %v2223 = vld [vmem:[%s2217 + $0x28] sm:$0xff]
    %v2224 = vld [vmem:[%s2217 + $0x30] sm:$0xff]
    %v2225 = vld [vmem:[%s2217 + $0x38] sm:$0xff]
    %v2226 = vld [vmem:[%s2217 + $0x40] sm:$0xff]
    %v2227 = vld [vmem:[%s2217 + $0x48] sm:$0xff]
    %v2229 = vrot.slane %v2199, 1
    %vm2230 = vcmask 654336
    %v2231 = vsel %vm2230, %v2229, 0
    %2233 = vmatprep.subr.mxu0 0.0
    %2234 = vmatpush1.msra.mxu0 %v2218
    %2235 = vmatprep.subr.mxu0 0.0
    %2236 = vmatpush1.msra.mxu0 %v2219
    %2237 = vmatprep.subr.mxu0 0.0
    %2238 = vmatpush1.msra.mxu0 %v2220
    %2239 = vmatprep.subr.mxu0 0.0
    %2240 = vmatpush1.msra.mxu0 %v2221
    %2241 = vmatprep.subr.mxu0 0.0
    %2242 = vmatpush1.msra.mxu0 %v2222
    %2243 = vmatprep.subr.mxu0 0.0
    %2244 = vmatpush1.msra.mxu0 %v2223
    %2245 = vmatprep.subr.mxu0 0.0
    %2246 = vmatpush1.msra.mxu0 %v2224
    %2247 = vmatprep.subr.mxu0 0.0
    %2248 = vmatpush1.msra.mxu0 %v2225
    %2249 = vmatprep.subr.mxu0 0.0
    %2250 = vmatpush1.msra.mxu0 %v2226
    %2251 = vmatprep.subr.mxu0 0.0
    %2252 = vmatpush1.msra.mxu0 %v2227
    %2253 = vmatprep.subr.mxu0 0.0
    %2254 = vmatpush1.msra.mxu0 0.0
    %2255 = vmatprep.subr.mxu0 0.0
    %2256 = vmatpush1.msra.mxu0 0.0
    %2257 = vmatprep.subr.mxu0 0.0
    %2258 = vmatpush1.msra.mxu0 0.0
    %2259 = vmatprep.subr.mxu0 0.0
    %2260 = vmatpush1.msra.mxu0 0.0
    %2261 = vmatprep.subr.mxu0 0.0
    %2262 = vmatpush1.msra.mxu0 0.0
    %2263 = vmatprep.subr.mxu0 0.0
    %2264 = vmatpush1.msra.mxu0 0.0
    %2265 = vmatprep.subr.mxu0 0.0
    %2266 = vmatpush1.msra.mxu0 0.0
    %2267 = vmatprep.subr.mxu0 0.0
    %2268 = vmatpush1.msra.mxu0 0.0
    %2269 = vmatprep.subr.mxu0 0.0
    %2270 = vmatpush1.msra.mxu0 0.0
    %2271 = vmatprep.subr.mxu0 0.0
    %2272 = vmatpush1.msra.mxu0 0.0
    %2273 = vmatprep.subr.mxu0 0.0
    %2274 = vmatpush1.msra.mxu0 0.0
    %2275 = vmatprep.subr.mxu0 0.0
    %2276 = vmatpush1.msra.mxu0 0.0
    %2277 = vmatprep.subr.mxu0 0.0
    %2278 = vmatpush1.msra.mxu0 0.0
    %2279 = vmatprep.subr.mxu0 0.0
    %2280 = vmatpush1.msra.mxu0 0.0
    %2281 = vmatprep.subr.mxu0 0.0
    %2282 = vmatpush1.msra.mxu0 0.0
    %2283 = vmatprep.subr.mxu0 0.0
    %2284 = vmatpush1.msra.mxu0 0.0
    %2285 = vmatprep.subr.mxu0 0.0
    %2286 = vmatpush1.msra.mxu0 0.0
    %2287 = vmatprep.subr.mxu0 0.0
    %2288 = vmatpush1.msra.mxu0 0.0
    %2289 = vmatprep.subr.mxu0 0.0
    %2290 = vmatpush1.msra.mxu0 0.0
    %2291 = vmatprep.subr.mxu0 0.0
    %2292 = vmatpush1.msra.mxu0 0.0
    %2293 = vmatprep.subr.mxu0 0.0
    %2294 = vmatpush1.msra.mxu0 0.0
    %2295 = vmatprep.subr.mxu0 0.0
    %2296 = vmatpush1.msra.mxu0 0.0
    %2297 = vmatprep.mubr.f32.mxu0 0.0
    %2298 = vmatmul.mubr.f32.gmra.mrb[0].mxu0 %v2231
    %v2299 = vpop.f32.mrb[0].mxu0
    %v2300 = vadd.f32 0.0, %v2299
    %v2301 = vpop.f32.mrb[0].mxu0
    %2302 = vdwg.mxu0
    %v2303 = vsel %vm2230, %v2199, 0
    %2305 = vmatprep.subr.mxu0 0.0
    %2306 = vmatpush1.msra.mxu0 %v2207
    %2307 = vmatprep.subr.mxu0 0.0
    %2308 = vmatpush1.msra.mxu0 %v2208
    %2309 = vmatprep.subr.mxu0 0.0
    %2310 = vmatpush1.msra.mxu0 %v2209
    %2311 = vmatprep.subr.mxu0 0.0
    %2312 = vmatpush1.msra.mxu0 %v2210
    %2313 = vmatprep.subr.mxu0 0.0
    %2314 = vmatpush1.msra.mxu0 %v2211
    %2315 = vmatprep.subr.mxu0 0.0
    %2316 = vmatpush1.msra.mxu0 %v2212
    %2317 = vmatprep.subr.mxu0 0.0
    %2318 = vmatpush1.msra.mxu0 %v2213
    %2319 = vmatprep.subr.mxu0 0.0
    %2320 = vmatpush1.msra.mxu0 %v2214
    %2321 = vmatprep.subr.mxu0 0.0
    %2322 = vmatpush1.msra.mxu0 %v2215
    %2323 = vmatprep.subr.mxu0 0.0
    %2324 = vmatpush1.msra.mxu0 %v2216
    %2325 = vmatprep.subr.mxu0 0.0
    %2326 = vmatpush1.msra.mxu0 0.0
    %2327 = vmatprep.subr.mxu0 0.0
    %2328 = vmatpush1.msra.mxu0 0.0
    %2329 = vmatprep.subr.mxu0 0.0
    %2330 = vmatpush1.msra.mxu0 0.0
    %2331 = vmatprep.subr.mxu0 0.0
    %2332 = vmatpush1.msra.mxu0 0.0
    %2333 = vmatprep.subr.mxu0 0.0
    %2334 = vmatpush1.msra.mxu0 0.0
    %2335 = vmatprep.subr.mxu0 0.0
    %2336 = vmatpush1.msra.mxu0 0.0
    %2337 = vmatprep.subr.mxu0 0.0
    %2338 = vmatpush1.msra.mxu0 0.0
    %2339 = vmatprep.subr.mxu0 0.0
    %2340 = vmatpush1.msra.mxu0 0.0
    %2341 = vmatprep.subr.mxu0 0.0
    %2342 = vmatpush1.msra.mxu0 0.0
    %2343 = vmatprep.subr.mxu0 0.0
    %2344 = vmatpush1.msra.mxu0 0.0
    %2345 = vmatprep.subr.mxu0 0.0
    %2346 = vmatpush1.msra.mxu0 0.0
    %2347 = vmatprep.subr.mxu0 0.0
    %2348 = vmatpush1.msra.mxu0 0.0
    %2349 = vmatprep.subr.mxu0 0.0
    %2350 = vmatpush1.msra.mxu0 0.0
    %2351 = vmatprep.subr.mxu0 0.0
    %2352 = vmatpush1.msra.mxu0 0.0
    %2353 = vmatprep.subr.mxu0 0.0
    %2354 = vmatpush1.msra.mxu0 0.0
    %2355 = vmatprep.subr.mxu0 0.0
    %2356 = vmatpush1.msra.mxu0 0.0
    %2357 = vmatprep.subr.mxu0 0.0
    %2358 = vmatpush1.msra.mxu0 0.0
    %2359 = vmatprep.subr.mxu0 0.0
    %2360 = vmatpush1.msra.mxu0 0.0
    %2361 = vmatprep.subr.mxu0 0.0
    %2362 = vmatpush1.msra.mxu0 0.0
    %2363 = vmatprep.subr.mxu0 0.0
    %2364 = vmatpush1.msra.mxu0 0.0
    %2365 = vmatprep.subr.mxu0 0.0
    %2366 = vmatpush1.msra.mxu0 0.0
    %2367 = vmatprep.subr.mxu0 0.0
    %2368 = vmatpush1.msra.mxu0 0.0
    %2369 = vmatprep.mubr.f32.mxu0 0.0
    %2370 = vmatmul.mubr.f32.gmra.mrb[0].mxu0 %v2303
    %v2371 = vpop.f32.mrb[0].mxu0
    %v2372 = vadd.f32 %v2300, %v2371
    %v2373 = vpop.f32.mrb[0].mxu0
    %2374 = vdwg.mxu0
    %s2375 = scalar_lea.vmem %s9, 160
    %v2376 = vld [vmem:[%s2375] sm:$0xff]
    %v2377 = vld [vmem:[%s2375 + $0x8] sm:$0xff]
    %v2378 = vld [vmem:[%s2375 + $0x10] sm:$0xff]
    %v2379 = vld [vmem:[%s2375 + $0x18] sm:$0xff]
    %v2380 = vld [vmem:[%s2375 + $0x20] sm:$0xff]
    %v2381 = vld [vmem:[%s2375 + $0x28] sm:$0xff]
    %v2382 = vld [vmem:[%s2375 + $0x30] sm:$0xff]
    %v2383 = vld [vmem:[%s2375 + $0x38] sm:$0xff]
    %v2384 = vld [vmem:[%s2375 + $0x40] sm:$0xff]
    %v2385 = vld [vmem:[%s2375 + $0x48] sm:$0xff]
    %v2386 = vrot.slane %v2199, 2
    %v2387 = vsel %vm2230, %v2386, 0
    %2389 = vmatprep.subr.mxu0 0.0
    %2390 = vmatpush1.msra.mxu0 %v2376
    %2391 = vmatprep.subr.mxu0 0.0
    %2392 = vmatpush1.msra.mxu0 %v2377
    %2393 = vmatprep.subr.mxu0 0.0
    %2394 = vmatpush1.msra.mxu0 %v2378
    %2395 = vmatprep.subr.mxu0 0.0
    %2396 = vmatpush1.msra.mxu0 %v2379
    %2397 = vmatprep.subr.mxu0 0.0
    %2398 = vmatpush1.msra.mxu0 %v2380
    %2399 = vmatprep.subr.mxu0 0.0
    %2400 = vmatpush1.msra.mxu0 %v2381
    %2401 = vmatprep.subr.mxu0 0.0
    %2402 = vmatpush1.msra.mxu0 %v2382
    %2403 = vmatprep.subr.mxu0 0.0
    %2404 = vmatpush1.msra.mxu0 %v2383
    %2405 = vmatprep.subr.mxu0 0.0
    %2406 = vmatpush1.msra.mxu0 %v2384
    %2407 = vmatprep.subr.mxu0 0.0
    %2408 = vmatpush1.msra.mxu0 %v2385
    %2409 = vmatprep.subr.mxu0 0.0
    %2410 = vmatpush1.msra.mxu0 0.0
    %2411 = vmatprep.subr.mxu0 0.0
    %2412 = vmatpush1.msra.mxu0 0.0
    %2413 = vmatprep.subr.mxu0 0.0
    %2414 = vmatpush1.msra.mxu0 0.0
    %2415 = vmatprep.subr.mxu0 0.0
    %2416 = vmatpush1.msra.mxu0 0.0
    %2417 = vmatprep.subr.mxu0 0.0
    %2418 = vmatpush1.msra.mxu0 0.0
    %2419 = vmatprep.subr.mxu0 0.0
    %2420 = vmatpush1.msra.mxu0 0.0
    %2421 = vmatprep.subr.mxu0 0.0
    %2422 = vmatpush1.msra.mxu0 0.0
    %2423 = vmatprep.subr.mxu0 0.0
    %2424 = vmatpush1.msra.mxu0 0.0
    %2425 = vmatprep.subr.mxu0 0.0
    %2426 = vmatpush1.msra.mxu0 0.0
    %2427 = vmatprep.subr.mxu0 0.0
    %2428 = vmatpush1.msra.mxu0 0.0
    %2429 = vmatprep.subr.mxu0 0.0
    %2430 = vmatpush1.msra.mxu0 0.0
    %2431 = vmatprep.subr.mxu0 0.0
    %2432 = vmatpush1.msra.mxu0 0.0
    %2433 = vmatprep.subr.mxu0 0.0
    %2434 = vmatpush1.msra.mxu0 0.0
    %2435 = vmatprep.subr.mxu0 0.0
    %2436 = vmatpush1.msra.mxu0 0.0
    %2437 = vmatprep.subr.mxu0 0.0
    %2438 = vmatpush1.msra.mxu0 0.0
    %2439 = vmatprep.subr.mxu0 0.0
    %2440 = vmatpush1.msra.mxu0 0.0
    %2441 = vmatprep.subr.mxu0 0.0
    %2442 = vmatpush1.msra.mxu0 0.0
    %2443 = vmatprep.subr.mxu0 0.0
    %2444 = vmatpush1.msra.mxu0 0.0
    %2445 = vmatprep.subr.mxu0 0.0
    %2446 = vmatpush1.msra.mxu0 0.0
    %2447 = vmatprep.subr.mxu0 0.0
    %2448 = vmatpush1.msra.mxu0 0.0
    %2449 = vmatprep.subr.mxu0 0.0
    %2450 = vmatpush1.msra.mxu0 0.0
    %2451 = vmatprep.subr.mxu0 0.0
    %2452 = vmatpush1.msra.mxu0 0.0
    %2453 = vmatprep.mubr.f32.mxu0 0.0
    %2454 = vmatmul.mubr.f32.gmra.mrb[0].mxu0 %v2387
    %v2455 = vpop.f32.mrb[0].mxu0
    %v2456 = vadd.f32 0.0, %v2455
    %v2457 = vpop.f32.mrb[0].mxu0
    %2458 = vdwg.mxu0
    %v2459 = vadd.f32 %v2372, %v2456
    %s2460 = scalar_lea.vmem %s9, 240
    %v2461 = vld [vmem:[%s2460] sm:$0xff]
    %v2462 = vld [vmem:[%s2460 + $0x8] sm:$0xff]
    %v2463 = vld [vmem:[%s2460 + $0x10] sm:$0xff]
    %v2464 = vld [vmem:[%s2460 + $0x18] sm:$0xff]
    %v2465 = vld [vmem:[%s2460 + $0x20] sm:$0xff]
    %v2466 = vld [vmem:[%s2460 + $0x28] sm:$0xff]
    %v2467 = vld [vmem:[%s2460 + $0x30] sm:$0xff]
    %v2468 = vld [vmem:[%s2460 + $0x38] sm:$0xff]
    %v2469 = vld [vmem:[%s2460 + $0x40] sm:$0xff]
    %v2470 = vld [vmem:[%s2460 + $0x48] sm:$0xff]
    %v2472 = vrot.slane %v2199, 3
    %v2473 = vrot.slane %v2204, 3
    %v2474 = vsel %vm541, %v2472, %v2473
    %v2475 = vsel %vm2230, %v2474, 0
    %2477 = vmatprep.subr.mxu0 0.0
    %2478 = vmatpush1.msra.mxu0 %v2461
    %2479 = vmatprep.subr.mxu0 0.0
    %2480 = vmatpush1.msra.mxu0 %v2462
    %2481 = vmatprep.subr.mxu0 0.0
    %2482 = vmatpush1.msra.mxu0 %v2463
    %2483 = vmatprep.subr.mxu0 0.0
    %2484 = vmatpush1.msra.mxu0 %v2464
    %2485 = vmatprep.subr.mxu0 0.0
    %2486 = vmatpush1.msra.mxu0 %v2465
    %2487 = vmatprep.subr.mxu0 0.0
    %2488 = vmatpush1.msra.mxu0 %v2466
    %2489 = vmatprep.subr.mxu0 0.0
    %2490 = vmatpush1.msra.mxu0 %v2467
    %2491 = vmatprep.subr.mxu0 0.0
    %2492 = vmatpush1.msra.mxu0 %v2468
    %2493 = vmatprep.subr.mxu0 0.0
    %2494 = vmatpush1.msra.mxu0 %v2469
    %2495 = vmatprep.subr.mxu0 0.0
    %2496 = vmatpush1.msra.mxu0 %v2470
    %2497 = vmatprep.subr.mxu0 0.0
    %2498 = vmatpush1.msra.mxu0 0.0
    %2499 = vmatprep.subr.mxu0 0.0
    %2500 = vmatpush1.msra.mxu0 0.0
    %2501 = vmatprep.subr.mxu0 0.0
    %2502 = vmatpush1.msra.mxu0 0.0
    %2503 = vmatprep.subr.mxu0 0.0
    %2504 = vmatpush1.msra.mxu0 0.0
    %2505 = vmatprep.subr.mxu0 0.0
    %2506 = vmatpush1.msra.mxu0 0.0
    %2507 = vmatprep.subr.mxu0 0.0
    %2508 = vmatpush1.msra.mxu0 0.0
    %2509 = vmatprep.subr.mxu0 0.0
    %2510 = vmatpush1.msra.mxu0 0.0
    %2511 = vmatprep.subr.mxu0 0.0
    %2512 = vmatpush1.msra.mxu0 0.0
    %2513 = vmatprep.subr.mxu0 0.0
    %2514 = vmatpush1.msra.mxu0 0.0
    %2515 = vmatprep.subr.mxu0 0.0
    %2516 = vmatpush1.msra.mxu0 0.0
    %2517 = vmatprep.subr.mxu0 0.0
    %2518 = vmatpush1.msra.mxu0 0.0
    %2519 = vmatprep.subr.mxu0 0.0
    %2520 = vmatpush1.msra.mxu0 0.0
    %2521 = vmatprep.subr.mxu0 0.0
    %2522 = vmatpush1.msra.mxu0 0.0
    %2523 = vmatprep.subr.mxu0 0.0
    %2524 = vmatpush1.msra.mxu0 0.0
    %2525 = vmatprep.subr.mxu0 0.0
    %2526 = vmatpush1.msra.mxu0 0.0
    %2527 = vmatprep.subr.mxu0 0.0
    %2528 = vmatpush1.msra.mxu0 0.0
    %2529 = vmatprep.subr.mxu0 0.0
    %2530 = vmatpush1.msra.mxu0 0.0
    %2531 = vmatprep.subr.mxu0 0.0
    %2532 = vmatpush1.msra.mxu0 0.0
    %2533 = vmatprep.subr.mxu0 0.0
    %2534 = vmatpush1.msra.mxu0 0.0
    %2535 = vmatprep.subr.mxu0 0.0
    %2536 = vmatpush1.msra.mxu0 0.0
    %2537 = vmatprep.subr.mxu0 0.0
    %2538 = vmatpush1.msra.mxu0 0.0
    %2539 = vmatprep.subr.mxu0 0.0
    %2540 = vmatpush1.msra.mxu0 0.0
    %2541 = vmatprep.mubr.f32.mxu0 0.0
    %2542 = vmatmul.mubr.f32.gmra.mrb[0].mxu0 %v2475
    %v2543 = vpop.f32.mrb[0].mxu0
    %v2544 = vadd.f32 0.0, %v2543
    %v2545 = vpop.f32.mrb[0].mxu0
    %2546 = vdwg.mxu0
    %v2547 = vadd.f32 %v2459, %v2544
    %s2548 = scalar_lea.vmem %s9, 320
    %v2549 = vld [vmem:[%s2548] sm:$0xff]
    %v2550 = vld [vmem:[%s2548 + $0x8] sm:$0xff]
    %v2551 = vld [vmem:[%s2548 + $0x10] sm:$0xff]
    %v2552 = vld [vmem:[%s2548 + $0x18] sm:$0xff]
    %v2553 = vld [vmem:[%s2548 + $0x20] sm:$0xff]
    %v2554 = vld [vmem:[%s2548 + $0x28] sm:$0xff]
    %v2555 = vld [vmem:[%s2548 + $0x30] sm:$0xff]
    %v2556 = vld [vmem:[%s2548 + $0x38] sm:$0xff]
    %v2557 = vld [vmem:[%s2548 + $0x40] sm:$0xff]
    %v2558 = vld [vmem:[%s2548 + $0x48] sm:$0xff]
    %v2559 = vrot.slane %v2199, 4
    %v2560 = vrot.slane %v2204, 4
    %v2561 = vsel %vm711, %v2559, %v2560
    %v2562 = vsel %vm2230, %v2561, 0
    %2564 = vmatprep.subr.mxu0 0.0
    %2565 = vmatpush1.msra.mxu0 %v2549
    %2566 = vmatprep.subr.mxu0 0.0
    %2567 = vmatpush1.msra.mxu0 %v2550
    %2568 = vmatprep.subr.mxu0 0.0
    %2569 = vmatpush1.msra.mxu0 %v2551
    %2570 = vmatprep.subr.mxu0 0.0
    %2571 = vmatpush1.msra.mxu0 %v2552
    %2572 = vmatprep.subr.mxu0 0.0
    %2573 = vmatpush1.msra.mxu0 %v2553
    %2574 = vmatprep.subr.mxu0 0.0
    %2575 = vmatpush1.msra.mxu0 %v2554
    %2576 = vmatprep.subr.mxu0 0.0
    %2577 = vmatpush1.msra.mxu0 %v2555
    %2578 = vmatprep.subr.mxu0 0.0
    %2579 = vmatpush1.msra.mxu0 %v2556
    %2580 = vmatprep.subr.mxu0 0.0
    %2581 = vmatpush1.msra.mxu0 %v2557
    %2582 = vmatprep.subr.mxu0 0.0
    %2583 = vmatpush1.msra.mxu0 %v2558
    %2584 = vmatprep.subr.mxu0 0.0
    %2585 = vmatpush1.msra.mxu0 0.0
    %2586 = vmatprep.subr.mxu0 0.0
    %2587 = vmatpush1.msra.mxu0 0.0
    %2588 = vmatprep.subr.mxu0 0.0
    %2589 = vmatpush1.msra.mxu0 0.0
    %2590 = vmatprep.subr.mxu0 0.0
    %2591 = vmatpush1.msra.mxu0 0.0
    %2592 = vmatprep.subr.mxu0 0.0
    %2593 = vmatpush1.msra.mxu0 0.0
    %2594 = vmatprep.subr.mxu0 0.0
    %2595 = vmatpush1.msra.mxu0 0.0
    %2596 = vmatprep.subr.mxu0 0.0
    %2597 = vmatpush1.msra.mxu0 0.0
    %2598 = vmatprep.subr.mxu0 0.0
    %2599 = vmatpush1.msra.mxu0 0.0
    %2600 = vmatprep.subr.mxu0 0.0
    %2601 = vmatpush1.msra.mxu0 0.0
    %2602 = vmatprep.subr.mxu0 0.0
    %2603 = vmatpush1.msra.mxu0 0.0
    %2604 = vmatprep.subr.mxu0 0.0
    %2605 = vmatpush1.msra.mxu0 0.0
    %2606 = vmatprep.subr.mxu0 0.0
    %2607 = vmatpush1.msra.mxu0 0.0
    %2608 = vmatprep.subr.mxu0 0.0
    %2609 = vmatpush1.msra.mxu0 0.0
    %2610 = vmatprep.subr.mxu0 0.0
    %2611 = vmatpush1.msra.mxu0 0.0
    %2612 = vmatprep.subr.mxu0 0.0
    %2613 = vmatpush1.msra.mxu0 0.0
    %2614 = vmatprep.subr.mxu0 0.0
    %2615 = vmatpush1.msra.mxu0 0.0
    %2616 = vmatprep.subr.mxu0 0.0
    %2617 = vmatpush1.msra.mxu0 0.0
    %2618 = vmatprep.subr.mxu0 0.0
    %2619 = vmatpush1.msra.mxu0 0.0
    %2620 = vmatprep.subr.mxu0 0.0
    %2621 = vmatpush1.msra.mxu0 0.0
    %2622 = vmatprep.subr.mxu0 0.0
    %2623 = vmatpush1.msra.mxu0 0.0
    %2624 = vmatprep.subr.mxu0 0.0
    %2625 = vmatpush1.msra.mxu0 0.0
    %2626 = vmatprep.subr.mxu0 0.0
    %2627 = vmatpush1.msra.mxu0 0.0
    %2628 = vmatprep.mubr.f32.mxu0 0.0
    %2629 = vmatmul.mubr.f32.gmra.mrb[0].mxu0 %v2562
    %v2630 = vpop.f32.mrb[0].mxu0
    %v2631 = vadd.f32 0.0, %v2630
    %v2632 = vpop.f32.mrb[0].mxu0
    %2633 = vdwg.mxu0
    %v2634 = vadd.f32 %v2547, %v2631
    %v2635 = vld [vmem:[%s10] sm:$0x1]
    %v2637 = vlaneseq
    %v2638 = vshrl.u32 %v2637, 7
    %v2639 = vsub.s32 0, %v2638
    %v2640 = vrot.slane %v2635, %v2639
    %v2642 = vadd.f32 %v2634, %v2640
    %v2643 = vld [vmem:[%s11] sm:$0x3]
    %vm2644 = vcmask 48128
    %v2646 = vsel %vm2644, %v2643, 0
    %v2649 = vsel %vm371, %v2642, 0
    %2651 = vmatprep.subr.mxu0 0.0
    %2652 = vmatpush1.msra.mxu0 %v2649
    %2653 = vmatprep.subr.mxu0 0.0
    %2654 = vmatpush1.msra.mxu0 0.0
    %2655 = vmatprep.subr.mxu0 0.0
    %2656 = vmatpush1.msra.mxu0 0.0
    %2657 = vmatprep.subr.mxu0 0.0
    %2658 = vmatpush1.msra.mxu0 0.0
    %2659 = vmatprep.subr.mxu0 0.0
    %2660 = vmatpush1.msra.mxu0 0.0
    %2661 = vmatprep.subr.mxu0 0.0
    %2662 = vmatpush1.msra.mxu0 0.0
    %2663 = vmatprep.subr.mxu0 0.0
    %2664 = vmatpush1.msra.mxu0 0.0
    %2665 = vmatprep.subr.mxu0 0.0
    %2666 = vmatpush1.msra.mxu0 0.0
    %2667 = vmatprep.subr.mxu0 0.0
    %2668 = vmatpush1.msra.mxu0 0.0
    %2669 = vmatprep.subr.mxu0 0.0
    %2670 = vmatpush1.msra.mxu0 0.0
    %2671 = vmatprep.subr.mxu0 0.0
    %2672 = vmatpush1.msra.mxu0 0.0
    %2673 = vmatprep.subr.mxu0 0.0
    %2674 = vmatpush1.msra.mxu0 0.0
    %2675 = vmatprep.subr.mxu0 0.0
    %2676 = vmatpush1.msra.mxu0 0.0
    %2677 = vmatprep.subr.mxu0 0.0
    %2678 = vmatpush1.msra.mxu0 0.0
    %2679 = vmatprep.subr.mxu0 0.0
    %2680 = vmatpush1.msra.mxu0 0.0
    %2681 = vmatprep.subr.mxu0 0.0
    %2682 = vmatpush1.msra.mxu0 0.0
    %2683 = vmatprep.subr.mxu0 0.0
    %2684 = vmatpush1.msra.mxu0 0.0
    %2685 = vmatprep.subr.mxu0 0.0
    %2686 = vmatpush1.msra.mxu0 0.0
    %2687 = vmatprep.subr.mxu0 0.0
    %2688 = vmatpush1.msra.mxu0 0.0
    %2689 = vmatprep.subr.mxu0 0.0
    %2690 = vmatpush1.msra.mxu0 0.0
    %2691 = vmatprep.subr.mxu0 0.0
    %2692 = vmatpush1.msra.mxu0 0.0
    %2693 = vmatprep.subr.mxu0 0.0
    %2694 = vmatpush1.msra.mxu0 0.0
    %2695 = vmatprep.subr.mxu0 0.0
    %2696 = vmatpush1.msra.mxu0 0.0
    %2697 = vmatprep.subr.mxu0 0.0
    %2698 = vmatpush1.msra.mxu0 0.0
    %2699 = vmatprep.subr.mxu0 0.0
    %2700 = vmatpush1.msra.mxu0 0.0
    %2701 = vmatprep.subr.mxu0 0.0
    %2702 = vmatpush1.msra.mxu0 0.0
    %2703 = vmatprep.subr.mxu0 0.0
    %2704 = vmatpush1.msra.mxu0 0.0
    %2705 = vmatprep.subr.mxu0 0.0
    %2706 = vmatpush1.msra.mxu0 0.0
    %2707 = vmatprep.subr.mxu0 0.0
    %2708 = vmatpush1.msra.mxu0 0.0
    %2709 = vmatprep.subr.mxu0 0.0
    %2710 = vmatpush1.msra.mxu0 0.0
    %2711 = vmatprep.subr.mxu0 0.0
    %2712 = vmatpush1.msra.mxu0 0.0
    %2713 = vmatprep.subr.mxu0 0.0
    %2714 = vmatpush1.msra.mxu0 0.0
    %2715 = vmatprep.mubr.f32.mxu0 0.0
    %2716 = vmatmul.mubr.f32.gmra.mrb[0].mxu0 %v2646
    %v2717 = vpop.f32.mrb[0].mxu0
    %v2718 = vadd.f32 0.0, %v2717
    %v2719 = vpop.f32.mrb[0].mxu0
    %2720 = vdwg.mxu0
    %v2721 = vld [vmem:[%s12] sm:$0xff]
    %v2722 = vld [vmem:[%s12 + $0x8] sm:$0xff]
    %v2723 = vld [vmem:[%s12 + $0x10] sm:$0xff]
    %v2724 = vld [vmem:[%s12 + $0x18] sm:$0xff]
    %v2725 = vld [vmem:[%s12 + $0x20] sm:$0xff]
    %v2726 = vld [vmem:[%s12 + $0x28] sm:$0xff]
    %v2727 = vld [vmem:[%s12 + $0x30] sm:$0xff]
    %v2728 = vld [vmem:[%s12 + $0x38] sm:$0xff]
    %v2729 = vld [vmem:[%s12 + $0x40] sm:$0xff]
    %v2730 = vld [vmem:[%s12 + $0x48] sm:$0xff]
    %v2731 = vld [vmem:[%s12 + $0x50] sm:$0xff]
    %v2732 = vld [vmem:[%s12 + $0x58] sm:$0xff]
    %v2733 = vld [vmem:[%s12 + $0x60] sm:$0xff]
    %v2734 = vld [vmem:[%s12 + $0x68] sm:$0xff]
    %v2735 = vld [vmem:[%s12 + $0x70] sm:$0xff]
    %v2736 = vld [vmem:[%s13] sm:$0x1]
    %v2738 = vlaneseq
    %v2739 = vshrl.u32 %v2738, 7
    %v2740 = vsub.s32 0, %v2739
    %v2741 = vrot.slane %v2736, %v2740
    %vm2743 = vcmask 982016
    %v2745 = vsel %vm2743, %v2718, 0
    %2747 = vmatprep.subr.mxu0 0.0
    %2748 = vmatpush1.msra.mxu0 %v2721
    %2749 = vmatprep.subr.mxu0 0.0
    %2750 = vmatpush1.msra.mxu0 %v2722
    %2751 = vmatprep.subr.mxu0 0.0
    %2752 = vmatpush1.msra.mxu0 %v2723
    %2753 = vmatprep.subr.mxu0 0.0
    %2754 = vmatpush1.msra.mxu0 %v2724
    %2755 = vmatprep.subr.mxu0 0.0
    %2756 = vmatpush1.msra.mxu0 %v2725
    %2757 = vmatprep.subr.mxu0 0.0
    %2758 = vmatpush1.msra.mxu0 %v2726
    %2759 = vmatprep.subr.mxu0 0.0
    %2760 = vmatpush1.msra.mxu0 %v2727
    %2761 = vmatprep.subr.mxu0 0.0
    %2762 = vmatpush1.msra.mxu0 %v2728
    %2763 = vmatprep.subr.mxu0 0.0
    %2764 = vmatpush1.msra.mxu0 %v2729
    %2765 = vmatprep.subr.mxu0 0.0
    %2766 = vmatpush1.msra.mxu0 %v2730
    %2767 = vmatprep.subr.mxu0 0.0
    %2768 = vmatpush1.msra.mxu0 %v2731
    %2769 = vmatprep.subr.mxu0 0.0
    %2770 = vmatpush1.msra.mxu0 %v2732
    %2771 = vmatprep.subr.mxu0 0.0
    %2772 = vmatpush1.msra.mxu0 %v2733
    %2773 = vmatprep.subr.mxu0 0.0
    %2774 = vmatpush1.msra.mxu0 %v2734
    %2775 = vmatprep.subr.mxu0 0.0
    %2776 = vmatpush1.msra.mxu0 %v2735
    %2777 = vmatprep.subr.mxu0 0.0
    %2778 = vmatpush1.msra.mxu0 0.0
    %2779 = vmatprep.subr.mxu0 0.0
    %2780 = vmatpush1.msra.mxu0 0.0
    %2781 = vmatprep.subr.mxu0 0.0
    %2782 = vmatpush1.msra.mxu0 0.0
    %2783 = vmatprep.subr.mxu0 0.0
    %2784 = vmatpush1.msra.mxu0 0.0
    %2785 = vmatprep.subr.mxu0 0.0
    %2786 = vmatpush1.msra.mxu0 0.0
    %2787 = vmatprep.subr.mxu0 0.0
    %2788 = vmatpush1.msra.mxu0 0.0
    %2789 = vmatprep.subr.mxu0 0.0
    %2790 = vmatpush1.msra.mxu0 0.0
    %2791 = vmatprep.subr.mxu0 0.0
    %2792 = vmatpush1.msra.mxu0 0.0
    %2793 = vmatprep.subr.mxu0 0.0
    %2794 = vmatpush1.msra.mxu0 0.0
    %2795 = vmatprep.subr.mxu0 0.0
    %2796 = vmatpush1.msra.mxu0 0.0
    %2797 = vmatprep.subr.mxu0 0.0
    %2798 = vmatpush1.msra.mxu0 0.0
    %2799 = vmatprep.subr.mxu0 0.0
    %2800 = vmatpush1.msra.mxu0 0.0
    %2801 = vmatprep.subr.mxu0 0.0
    %2802 = vmatpush1.msra.mxu0 0.0
    %2803 = vmatprep.subr.mxu0 0.0
    %2804 = vmatpush1.msra.mxu0 0.0
    %2805 = vmatprep.subr.mxu0 0.0
    %2806 = vmatpush1.msra.mxu0 0.0
    %2807 = vmatprep.subr.mxu0 0.0
    %2808 = vmatpush1.msra.mxu0 0.0
    %2809 = vmatprep.subr.mxu0 0.0
    %2810 = vmatpush1.msra.mxu0 0.0
    %2811 = vmatprep.mubr.f32.mxu0 0.0
    %2812 = vmatmul.mubr.f32.gmra.mrb[0].mxu0 %v2745
    %v2813 = vpop.f32.mrb[0].mxu0
    %v2814 = vadd.f32 %v2741, %v2813
    %v2815 = vpop.f32.mrb[0].mxu0
    %2816 = vdwg.mxu0
    %v2817 = vmax.f32 %v2814, 0.0
    %v2818 = vld [vmem:[%s14] sm:$0xff]
    %v2819 = vld [vmem:[%s14 + $0x8] sm:$0xff]
    %v2820 = vld [vmem:[%s14 + $0x10] sm:$0xff]
    %v2821 = vld [vmem:[%s14 + $0x18] sm:$0xff]
    %v2822 = vld [vmem:[%s14 + $0x20] sm:$0xff]
    %v2823 = vld [vmem:[%s14 + $0x28] sm:$0xff]
    %v2824 = vld [vmem:[%s14 + $0x30] sm:$0xff]
    %v2825 = vld [vmem:[%s14 + $0x38] sm:$0xff]
    %v2826 = vld [vmem:[%s14 + $0x40] sm:$0xff]
    %v2827 = vld [vmem:[%s14 + $0x48] sm:$0xff]
    %v2828 = vld [vmem:[%s14 + $0x50] sm:$0xf]
    %v2829 = vld [vmem:[%s15] sm:$0x1]
    %v2831 = vlaneseq
    %v2832 = vshrl.u32 %v2831, 7
    %v2833 = vsub.s32 0, %v2832
    %v2834 = vrot.slane %v2829, %v2833
    %vm2836 = vcmask 687104
    %v2838 = vsel %vm2836, %v2817, 0
    %v2841 = vsel %vm711, %v2828, 0
    %2843 = vmatprep.subr.mxu0 0.0
    %2844 = vmatpush1.msra.mxu0 %v2818
    %2845 = vmatprep.subr.mxu0 0.0
    %2846 = vmatpush1.msra.mxu0 %v2819
    %2847 = vmatprep.subr.mxu0 0.0
    %2848 = vmatpush1.msra.mxu0 %v2820
    %2849 = vmatprep.subr.mxu0 0.0
    %2850 = vmatpush1.msra.mxu0 %v2821
    %2851 = vmatprep.subr.mxu0 0.0
    %2852 = vmatpush1.msra.mxu0 %v2822
    %2853 = vmatprep.subr.mxu0 0.0
    %2854 = vmatpush1.msra.mxu0 %v2823
    %2855 = vmatprep.subr.mxu0 0.0
    %2856 = vmatpush1.msra.mxu0 %v2824
    %2857 = vmatprep.subr.mxu0 0.0
    %2858 = vmatpush1.msra.mxu0 %v2825
    %2859 = vmatprep.subr.mxu0 0.0
    %2860 = vmatpush1.msra.mxu0 %v2826
    %2861 = vmatprep.subr.mxu0 0.0
    %2862 = vmatpush1.msra.mxu0 %v2827
    %2863 = vmatprep.subr.mxu0 0.0
    %2864 = vmatpush1.msra.mxu0 %v2841
    %2865 = vmatprep.subr.mxu0 0.0
    %2866 = vmatpush1.msra.mxu0 0.0
    %2867 = vmatprep.subr.mxu0 0.0
    %2868 = vmatpush1.msra.mxu0 0.0
    %2869 = vmatprep.subr.mxu0 0.0
    %2870 = vmatpush1.msra.mxu0 0.0
    %2871 = vmatprep.subr.mxu0 0.0
    %2872 = vmatpush1.msra.mxu0 0.0
    %2873 = vmatprep.subr.mxu0 0.0
    %2874 = vmatpush1.msra.mxu0 0.0
    %2875 = vmatprep.subr.mxu0 0.0
    %2876 = vmatpush1.msra.mxu0 0.0
    %2877 = vmatprep.subr.mxu0 0.0
    %2878 = vmatpush1.msra.mxu0 0.0
    %2879 = vmatprep.subr.mxu0 0.0
    %2880 = vmatpush1.msra.mxu0 0.0
    %2881 = vmatprep.subr.mxu0 0.0
    %2882 = vmatpush1.msra.mxu0 0.0
    %2883 = vmatprep.subr.mxu0 0.0
    %2884 = vmatpush1.msra.mxu0 0.0
    %2885 = vmatprep.subr.mxu0 0.0
    %2886 = vmatpush1.msra.mxu0 0.0
    %2887 = vmatprep.subr.mxu0 0.0
    %2888 = vmatpush1.msra.mxu0 0.0
    %2889 = vmatprep.subr.mxu0 0.0
    %2890 = vmatpush1.msra.mxu0 0.0
    %2891 = vmatprep.subr.mxu0 0.0
    %2892 = vmatpush1.msra.mxu0 0.0
    %2893 = vmatprep.subr.mxu0 0.0
    %2894 = vmatpush1.msra.mxu0 0.0
    %2895 = vmatprep.subr.mxu0 0.0
    %2896 = vmatpush1.msra.mxu0 0.0
    %2897 = vmatprep.subr.mxu0 0.0
    %2898 = vmatpush1.msra.mxu0 0.0
    %2899 = vmatprep.subr.mxu0 0.0
    %2900 = vmatpush1.msra.mxu0 0.0
    %2901 = vmatprep.subr.mxu0 0.0
    %2902 = vmatpush1.msra.mxu0 0.0
    %2903 = vmatprep.subr.mxu0 0.0
    %2904 = vmatpush1.msra.mxu0 0.0
    %2905 = vmatprep.subr.mxu0 0.0
    %2906 = vmatpush1.msra.mxu0 0.0
    %2907 = vmatprep.mubr.f32.mxu0 0.0
    %2908 = vmatmul.mubr.f32.gmra.mrb[0].mxu0 %v2838
    %v2909 = vpop.f32.mrb[0].mxu0
    %v2910 = vadd.f32 %v2834, %v2909
    %v2911 = vpop.f32.mrb[0].mxu0
    %2912 = vdwg.mxu0
    %vm2913 = vcmask 74752
    %2914 = vst.msk [vmem:[#allocation2] sm:$0x3] %vm2913, %v2910
    // Predicated region
    $region66: #{lenet5_forward.1} parent=1 // pred_check
      _
    $region67: #{lenet5_forward.1} parent=1 // pred_check_branch
      %2916 = sbr.rel (0) target = $region69
    $region68: #{lenet5_forward.1} parent=1 // pred_region
      %s2918 = ssub.s32 32, 32
      %2919 = vsyncadd [#allocation3], %s2918
      %s2921 = sshll.u32 [#allocation2], 4
      %s2922 = int_to_ptr.vmem [resolvable:$true] %s2921
      %2924 = dma.vmem_to_hbm [thread:$0]  %s2922, 32, %s16, [#allocation3]
    $region69: #{lenet5_forward.1} parent=1 // pred_fallthru
      _
    // Predicated region
    $region70: #{lenet5_forward.1} parent=1 // pred_check
      _
    $region71: #{lenet5_forward.1} parent=1 // pred_check_branch
      %2926 = sbr.rel (0) target = $region73
    $region72: #{lenet5_forward.1} parent=1 // pred_region
      %2927 = dma.done [#allocation3], 32
    $region73: #{lenet5_forward.1} parent=1 // pred_fallthru
      _
    %2928 = vsyncpa [#allocation3], 1

</llo_original>
